<compile_context>
chip_gen: v5e
topology: v5e:2x2
jax: 0.10.0
libtpu: 0.0.40
codegen_flags: <defaults>
</compile_context>

<pallas_src>
import functools
import math

import jax
import jax.numpy as jnp
from jax.experimental import pallas as pl
from jax.experimental.pallas import tpu as pltpu


MXU_DTYPE = jnp.bfloat16  # MXU inputs; accumulation stays f32


def _default_vmem_limit():
    try:
        return int(pltpu.get_tpu_info().vmem_capacity_bytes) // 2
    except Exception:
        return None


_VMEM_LIMIT = _default_vmem_limit()


def _round_up(x, m):
    return ((x + m - 1) // m) * m


# --------------------------------------------------------------------------
# Tiled linear (GEMM + bias [+ relu]) kernel
# --------------------------------------------------------------------------
def _linear_kernel(x_ref, w_ref, b_ref, o_ref, acc_ref, *, relu):
    @pl.when(pl.program_id(2) == 0)
    def _():
        acc_ref[...] = jnp.zeros_like(acc_ref)

    acc_ref[...] += jnp.dot(x_ref[...], w_ref[...],
                            preferred_element_type=jnp.float32)

    @pl.when(pl.program_id(2) == pl.num_programs(2) - 1)
    def _():
        y = acc_ref[...] + b_ref[...]
        if relu:
            y = jnp.maximum(y, 0.0)
        o_ref[...] = y.astype(o_ref.dtype)


def linear(x, w, b, relu=False, out_dtype=jnp.float32,
           tm=128, tn=256, tk=256):
    """x: (M, K), w: (K, N), b: (N,) -> (M, N). MXU inputs cast to bf16."""
    M, K = x.shape
    N = w.shape[1]
    x = x.astype(MXU_DTYPE)
    w = w.astype(MXU_DTYPE)          # no-op for pre-cast weights
    b = b.astype(jnp.float32).reshape(1, N)

    tm_e = min(tm, _round_up(M, 8))
    tk_e = min(tk, _round_up(K, 128))
    tn_e = min(tn, _round_up(N, 128))
    Mp, Kp, Np = _round_up(M, tm_e), _round_up(K, tk_e), _round_up(N, tn_e)

    if (Mp, Kp) != (M, K):
        x = jnp.pad(x, ((0, Mp - M), (0, Kp - K)))
    if (Kp, Np) != (K, N):
        w = jnp.pad(w, ((0, Kp - K), (0, Np - N)))
    if Np != N:
        b = jnp.pad(b, ((0, 0), (0, Np - N)))

    out = pl.pallas_call(
        functools.partial(_linear_kernel, relu=relu),
        out_shape=jax.ShapeDtypeStruct((Mp, Np), out_dtype),
        grid=(Mp // tm_e, Np // tn_e, Kp // tk_e),
        in_specs=[
            pl.BlockSpec((tm_e, tk_e), lambda i, j, k: (i, k)),
            pl.BlockSpec((tk_e, tn_e), lambda i, j, k: (k, j)),
            pl.BlockSpec((1, tn_e), lambda i, j, k: (0, j)),
        ],
        out_specs=pl.BlockSpec((tm_e, tn_e), lambda i, j, k: (i, j)),
        scratch_shapes=[pltpu.VMEM((tm_e, tn_e), jnp.float32)],
        compiler_params=pltpu.CompilerParams(
            dimension_semantics=("parallel", "parallel", "arbitrary"),
            vmem_limit_bytes=_VMEM_LIMIT),
    )(x, w, b)
    if (Mp, Np) != (M, N):
        out = out[:M, :N]
    return out


# --------------------------------------------------------------------------
# Multi-head attention kernels (per-batch block, all heads in one grid step)
# --------------------------------------------------------------------------
def _mha_core(q, k, v, mask, o_ref, p_ref, *, scale, n_heads):
    # q: (Tq, D), k/v: (Tk, D), mask: (Tm, Tk) additive f32 (Tm in {1, Tq}).
    Tq, D = q.shape
    Dh = D // n_heads
    outs = []
    attn_acc = None
    for h in range(n_heads):
        qh = q[:, h * Dh:(h + 1) * Dh]
        kh = k[:, h * Dh:(h + 1) * Dh]
        vh = v[:, h * Dh:(h + 1) * Dh]
        s = jnp.dot(qh, kh.T, preferred_element_type=jnp.float32) * scale + mask
        s = s - jnp.max(s, axis=-1, keepdims=True)
        e = jnp.exp(s)
        p = e * pl.reciprocal(jnp.sum(e, axis=-1, keepdims=True), approx=True)
        outs.append(jnp.dot(p.astype(vh.dtype), vh,
                            preferred_element_type=jnp.float32))
        if p_ref is not None:
            attn_acc = p if attn_acc is None else attn_acc + p
    o_ref[0] = jnp.concatenate(outs, axis=-1).astype(o_ref.dtype)
    if p_ref is not None:
        p_ref[0] = (attn_acc * (1.0 / n_heads)).astype(p_ref.dtype)


def _self_mha_kernel(qkv_ref, m_ref, o_ref, *maybe_p, scale, n_heads, d_model):
    qkv = qkv_ref[0]                        # (T, 3D)
    q = qkv[:, :d_model]
    k = qkv[:, d_model:2 * d_model]
    v = qkv[:, 2 * d_model:]
    _mha_core(q, k, v, m_ref[0], o_ref, maybe_p[0] if maybe_p else None,
              scale=scale, n_heads=n_heads)


def _cross_mha_kernel(q_ref, kv_ref, m_ref, o_ref, *maybe_p,
                      scale, n_heads, d_model):
    kv = kv_ref[0]                          # (Tk, 2D)
    _mha_core(q_ref[0], kv[:, :d_model], kv[:, d_model:], m_ref[0], o_ref,
              maybe_p[0] if maybe_p else None, scale=scale, n_heads=n_heads)


def _mask_index_map(batch_dim):
    if batch_dim == 1:
        return lambda b: (0, 0, 0)
    return lambda b: (b, 0, 0)


def sdpa_self(qkv, mask_add, n_heads, need_probs):
    """qkv: (B, T, 3D) bf16, mask_add: (1 or B, 1 or T, T) f32 additive."""
    B, T, D3 = qkv.shape
    D = D3 // 3
    Dh = D // n_heads
    Bm, Tm, Tk = mask_add.shape
    kern = functools.partial(_self_mha_kernel, scale=1.0 / math.sqrt(Dh),
                             n_heads=n_heads, d_model=D)
    out_shape = [jax.ShapeDtypeStruct((B, T, D), qkv.dtype)]
    out_specs = [pl.BlockSpec((1, T, D), lambda b: (b, 0, 0))]
    if need_probs:
        out_shape.append(jax.ShapeDtypeStruct((B, T, T), jnp.float32))
        out_specs.append(pl.BlockSpec((1, T, T), lambda b: (b, 0, 0)))
    res = pl.pallas_call(
        kern,
        out_shape=tuple(out_shape),
        grid=(B,),
        in_specs=[
            pl.BlockSpec((1, T, D3), lambda b: (b, 0, 0)),
            pl.BlockSpec((1, Tm, Tk), _mask_index_map(Bm)),
        ],
        out_specs=tuple(out_specs),
        compiler_params=pltpu.CompilerParams(
            dimension_semantics=("parallel",), vmem_limit_bytes=_VMEM_LIMIT),
    )(qkv, mask_add)
    return (res[0], res[1]) if need_probs else (res[0], None)


def sdpa_cross(q, kv, mask_add, n_heads, need_probs):
    """q: (B, Tq, D) bf16, kv: (B, Tk, 2D) bf16, mask_add: (1 or B, 1 or Tq, Tk)."""
    B, Tq, D = q.shape
    Tk = kv.shape[1]
    Dh = D // n_heads
    Bm, Tm, _ = mask_add.shape
    kern = functools.partial(_cross_mha_kernel, scale=1.0 / math.sqrt(Dh),
                             n_heads=n_heads, d_model=D)
    out_shape = [jax.ShapeDtypeStruct((B, Tq, D), q.dtype)]
    out_specs = [pl.BlockSpec((1, Tq, D), lambda b: (b, 0, 0))]
    if need_probs:
        out_shape.append(jax.ShapeDtypeStruct((B, Tq, Tk), jnp.float32))
        out_specs.append(pl.BlockSpec((1, Tq, Tk), lambda b: (b, 0, 0)))
    res = pl.pallas_call(
        kern,
        out_shape=tuple(out_shape),
        grid=(B,),
        in_specs=[
            pl.BlockSpec((1, Tq, D), lambda b: (b, 0, 0)),
            pl.BlockSpec((1, Tk, 2 * D), lambda b: (b, 0, 0)),
            pl.BlockSpec((1, Tm, Tk), _mask_index_map(Bm)),
        ],
        out_specs=tuple(out_specs),
        compiler_params=pltpu.CompilerParams(
            dimension_semantics=("parallel",), vmem_limit_bytes=_VMEM_LIMIT),
    )(q, kv, mask_add)
    return (res[0], res[1]) if need_probs else (res[0], None)


# --------------------------------------------------------------------------
# p_gen kernel: context = attn @ memory fused in (context never written to HBM)
# --------------------------------------------------------------------------
def _pgen_kernel(attn_ref, mem_ref, x_ref, emb_ref, w_ref, b_ref, pg_ref,
                 *, d_model):
    ctx = jnp.dot(attn_ref[0], mem_ref[0],
                  preferred_element_type=jnp.float32)       # (T, D)
    w = w_ref[...]                                          # (3D, 1)
    s = (jnp.dot(x_ref[0], w[:d_model], preferred_element_type=jnp.float32)
         + jnp.dot(ctx, w[d_model:2 * d_model], preferred_element_type=jnp.float32)
         + jnp.dot(emb_ref[0], w[2 * d_model:], preferred_element_type=jnp.float32)
         + b_ref[...])
    pg_ref[0] = 1.0 / (1.0 + jnp.exp(-s))


def pgen(attn, memory, x, emb, w, b):
    B, T, S = attn.shape
    D = memory.shape[2]
    return pl.pallas_call(
        functools.partial(_pgen_kernel, d_model=D),
        out_shape=jax.ShapeDtypeStruct((B, T, 1), jnp.float32),
        grid=(B,),
        in_specs=[
            pl.BlockSpec((1, T, S), lambda b_: (b_, 0, 0)),
            pl.BlockSpec((1, S, D), lambda b_: (b_, 0, 0)),
            pl.BlockSpec((1, T, D), lambda b_: (b_, 0, 0)),
            pl.BlockSpec((1, T, D), lambda b_: (b_, 0, 0)),
            pl.BlockSpec((3 * D, 1), lambda b_: (0, 0)),
            pl.BlockSpec((1, 1), lambda b_: (0, 0)),
        ],
        out_specs=pl.BlockSpec((1, T, 1), lambda b_: (b_, 0, 0)),
        compiler_params=pltpu.CompilerParams(
            dimension_semantics=("parallel",), vmem_limit_bytes=_VMEM_LIMIT),
    )(attn, memory, x, emb, w, b.reshape(1, 1))


# --------------------------------------------------------------------------
# Final-distribution kernel: p_gen*softmax(logits) (via lse) + copy dist built
# in-kernel from src_oov with broadcasted_iota (no one-hot tensor in HBM).
# --------------------------------------------------------------------------
def _output_dist_kernel(logit_ref, lse_ref, pg_ref, attn_ref, ids_ref, o_ref,
                        *, tn, vocab_size):
    n0 = pl.program_id(1) * tn
    T = logit_ref.shape[1]
    S = attn_ref.shape[2]
    logits = logit_ref[0]                                     # (T, tn)
    pg = pg_ref[0]                                            # (T, 1)
    col_t = jax.lax.broadcasted_iota(jnp.int32, (T, tn), 1) + n0
    gen = jnp.where(col_t < vocab_size,
                    jnp.exp(logits - lse_ref[0]) * pg, 0.0)
    col_s = jax.lax.broadcasted_iota(jnp.int32, (S, tn), 1) + n0
    one_hot = (ids_ref[0] == col_s).astype(jnp.float32)       # (S, tn)
    copy = jnp.dot(attn_ref[0] * (1.0 - pg), one_hot,
                   preferred_element_type=jnp.float32)        # (T, tn)
    o_ref[0] = gen + copy


def output_dist(logits, lse, p_gen, attn, src_oov, vocab_size, max_num_oov):
    B, T, V = logits.shape
    S = attn.shape[2]
    n_ext = vocab_size + max_num_oov
    tn = min(512, _round_up(n_ext, 128))
    Np = _round_up(n_ext, tn)
    logits_p = jnp.pad(logits, ((0, 0), (0, 0), (0, Np - V)))
    ids = src_oov.astype(jnp.int32)[:, :, None]               # (B, S, 1)
    out = pl.pallas_call(
        functools.partial(_output_dist_kernel, tn=tn, vocab_size=vocab_size),
        out_shape=jax.ShapeDtypeStruct((B, T, Np), jnp.float32),
        grid=(B, Np // tn),
        in_specs=[
            pl.BlockSpec((1, T, tn), lambda bi, ni: (bi, 0, ni)),
            pl.BlockSpec((1, T, 1), lambda bi, ni: (bi, 0, 0)),
            pl.BlockSpec((1, T, 1), lambda bi, ni: (bi, 0, 0)),
            pl.BlockSpec((1, T, S), lambda bi, ni: (bi, 0, 0)),
            pl.BlockSpec((1, S, 1), lambda bi, ni: (bi, 0, 0)),
        ],
        out_specs=pl.BlockSpec((1, T, tn), lambda bi, ni: (bi, 0, ni)),
        compiler_params=pltpu.CompilerParams(
            dimension_semantics=("parallel", "parallel"),
            vmem_limit_bytes=_VMEM_LIMIT),
    )(logits_p, lse, p_gen, attn, ids)
    return out[:, :, :n_ext]


# --------------------------------------------------------------------------
# Model glue (plain JAX): layernorm, embedding lookup, masks
# --------------------------------------------------------------------------
def layer_norm(x, g, b, eps=1e-5):
    mu = x.mean(-1, keepdims=True)
    var = ((x - mu) ** 2).mean(-1, keepdims=True)
    return (x - mu) / jnp.sqrt(var + eps) * g + b


def multi_head_self_attention(x, mask_add, p, n_heads, need_probs=False):
    B, T, D = x.shape
    qkv = linear(x.reshape(B * T, D), p["wqkv"], p["bqkv"],
                 out_dtype=MXU_DTYPE).reshape(B, T, 3 * D)
    o, attn = sdpa_self(qkv, mask_add, n_heads, need_probs)
    out = linear(o.reshape(B * T, D), p["wo"], p["bo"]).reshape(B, T, D)
    return out, attn


def multi_head_cross_attention(x_q, memory, mask_add, p, n_heads,
                               need_probs=False):
    B, Tq, D = x_q.shape
    S = memory.shape[1]
    q = linear(x_q.reshape(B * Tq, D), p["wq"], p["bq"],
               out_dtype=MXU_DTYPE).reshape(B, Tq, D)
    kv = linear(memory.reshape(B * S, D), p["wkv"], p["bkv"],
                out_dtype=MXU_DTYPE).reshape(B, S, 2 * D)
    o, attn = sdpa_cross(q, kv, mask_add, n_heads, need_probs)
    out = linear(o.reshape(B * Tq, D), p["wo"], p["bo"]).reshape(B, Tq, D)
    return out, attn


def ffn(x, layer):
    B, T, D = x.shape
    h = linear(x.reshape(B * T, D), layer["w1"], layer["b1"],
               relu=True, out_dtype=MXU_DTYPE)
    o = linear(h, layer["w2"], layer["b2"])
    return o.reshape(B, T, D)


def encoder_forward(src, src_mask, params, cfg):
    B, S = src.shape
    D = cfg["d_model"]
    x = params["embed"][src] * math.sqrt(D) + params["pos_table"][jnp.arange(1, S + 1)]
    # additive mask kept at (B, 1, S); broadcast happens inside the kernel
    att_mask = jnp.where(src_mask[:, None, :] > 0, 0.0, -1e9).astype(jnp.float32)
    for layer in params["enc_layers"]:
        h, _ = multi_head_self_attention(x, att_mask, layer["self"], cfg["n_heads"])
        x = layer_norm(x + h, layer["ln1_g"], layer["ln1_b"])
        f = ffn(x, layer)
        x = layer_norm(x + f, layer["ln2_g"], layer["ln2_b"])
    x = layer_norm(x, params["enc_ln_g"], params["enc_ln_b"])
    return x


def decoder_forward(tgt, memory, src_mask, src_oov, max_num_oov, params, cfg):
    B, T = tgt.shape
    S = memory.shape[1]
    D = cfg["d_model"]
    V = cfg["vocab_size"]
    H = cfg["n_heads"]

    emb = params["embed"][tgt] * math.sqrt(D) + params["pos_table"][jnp.arange(1, T + 1)]
    x = emb

    causal = jnp.tril(jnp.ones((T, T), jnp.float32))
    self_mask = jnp.where(causal > 0, 0.0, -1e9)[None]                        # (1, T, T)
    cross_mask = jnp.where(src_mask[:, None, :] > 0, 0.0, -1e9).astype(jnp.float32)  # (B,1,S)

    attn = None
    n_layers = len(params["dec_layers"])
    for li, layer in enumerate(params["dec_layers"]):
        h, _ = multi_head_self_attention(x, self_mask, layer["self"], H)
        x = layer_norm(x + h, layer["ln1_g"], layer["ln1_b"])
        need_probs = (li == n_layers - 1)   # only the last layer's cross-attn is consumed
        h, a = multi_head_cross_attention(x, memory, cross_mask, layer["cross"], H,
                                          need_probs=need_probs)
        if need_probs:
            attn = a
        x = layer_norm(x + h, layer["ln2_g"], layer["ln2_b"])
        f = ffn(x, layer)
        x = layer_norm(x + f, layer["ln3_g"], layer["ln3_b"])
    x = layer_norm(x, params["dec_ln_g"], params["dec_ln_b"])

    # tied-embedding output projection (pre-transposed, pre-cast weight)
    logits = linear(x.reshape(B * T, D), params["out_w"], params["out_b"]).reshape(B, T, V)
    # TODO(synk): full online-softmax fusion across N tiles inside the projection
    # kernel not implemented; softmax is fused partially via logsumexp + the
    # mixing kernel (exp(logits - lse) * p_gen computed per vocab tile).
    lse = jax.nn.logsumexp(logits, axis=-1, keepdims=True)

    # p_gen (context = attn @ memory fused in-kernel, never materialized)
    p_gen = pgen(attn, memory, x, emb, params["w_pgen"], params["b_pgen"])

    decoder_dist_all = output_dist(logits, lse, p_gen, attn, src_oov, V, max_num_oov)
    attention_dist_all = attn
    return decoder_dist_all, attention_dist_all


# --------------------------------------------------------------------------
# Parameter construction (deterministic, in-script)
# --------------------------------------------------------------------------
def sinusoid_table(n_pos, d, pad_idx):
    pos = jnp.arange(n_pos, dtype=jnp.float32)[:, None]
    i = jnp.arange(d, dtype=jnp.float32)[None, :]
    angle = pos / jnp.power(10000.0, (2.0 * jnp.floor(i / 2.0)) / d)
    tab = jnp.where((jnp.arange(d) % 2) == 0, jnp.sin(angle), jnp.cos(angle))
    tab = tab.at[pad_idx].set(0.0)
    return tab.astype(jnp.float32)


def init_params(key, cfg):
    V, D, F = cfg["vocab_size"], cfg["d_model"], cfg["d_ff"]
    keys = iter(jax.random.split(key, 256))

    def dense(din, dout):
        # MXU weights stored bf16; accumulation is f32 inside the kernels.
        return (0.05 * jax.random.normal(next(keys), (din, dout), jnp.float32)).astype(MXU_DTYPE)

    def self_attn_params():
        return dict(
            wqkv=dense(D, 3 * D), bqkv=jnp.zeros((3 * D,), jnp.float32),
            wo=dense(D, D), bo=jnp.zeros((D,), jnp.float32),
        )

    def cross_attn_params():
        return dict(
            wq=dense(D, D), bq=jnp.zeros((D,), jnp.float32),
            wkv=dense(D, 2 * D), bkv=jnp.zeros((2 * D,), jnp.float32),
            wo=dense(D, D), bo=jnp.zeros((D,), jnp.float32),
        )

    def enc_layer():
        return dict(
            self=self_attn_params(),
            w1=dense(D, F), b1=jnp.zeros((F,), jnp.float32),
            w2=dense(F, D), b2=jnp.zeros((D,), jnp.float32),
            ln1_g=jnp.ones((D,), jnp.float32), ln1_b=jnp.zeros((D,), jnp.float32),
            ln2_g=jnp.ones((D,), jnp.float32), ln2_b=jnp.zeros((D,), jnp.float32),
        )

    def dec_layer():
        return dict(
            self=self_attn_params(), cross=cross_attn_params(),
            w1=dense(D, F), b1=jnp.zeros((F,), jnp.float32),
            w2=dense(F, D), b2=jnp.zeros((D,), jnp.float32),
            ln1_g=jnp.ones((D,), jnp.float32), ln1_b=jnp.zeros((D,), jnp.float32),
            ln2_g=jnp.ones((D,), jnp.float32), ln2_b=jnp.zeros((D,), jnp.float32),
            ln3_g=jnp.ones((D,), jnp.float32), ln3_b=jnp.zeros((D,), jnp.float32),
        )

    embed = jax.random.uniform(next(keys), (V, D), jnp.float32, -0.1, 0.1)  # init_emb
    embed = embed.at[cfg["pad_idx"]].set(0.0)

    return dict(
        embed=embed,
        out_w=embed.T.astype(MXU_DTYPE),          # tied projection, pre-transposed/cast once
        out_b=jnp.zeros((V,), jnp.float32),
        pos_table=sinusoid_table(3000, D, cfg["pad_idx"]),
        enc_layers=[enc_layer() for _ in range(cfg["n_enc_layers"])],
        dec_layers=[dec_layer() for _ in range(cfg["n_dec_layers"])],
        enc_ln_g=jnp.ones((D,), jnp.float32), enc_ln_b=jnp.zeros((D,), jnp.float32),
        dec_ln_g=jnp.ones((D,), jnp.float32), dec_ln_b=jnp.zeros((D,), jnp.float32),
        w_pgen=0.05 * jax.random.normal(next(keys), (3 * D, 1), jnp.float32),
        b_pgen=jnp.zeros((1,), jnp.float32),
    )


def build_model(params, cfg):
    @functools.partial(jax.jit, static_argnums=(4,))
    def forward(src, src_lens, input_tgt, src_oov, max_num_oov, src_mask):
        # src_lens is only used to build src_mask upstream in the original code.
        memory_bank = encoder_forward(src, src_mask, params, cfg)
        # decoder.init_state just bundles (memory_bank, src_mask) — no compute.
        return decoder_forward(
            input_tgt, memory_bank, src_mask, src_oov, max_num_oov, params, cfg
        )

    return forward


# --------------------------------------------------------------------------
if __name__ == "__main__":
    cfg = dict(
        vocab_size=50, d_model=32, n_heads=4, d_ff=64,
        n_enc_layers=2, n_dec_layers=2, pad_idx=0,
    )
    key = jax.random.PRNGKey(0)
    pkey, k_src, k_tgt = jax.random.split(key, 3)
    params = init_params(pkey, cfg)

    B, S, T = 2, 8, 6
    max_num_oov = 2

    src = jax.random.randint(k_src, (B, S), 1, cfg["vocab_size"], dtype=jnp.int32)
    input_tgt = jax.random.randint(k_tgt, (B, T), 1, cfg["vocab_size"], dtype=jnp.int32)
    # batch 1 has one padded position at the end
    src_mask = jnp.ones((B, S), jnp.float32).at[1, S - 1].set(0.0)
    src_lens = jnp.array([S, S - 1], jnp.int32)
    # extended-vocab source ids: mark two positions as OOV tokens
    src_oov = src.at[0, 2].set(cfg["vocab_size"] + 0).at[1, 3].set(cfg["vocab_size"] + 1)

    forward = build_model(params, cfg)
    decoder_dist_all, attention_dist_all = forward(
        src, src_lens, input_tgt, src_oov, max_num_oov, src_mask
    )
    jax.block_until_ready((decoder_dist_all, attention_dist_all))

    assert decoder_dist_all.shape == (B, T, cfg["vocab_size"] + max_num_oov)
    assert attention_dist_all.shape == (B, T, S)
    print("KERNEL_OK")
</pallas_src>

<mosaic_0001>
module attributes {stable_mosaic.version = 11 : i64} {
  func.func @_linear_kernel(%arg0: i32, %arg1: i32, %arg2: i32, %arg3: memref<16x128xbf16, #tpu.memory_space<vmem>>, %arg4: memref<128x128xbf16, #tpu.memory_space<vmem>>, %arg5: memref<1x128xf32, #tpu.memory_space<vmem>>, %arg6: memref<16x128xbf16, #tpu.memory_space<vmem>>, %arg7: memref<16x128xf32, #tpu.memory_space<vmem>>) attributes {dimension_semantics = [#tpu.dimension_semantics<parallel>, #tpu.dimension_semantics<parallel>, #tpu.dimension_semantics<arbitrary>], iteration_bounds = array<i64: 1, 1, 1>, scalar_prefetch = 0 : i64, scratch_operands = 1 : i64, tpu.core_type = #tpu.core_type<tc>, window_params = [{transform_indices = @transform_0, window_bounds = array<i64: 16, 128>}, {transform_indices = @transform_1, window_bounds = array<i64: 128, 128>}, {transform_indices = @transform_2, window_bounds = array<i64: 1, 128>}, {transform_indices = @transform_3, window_bounds = array<i64: 16, 128>}]} {
    %c0_i32 = arith.constant 0 : i32
    %0 = arith.cmpi eq, %arg2, %c0_i32 : i32
    %1 = arith.extui %0 : i1 to i32
    %c0_i32_0 = arith.constant 0 : i32
    %2 = arith.cmpi ne, %1, %c0_i32_0 : i32
    scf.if %2 {
      %cst_10 = arith.constant 0.000000e+00 : f32
      %12 = vector.broadcast %cst_10 : f32 to vector<16x128xf32>
      %c0_11 = arith.constant 0 : index
      %c0_12 = arith.constant 0 : index
      %13 = vector.load %arg7[%c0_11, %c0_12] : memref<16x128xf32, #tpu.memory_space<vmem>>, vector<16x128xf32>
      tpu.vector_store %arg7[%c0_11, %c0_12], %12 {strides = array<i32>} : memref<16x128xf32, #tpu.memory_space<vmem>>, vector<16x128xf32>,
    } else {
    }
    %c0 = arith.constant 0 : index
    %c0_1 = arith.constant 0 : index
    %3 = vector.load %arg7[%c0, %c0_1] : memref<16x128xf32, #tpu.memory_space<vmem>>, vector<16x128xf32>
    %c0_2 = arith.constant 0 : index
    %c0_3 = arith.constant 0 : index
    %4 = vector.load %arg3[%c0_2, %c0_3] : memref<16x128xbf16, #tpu.memory_space<vmem>>, vector<16x128xbf16>
    %c0_4 = arith.constant 0 : index
    %c0_5 = arith.constant 0 : index
    %5 = vector.load %arg4[%c0_4, %c0_5] : memref<128x128xbf16, #tpu.memory_space<vmem>>, vector<128x128xbf16>
    %cst = arith.constant dense<0.000000e+00> : vector<16x128xf32>
    %6 = tpu.matmul %4, %5, %cst {dimension_numbers = #tpu.dot_dimension_numbers<[1], [0], [0], [1], [0, 0, 1, 1], [], []>} : vector<16x128xbf16>, vector<128x128xbf16>, vector<16x128xf32> -> vector<16x128xf32>
    %7 = arith.addf %3, %6 : vector<16x128xf32>
    %c0_6 = arith.constant 0 : index
    %c0_7 = arith.constant 0 : index
    %8 = vector.load %arg7[%c0_6, %c0_7] : memref<16x128xf32, #tpu.memory_space<vmem>>, vector<16x128xf32>
    tpu.vector_store %arg7[%c0_6, %c0_7], %7 {strides = array<i32>} : memref<16x128xf32, #tpu.memory_space<vmem>>, vector<16x128xf32>,
    %c0_i32_8 = arith.constant 0 : i32
    %9 = arith.cmpi eq, %arg2, %c0_i32_8 : i32
    %10 = arith.extui %9 : i1 to i32
    %c0_i32_9 = arith.constant 0 : i32
    %11 = arith.cmpi ne, %10, %c0_i32_9 : i32
    scf.if %11 {
      %c0_10 = arith.constant 0 : index
      %c0_11 = arith.constant 0 : index
      %12 = vector.load %arg7[%c0_10, %c0_11] : memref<16x128xf32, #tpu.memory_space<vmem>>, vector<16x128xf32>
      %c0_12 = arith.constant 0 : index
      %c0_13 = arith.constant 0 : index
      %13 = vector.load %arg5[%c0_12, %c0_13] : memref<1x128xf32, #tpu.memory_space<vmem>>, vector<1x128xf32>
      %14 = vector.broadcast %13 : vector<1x128xf32> to vector<16x128xf32>
      %15 = arith.addf %12, %14 : vector<16x128xf32>
      %16 = arith.truncf %15 : vector<16x128xf32> to vector<16x128xbf16>
      %c0_14 = arith.constant 0 : index
      %c0_15 = arith.constant 0 : index
      %17 = vector.load %arg6[%c0_14, %c0_15] : memref<16x128xbf16, #tpu.memory_space<vmem>>, vector<16x128xbf16>
      tpu.vector_store %arg6[%c0_14, %c0_15], %16 {strides = array<i32>} : memref<16x128xbf16, #tpu.memory_space<vmem>>, vector<16x128xbf16>,
    } else {
    }
    return
  }
  func.func @transform_0(%arg0: i32, %arg1: i32, %arg2: i32) -> (i32, i32) {
    %c0_i32 = arith.constant 0 : i32
    return %arg0, %arg2 : i32, i32
  }
  func.func @transform_1(%arg0: i32, %arg1: i32, %arg2: i32) -> (i32, i32) {
    %c0_i32 = arith.constant 0 : i32
    return %arg2, %arg1 : i32, i32
  }
  func.func @transform_2(%arg0: i32, %arg1: i32, %arg2: i32) -> (i32, i32) {
    %c0_i32 = arith.constant 0 : i32
    %c0_i32_0 = arith.constant 0 : i32
    return %c0_i32, %arg1 : i32, i32
  }
  func.func @transform_3(%arg0: i32, %arg1: i32, %arg2: i32) -> (i32, i32) {
    %c0_i32 = arith.constant 0 : i32
    return %arg0, %arg1 : i32, i32
  }
}

module attributes {stable_mosaic.version = 11 : i64} {
  func.func @_self_mha_kernel(%arg0: i32, %arg1: memref<1x8x96xbf16, #tpu.memory_space<vmem>>, %arg2: memref<1x1x8xf32, #tpu.memory_space<vmem>>, %arg3: memref<1x8x32xbf16, #tpu.memory_space<vmem>>) attributes {dimension_semantics = [#tpu.dimension_semantics<parallel>], iteration_bounds = array<i64: 2>, scalar_prefetch = 0 : i64, scratch_operands = 0 : i64, tpu.core_type = #tpu.core_type<tc>, window_params = [{transform_indices = @transform_0, window_bounds = array<i64: 1, 8, 96>}, {transform_indices = @transform_1, window_bounds = array<i64: 1, 1, 8>}, {transform_indices = @transform_2, window_bounds = array<i64: 1, 8, 32>}]} {
    %c0 = arith.constant 0 : index
    %c0_0 = arith.constant 0 : index
    %c0_1 = arith.constant 0 : index
    %0 = vector.load %arg1[%c0, %c0_0, %c0_1] : memref<1x8x96xbf16, #tpu.memory_space<vmem>>, vector<1x8x96xbf16>
    %1 = vector.shape_cast %0 : vector<1x8x96xbf16> to vector<8x96xbf16>
    %2 = vector.extract_strided_slice %1 {offsets = [0, 0], sizes = [8, 32], strides = [1, 1]} : vector<8x96xbf16> to vector<8x32xbf16>
    %3 = vector.extract_strided_slice %1 {offsets = [0, 32], sizes = [8, 32], strides = [1, 1]} : vector<8x96xbf16> to vector<8x32xbf16>
    %4 = vector.extract_strided_slice %1 {offsets = [0, 64], sizes = [8, 32], strides = [1, 1]} : vector<8x96xbf16> to vector<8x32xbf16>
    %c0_2 = arith.constant 0 : index
    %c0_3 = arith.constant 0 : index
    %c0_4 = arith.constant 0 : index
    %5 = vector.load %arg2[%c0_2, %c0_3, %c0_4] : memref<1x1x8xf32, #tpu.memory_space<vmem>>, vector<1x1x8xf32>
    %6 = vector.shape_cast %5 : vector<1x1x8xf32> to vector<1x8xf32>
    %7 = vector.extract_strided_slice %2 {offsets = [0, 0], sizes = [8, 8], strides = [1, 1]} : vector<8x32xbf16> to vector<8x8xbf16>
    %8 = vector.extract_strided_slice %3 {offsets = [0, 0], sizes = [8, 8], strides = [1, 1]} : vector<8x32xbf16> to vector<8x8xbf16>
    %9 = vector.extract_strided_slice %4 {offsets = [0, 0], sizes = [8, 8], strides = [1, 1]} : vector<8x32xbf16> to vector<8x8xbf16>
    %10 = tpu.transpose %8, [1, 0] : vector<8x8xbf16> -> vector<8x8xbf16>
    %cst = arith.constant dense<0.000000e+00> : vector<8x8xf32>
    %11 = tpu.matmul %7, %10, %cst {dimension_numbers = #tpu.dot_dimension_numbers<[1], [0], [0], [1], [0, 0, 1, 1], [], []>} : vector<8x8xbf16>, vector<8x8xbf16>, vector<8x8xf32> -> vector<8x8xf32>
    %cst_5 = arith.constant 0.353553385 : f32
    %12 = vector.broadcast %cst_5 : f32 to vector<8x8xf32>
    %13 = arith.mulf %11, %12 : vector<8x8xf32>
    %14 = vector.broadcast %6 : vector<1x8xf32> to vector<8x8xf32>
    %15 = arith.addf %13, %14 : vector<8x8xf32>
    %cst_6 = arith.constant dense<0xFF800000> : vector<8xf32>
    %16 = vector.multi_reduction <maximumf>, %15, %cst_6 [1] : vector<8x8xf32> to vector<8xf32>
    %17 = vector.shape_cast %16 : vector<8xf32> to vector<8x1xf32>
    %18 = vector.broadcast %17 : vector<8x1xf32> to vector<8x8xf32>
    %19 = arith.subf %15, %18 : vector<8x8xf32>
    %20 = math.exp %19 : vector<8x8xf32>
    %cst_7 = arith.constant dense<0.000000e+00> : vector<8xf32>
    %21 = vector.multi_reduction <add>, %20, %cst_7 [1] : vector<8x8xf32> to vector<8xf32>
    %22 = vector.shape_cast %21 : vector<8xf32> to vector<8x1xf32>
    %23 = tpu.reciprocal %22 {approx = true} : vector<8x1xf32> -> vector<8x1xf32>
    %24 = vector.broadcast %23 : vector<8x1xf32> to vector<8x8xf32>
    %25 = arith.mulf %20, %24 : vector<8x8xf32>
    %26 = arith.truncf %25 : vector<8x8xf32> to vector<8x8xbf16>
    %cst_8 = arith.constant dense<0.000000e+00> : vector<8x8xf32>
    %27 = tpu.matmul %26, %9, %cst_8 {dimension_numbers = #tpu.dot_dimension_numbers<[1], [0], [0], [1], [0, 0, 1, 1], [], []>} : vector<8x8xbf16>, vector<8x8xbf16>, vector<8x8xf32> -> vector<8x8xf32>
    %28 = vector.extract_strided_slice %2 {offsets = [0, 8], sizes = [8, 8], strides = [1, 1]} : vector<8x32xbf16> to vector<8x8xbf16>
    %29 = vector.extract_strided_slice %3 {offsets = [0, 8], sizes = [8, 8], strides = [1, 1]} : vector<8x32xbf16> to vector<8x8xbf16>
    %30 = vector.extract_strided_slice %4 {offsets = [0, 8], sizes = [8, 8], strides = [1, 1]} : vector<8x32xbf16> to vector<8x8xbf16>
    %31 = tpu.transpose %29, [1, 0] : vector<8x8xbf16> -> vector<8x8xbf16>
    %cst_9 = arith.constant dense<0.000000e+00> : vector<8x8xf32>
    %32 = tpu.matmul %28, %31, %cst_9 {dimension_numbers = #tpu.dot_dimension_numbers<[1], [0], [0], [1], [0, 0, 1, 1], [], []>} : vector<8x8xbf16>, vector<8x8xbf16>, vector<8x8xf32> -> vector<8x8xf32>
    %cst_10 = arith.constant 0.353553385 : f32
    %33 = vector.broadcast %cst_10 : f32 to vector<8x8xf32>
    %34 = arith.mulf %32, %33 : vector<8x8xf32>
    %35 = vector.broadcast %6 : vector<1x8xf32> to vector<8x8xf32>
    %36 = arith.addf %34, %35 : vector<8x8xf32>
    %cst_11 = arith.constant dense<0xFF800000> : vector<8xf32>
    %37 = vector.multi_reduction <maximumf>, %36, %cst_11 [1] : vector<8x8xf32> to vector<8xf32>
    %38 = vector.shape_cast %37 : vector<8xf32> to vector<8x1xf32>
    %39 = vector.broadcast %38 : vector<8x1xf32> to vector<8x8xf32>
    %40 = arith.subf %36, %39 : vector<8x8xf32>
    %41 = math.exp %40 : vector<8x8xf32>
    %cst_12 = arith.constant dense<0.000000e+00> : vector<8xf32>
    %42 = vector.multi_reduction <add>, %41, %cst_12 [1] : vector<8x8xf32> to vector<8xf32>
    %43 = vector.shape_cast %42 : vector<8xf32> to vector<8x1xf32>
    %44 = tpu.reciprocal %43 {approx = true} : vector<8x1xf32> -> vector<8x1xf32>
    %45 = vector.broadcast %44 : vector<8x1xf32> to vector<8x8xf32>
    %46 = arith.mulf %41, %45 : vector<8x8xf32>
    %47 = arith.truncf %46 : vector<8x8xf32> to vector<8x8xbf16>
    %cst_13 = arith.constant dense<0.000000e+00> : vector<8x8xf32>
    %48 = tpu.matmul %47, %30, %cst_13 {dimension_numbers = #tpu.dot_dimension_numbers<[1], [0], [0], [1], [0, 0, 1, 1], [], []>} : vector<8x8xbf16>, vector<8x8xbf16>, vector<8x8xf32> -> vector<8x8xf32>
    %49 = vector.extract_strided_slice %2 {offsets = [0, 16], sizes = [8, 8], strides = [1, 1]} : vector<8x32xbf16> to vector<8x8xbf16>
    %50 = vector.extract_strided_slice %3 {offsets = [0, 16], sizes = [8, 8], strides = [1, 1]} : vector<8x32xbf16> to vector<8x8xbf16>
    %51 = vector.extract_strided_slice %4 {offsets = [0, 16], sizes = [8, 8], strides = [1, 1]} : vector<8x32xbf16> to vector<8x8xbf16>
    %52 = tpu.transpose %50, [1, 0] : vector<8x8xbf16> -> vector<8x8xbf16>
    %cst_14 = arith.constant dense<0.000000e+00> : vector<8x8xf32>
    %53 = tpu.matmul %49, %52, %cst_14 {dimension_numbers = #tpu.dot_dimension_numbers<[1], [0], [0], [1], [0, 0, 1, 1], [], []>} : vector<8x8xbf16>, vector<8x8xbf16>, vector<8x8xf32> -> vector<8x8xf32>
    %cst_15 = arith.constant 0.353553385 : f32
    %54 = vector.broadcast %cst_15 : f32 to vector<8x8xf32>
    %55 = arith.mulf %53, %54 : vector<8x8xf32>
    %56 = vector.broadcast %6 : vector<1x8xf32> to vector<8x8xf32>
    %57 = arith.addf %55, %56 : vector<8x8xf32>
    %cst_16 = arith.constant dense<0xFF800000> : vector<8xf32>
    %58 = vector.multi_reduction <maximumf>, %57, %cst_16 [1] : vector<8x8xf32> to vector<8xf32>
    %59 = vector.shape_cast %58 : vector<8xf32> to vector<8x1xf32>
    %60 = vector.broadcast %59 : vector<8x1xf32> to vector<8x8xf32>
    %61 = arith.subf %57, %60 : vector<8x8xf32>
    %62 = math.exp %61 : vector<8x8xf32>
    %cst_17 = arith.constant dense<0.000000e+00> : vector<8xf32>
    %63 = vector.multi_reduction <add>, %62, %cst_17 [1] : vector<8x8xf32> to vector<8xf32>
    %64 = vector.shape_cast %63 : vector<8xf32> to vector<8x1xf32>
    %65 = tpu.reciprocal %64 {approx = true} : vector<8x1xf32> -> vector<8x1xf32>
    %66 = vector.broadcast %65 : vector<8x1xf32> to vector<8x8xf32>
    %67 = arith.mulf %62, %66 : vector<8x8xf32>
    %68 = arith.truncf %67 : vector<8x8xf32> to vector<8x8xbf16>
    %cst_18 = arith.constant dense<0.000000e+00> : vector<8x8xf32>
    %69 = tpu.matmul %68, %51, %cst_18 {dimension_numbers = #tpu.dot_dimension_numbers<[1], [0], [0], [1], [0, 0, 1, 1], [], []>} : vector<8x8xbf16>, vector<8x8xbf16>, vector<8x8xf32> -> vector<8x8xf32>
    %70 = vector.extract_strided_slice %2 {offsets = [0, 24], sizes = [8, 8], strides = [1, 1]} : vector<8x32xbf16> to vector<8x8xbf16>
    %71 = vector.extract_strided_slice %3 {offsets = [0, 24], sizes = [8, 8], strides = [1, 1]} : vector<8x32xbf16> to vector<8x8xbf16>
    %72 = vector.extract_strided_slice %4 {offsets = [0, 24], sizes = [8, 8], strides = [1, 1]} : vector<8x32xbf16> to vector<8x8xbf16>
    %73 = tpu.transpose %71, [1, 0] : vector<8x8xbf16> -> vector<8x8xbf16>
    %cst_19 = arith.constant dense<0.000000e+00> : vector<8x8xf32>
    %74 = tpu.matmul %70, %73, %cst_19 {dimension_numbers = #tpu.dot_dimension_numbers<[1], [0], [0], [1], [0, 0, 1, 1], [], []>} : vector<8x8xbf16>, vector<8x8xbf16>, vector<8x8xf32> -> vector<8x8xf32>
    %cst_20 = arith.constant 0.353553385 : f32
    %75 = vector.broadcast %cst_20 : f32 to vector<8x8xf32>
    %76 = arith.mulf %74, %75 : vector<8x8xf32>
    %77 = vector.broadcast %6 : vector<1x8xf32> to vector<8x8xf32>
    %78 = arith.addf %76, %77 : vector<8x8xf32>
    %cst_21 = arith.constant dense<0xFF800000> : vector<8xf32>
    %79 = vector.multi_reduction <maximumf>, %78, %cst_21 [1] : vector<8x8xf32> to vector<8xf32>
    %80 = vector.shape_cast %79 : vector<8xf32> to vector<8x1xf32>
    %81 = vector.broadcast %80 : vector<8x1xf32> to vector<8x8xf32>
    %82 = arith.subf %78, %81 : vector<8x8xf32>
    %83 = math.exp %82 : vector<8x8xf32>
    %cst_22 = arith.constant dense<0.000000e+00> : vector<8xf32>
    %84 = vector.multi_reduction <add>, %83, %cst_22 [1] : vector<8x8xf32> to vector<8xf32>
    %85 = vector.shape_cast %84 : vector<8xf32> to vector<8x1xf32>
    %86 = tpu.reciprocal %85 {approx = true} : vector<8x1xf32> -> vector<8x1xf32>
    %87 = vector.broadcast %86 : vector<8x1xf32> to vector<8x8xf32>
    %88 = arith.mulf %83, %87 : vector<8x8xf32>
    %89 = arith.truncf %88 : vector<8x8xf32> to vector<8x8xbf16>
    %cst_23 = arith.constant dense<0.000000e+00> : vector<8x8xf32>
    %90 = tpu.matmul %89, %72, %cst_23 {dimension_numbers = #tpu.dot_dimension_numbers<[1], [0], [0], [1], [0, 0, 1, 1], [], []>} : vector<8x8xbf16>, vector<8x8xbf16>, vector<8x8xf32> -> vector<8x8xf32>
    %91 = tpu.concatenate %27, %48, %69, %90 in 1 : vector<8x8xf32>, vector<8x8xf32>, vector<8x8xf32>, vector<8x8xf32> -> vector<8x32xf32>
    %92 = arith.truncf %91 : vector<8x32xf32> to vector<8x32xbf16>
    %c0_24 = arith.constant 0 : index
    %c0_25 = arith.constant 0 : index
    %c0_26 = arith.constant 0 : index
    %93 = vector.load %arg3[%c0_24, %c0_25, %c0_26] : memref<1x8x32xbf16, #tpu.memory_space<vmem>>, vector<1x8x32xbf16>
    %94 = vector.shape_cast %93 : vector<1x8x32xbf16> to vector<8x32xbf16>
    %95 = vector.shape_cast %92 : vector<8x32xbf16> to vector<1x8x32xbf16>
    tpu.vector_store %arg3[%c0_24, %c0_25, %c0_26], %95 {strides = array<i32>} : memref<1x8x32xbf16, #tpu.memory_space<vmem>>, vector<1x8x32xbf16>,
    return
  }
  func.func @transform_0(%arg0: i32) -> (i32, i32, i32) {
    %c0_i32 = arith.constant 0 : i32
    %c0_i32_0 = arith.constant 0 : i32
    %c0_i32_1 = arith.constant 0 : i32
    return %arg0, %c0_i32, %c0_i32_0 : i32, i32, i32
  }
  func.func @transform_1(%arg0: i32) -> (i32, i32, i32) {
    %c0_i32 = arith.constant 0 : i32
    %c0_i32_0 = arith.constant 0 : i32
    %c0_i32_1 = arith.constant 0 : i32
    return %arg0, %c0_i32, %c0_i32_0 : i32, i32, i32
  }
  func.func @transform_2(%arg0: i32) -> (i32, i32, i32) {
    %c0_i32 = arith.constant 0 : i32
    %c0_i32_0 = arith.constant 0 : i32
    %c0_i32_1 = arith.constant 0 : i32
    return %arg0, %c0_i32, %c0_i32_0 : i32, i32, i32
  }
}

module attributes {stable_mosaic.version = 11 : i64} {
  func.func @_linear_kernel(%arg0: i32, %arg1: i32, %arg2: i32, %arg3: memref<16x128xbf16, #tpu.memory_space<vmem>>, %arg4: memref<128x128xbf16, #tpu.memory_space<vmem>>, %arg5: memref<1x128xf32, #tpu.memory_space<vmem>>, %arg6: memref<16x128xf32, #tpu.memory_space<vmem>>, %arg7: memref<16x128xf32, #tpu.memory_space<vmem>>) attributes {dimension_semantics = [#tpu.dimension_semantics<parallel>, #tpu.dimension_semantics<parallel>, #tpu.dimension_semantics<arbitrary>], iteration_bounds = array<i64: 1, 1, 1>, scalar_prefetch = 0 : i64, scratch_operands = 1 : i64, tpu.core_type = #tpu.core_type<tc>, window_params = [{transform_indices = @transform_0, window_bounds = array<i64: 16, 128>}, {transform_indices = @transform_1, window_bounds = array<i64: 128, 128>}, {transform_indices = @transform_2, window_bounds = array<i64: 1, 128>}, {transform_indices = @transform_3, window_bounds = array<i64: 16, 128>}]} {
    %c0_i32 = arith.constant 0 : i32
    %0 = arith.cmpi eq, %arg2, %c0_i32 : i32
    %1 = arith.extui %0 : i1 to i32
    %c0_i32_0 = arith.constant 0 : i32
    %2 = arith.cmpi ne, %1, %c0_i32_0 : i32
    scf.if %2 {
      %cst_10 = arith.constant 0.000000e+00 : f32
      %12 = vector.broadcast %cst_10 : f32 to vector<16x128xf32>
      %c0_11 = arith.constant 0 : index
      %c0_12 = arith.constant 0 : index
      %13 = vector.load %arg7[%c0_11, %c0_12] : memref<16x128xf32, #tpu.memory_space<vmem>>, vector<16x128xf32>
      tpu.vector_store %arg7[%c0_11, %c0_12], %12 {strides = array<i32>} : memref<16x128xf32, #tpu.memory_space<vmem>>, vector<16x128xf32>,
    } else {
    }
    %c0 = arith.constant 0 : index
    %c0_1 = arith.constant 0 : index
    %3 = vector.load %arg7[%c0, %c0_1] : memref<16x128xf32, #tpu.memory_space<vmem>>, vector<16x128xf32>
    %c0_2 = arith.constant 0 : index
    %c0_3 = arith.constant 0 : index
    %4 = vector.load %arg3[%c0_2, %c0_3] : memref<16x128xbf16, #tpu.memory_space<vmem>>, vector<16x128xbf16>
    %c0_4 = arith.constant 0 : index
    %c0_5 = arith.constant 0 : index
    %5 = vector.load %arg4[%c0_4, %c0_5] : memref<128x128xbf16, #tpu.memory_space<vmem>>, vector<128x128xbf16>
    %cst = arith.constant dense<0.000000e+00> : vector<16x128xf32>
    %6 = tpu.matmul %4, %5, %cst {dimension_numbers = #tpu.dot_dimension_numbers<[1], [0], [0], [1], [0, 0, 1, 1], [], []>} : vector<16x128xbf16>, vector<128x128xbf16>, vector<16x128xf32> -> vector<16x128xf32>
    %7 = arith.addf %3, %6 : vector<16x128xf32>
    %c0_6 = arith.constant 0 : index
    %c0_7 = arith.constant 0 : index
    %8 = vector.load %arg7[%c0_6, %c0_7] : memref<16x128xf32, #tpu.memory_space<vmem>>, vector<16x128xf32>
    tpu.vector_store %arg7[%c0_6, %c0_7], %7 {strides = array<i32>} : memref<16x128xf32, #tpu.memory_space<vmem>>, vector<16x128xf32>,
    %c0_i32_8 = arith.constant 0 : i32
    %9 = arith.cmpi eq, %arg2, %c0_i32_8 : i32
    %10 = arith.extui %9 : i1 to i32
    %c0_i32_9 = arith.constant 0 : i32
    %11 = arith.cmpi ne, %10, %c0_i32_9 : i32
    scf.if %11 {
      %c0_10 = arith.constant 0 : index
      %c0_11 = arith.constant 0 : index
      %12 = vector.load %arg7[%c0_10, %c0_11] : memref<16x128xf32, #tpu.memory_space<vmem>>, vector<16x128xf32>
      %c0_12 = arith.constant 0 : index
      %c0_13 = arith.constant 0 : index
      %13 = vector.load %arg5[%c0_12, %c0_13] : memref<1x128xf32, #tpu.memory_space<vmem>>, vector<1x128xf32>
      %14 = vector.broadcast %13 : vector<1x128xf32> to vector<16x128xf32>
      %15 = arith.addf %12, %14 : vector<16x128xf32>
      %c0_14 = arith.constant 0 : index
      %c0_15 = arith.constant 0 : index
      %16 = vector.load %arg6[%c0_14, %c0_15] : memref<16x128xf32, #tpu.memory_space<vmem>>, vector<16x128xf32>
      tpu.vector_store %arg6[%c0_14, %c0_15], %15 {strides = array<i32>} : memref<16x128xf32, #tpu.memory_space<vmem>>, vector<16x128xf32>,
    } else {
    }
    return
  }
  func.func @transform_0(%arg0: i32, %arg1: i32, %arg2: i32) -> (i32, i32) {
    %c0_i32 = arith.constant 0 : i32
    return %arg0, %arg2 : i32, i32
  }
  func.func @transform_1(%arg0: i32, %arg1: i32, %arg2: i32) -> (i32, i32) {
    %c0_i32 = arith.constant 0 : i32
    return %arg2, %arg1 : i32, i32
  }
  func.func @transform_2(%arg0: i32, %arg1: i32, %arg2: i32) -> (i32, i32) {
    %c0_i32 = arith.constant 0 : i32
    %c0_i32_0 = arith.constant 0 : i32
    return %c0_i32, %arg1 : i32, i32
  }
  func.func @transform_3(%arg0: i32, %arg1: i32, %arg2: i32) -> (i32, i32) {
    %c0_i32 = arith.constant 0 : i32
    return %arg0, %arg1 : i32, i32
  }
}

module attributes {stable_mosaic.version = 11 : i64} {
  func.func @_self_mha_kernel(%arg0: i32, %arg1: memref<1x6x96xbf16, #tpu.memory_space<vmem>>, %arg2: memref<1x6x6xf32, #tpu.memory_space<vmem>>, %arg3: memref<1x6x32xbf16, #tpu.memory_space<vmem>>) attributes {dimension_semantics = [#tpu.dimension_semantics<parallel>], iteration_bounds = array<i64: 2>, scalar_prefetch = 0 : i64, scratch_operands = 0 : i64, tpu.core_type = #tpu.core_type<tc>, window_params = [{transform_indices = @transform_0, window_bounds = array<i64: 1, 6, 96>}, {pipeline_mode = #tpu.pipeline_mode<synchronous>, transform_indices = @transform_1, window_bounds = array<i64: 1, 6, 6>}, {transform_indices = @transform_2, window_bounds = array<i64: 1, 6, 32>}]} {
    %c0 = arith.constant 0 : index
    %c0_0 = arith.constant 0 : index
    %c0_1 = arith.constant 0 : index
    %0 = vector.load %arg1[%c0, %c0_0, %c0_1] : memref<1x6x96xbf16, #tpu.memory_space<vmem>>, vector<1x6x96xbf16>
    %1 = vector.shape_cast %0 : vector<1x6x96xbf16> to vector<6x96xbf16>
    %2 = vector.extract_strided_slice %1 {offsets = [0, 0], sizes = [6, 32], strides = [1, 1]} : vector<6x96xbf16> to vector<6x32xbf16>
    %3 = vector.extract_strided_slice %1 {offsets = [0, 32], sizes = [6, 32], strides = [1, 1]} : vector<6x96xbf16> to vector<6x32xbf16>
    %4 = vector.extract_strided_slice %1 {offsets = [0, 64], sizes = [6, 32], strides = [1, 1]} : vector<6x96xbf16> to vector<6x32xbf16>
    %c0_2 = arith.constant 0 : index
    %c0_3 = arith.constant 0 : index
    %c0_4 = arith.constant 0 : index
    %5 = vector.load %arg2[%c0_2, %c0_3, %c0_4] : memref<1x6x6xf32, #tpu.memory_space<vmem>>, vector<1x6x6xf32>
    %6 = vector.shape_cast %5 : vector<1x6x6xf32> to vector<6x6xf32>
    %7 = vector.extract_strided_slice %2 {offsets = [0, 0], sizes = [6, 8], strides = [1, 1]} : vector<6x32xbf16> to vector<6x8xbf16>
    %8 = vector.extract_strided_slice %3 {offsets = [0, 0], sizes = [6, 8], strides = [1, 1]} : vector<6x32xbf16> to vector<6x8xbf16>
    %9 = vector.extract_strided_slice %4 {offsets = [0, 0], sizes = [6, 8], strides = [1, 1]} : vector<6x32xbf16> to vector<6x8xbf16>
    %10 = tpu.transpose %8, [1, 0] : vector<6x8xbf16> -> vector<8x6xbf16>
    %cst = arith.constant dense<0.000000e+00> : vector<6x6xf32>
    %11 = tpu.matmul %7, %10, %cst {dimension_numbers = #tpu.dot_dimension_numbers<[1], [0], [0], [1], [0, 0, 1, 1], [], []>} : vector<6x8xbf16>, vector<8x6xbf16>, vector<6x6xf32> -> vector<6x6xf32>
    %cst_5 = arith.constant 0.353553385 : f32
    %12 = vector.broadcast %cst_5 : f32 to vector<6x6xf32>
    %13 = arith.mulf %11, %12 : vector<6x6xf32>
    %14 = arith.addf %13, %6 : vector<6x6xf32>
    %cst_6 = arith.constant dense<0xFF800000> : vector<6xf32>
    %15 = vector.multi_reduction <maximumf>, %14, %cst_6 [1] : vector<6x6xf32> to vector<6xf32>
    %16 = vector.shape_cast %15 : vector<6xf32> to vector<6x1xf32>
    %17 = vector.broadcast %16 : vector<6x1xf32> to vector<6x6xf32>
    %18 = arith.subf %14, %17 : vector<6x6xf32>
    %19 = math.exp %18 : vector<6x6xf32>
    %cst_7 = arith.constant dense<0.000000e+00> : vector<6xf32>
    %20 = vector.multi_reduction <add>, %19, %cst_7 [1] : vector<6x6xf32> to vector<6xf32>
    %21 = vector.shape_cast %20 : vector<6xf32> to vector<6x1xf32>
    %22 = tpu.reciprocal %21 {approx = true} : vector<6x1xf32> -> vector<6x1xf32>
    %23 = vector.broadcast %22 : vector<6x1xf32> to vector<6x6xf32>
    %24 = arith.mulf %19, %23 : vector<6x6xf32>
    %25 = arith.truncf %24 : vector<6x6xf32> to vector<6x6xbf16>
    %cst_8 = arith.constant dense<0.000000e+00> : vector<6x8xf32>
    %26 = tpu.matmul %25, %9, %cst_8 {dimension_numbers = #tpu.dot_dimension_numbers<[1], [0], [0], [1], [0, 0, 1, 1], [], []>} : vector<6x6xbf16>, vector<6x8xbf16>, vector<6x8xf32> -> vector<6x8xf32>
    %27 = vector.extract_strided_slice %2 {offsets = [0, 8], sizes = [6, 8], strides = [1, 1]} : vector<6x32xbf16> to vector<6x8xbf16>
    %28 = vector.extract_strided_slice %3 {offsets = [0, 8], sizes = [6, 8], strides = [1, 1]} : vector<6x32xbf16> to vector<6x8xbf16>
    %29 = vector.extract_strided_slice %4 {offsets = [0, 8], sizes = [6, 8], strides = [1, 1]} : vector<6x32xbf16> to vector<6x8xbf16>
    %30 = tpu.transpose %28, [1, 0] : vector<6x8xbf16> -> vector<8x6xbf16>
    %cst_9 = arith.constant dense<0.000000e+00> : vector<6x6xf32>
    %31 = tpu.matmul %27, %30, %cst_9 {dimension_numbers = #tpu.dot_dimension_numbers<[1], [0], [0], [1], [0, 0, 1, 1], [], []>} : vector<6x8xbf16>, vector<8x6xbf16>, vector<6x6xf32> -> vector<6x6xf32>
    %cst_10 = arith.constant 0.353553385 : f32
    %32 = vector.broadcast %cst_10 : f32 to vector<6x6xf32>
    %33 = arith.mulf %31, %32 : vector<6x6xf32>
    %34 = arith.addf %33, %6 : vector<6x6xf32>
    %cst_11 = arith.constant dense<0xFF800000> : vector<6xf32>
    %35 = vector.multi_reduction <maximumf>, %34, %cst_11 [1] : vector<6x6xf32> to vector<6xf32>
    %36 = vector.shape_cast %35 : vector<6xf32> to vector<6x1xf32>
    %37 = vector.broadcast %36 : vector<6x1xf32> to vector<6x6xf32>
    %38 = arith.subf %34, %37 : vector<6x6xf32>
    %39 = math.exp %38 : vector<6x6xf32>
    %cst_12 = arith.constant dense<0.000000e+00> : vector<6xf32>
    %40 = vector.multi_reduction <add>, %39, %cst_12 [1] : vector<6x6xf32> to vector<6xf32>
    %41 = vector.shape_cast %40 : vector<6xf32> to vector<6x1xf32>
    %42 = tpu.reciprocal %41 {approx = true} : vector<6x1xf32> -> vector<6x1xf32>
    %43 = vector.broadcast %42 : vector<6x1xf32> to vector<6x6xf32>
    %44 = arith.mulf %39, %43 : vector<6x6xf32>
    %45 = arith.truncf %44 : vector<6x6xf32> to vector<6x6xbf16>
    %cst_13 = arith.constant dense<0.000000e+00> : vector<6x8xf32>
    %46 = tpu.matmul %45, %29, %cst_13 {dimension_numbers = #tpu.dot_dimension_numbers<[1], [0], [0], [1], [0, 0, 1, 1], [], []>} : vector<6x6xbf16>, vector<6x8xbf16>, vector<6x8xf32> -> vector<6x8xf32>
    %47 = vector.extract_strided_slice %2 {offsets = [0, 16], sizes = [6, 8], strides = [1, 1]} : vector<6x32xbf16> to vector<6x8xbf16>
    %48 = vector.extract_strided_slice %3 {offsets = [0, 16], sizes = [6, 8], strides = [1, 1]} : vector<6x32xbf16> to vector<6x8xbf16>
    %49 = vector.extract_strided_slice %4 {offsets = [0, 16], sizes = [6, 8], strides = [1, 1]} : vector<6x32xbf16> to vector<6x8xbf16>
    %50 = tpu.transpose %48, [1, 0] : vector<6x8xbf16> -> vector<8x6xbf16>
    %cst_14 = arith.constant dense<0.000000e+00> : vector<6x6xf32>
    %51 = tpu.matmul %47, %50, %cst_14 {dimension_numbers = #tpu.dot_dimension_numbers<[1], [0], [0], [1], [0, 0, 1, 1], [], []>} : vector<6x8xbf16>, vector<8x6xbf16>, vector<6x6xf32> -> vector<6x6xf32>
    %cst_15 = arith.constant 0.353553385 : f32
    %52 = vector.broadcast %cst_15 : f32 to vector<6x6xf32>
    %53 = arith.mulf %51, %52 : vector<6x6xf32>
    %54 = arith.addf %53, %6 : vector<6x6xf32>
    %cst_16 = arith.constant dense<0xFF800000> : vector<6xf32>
    %55 = vector.multi_reduction <maximumf>, %54, %cst_16 [1] : vector<6x6xf32> to vector<6xf32>
    %56 = vector.shape_cast %55 : vector<6xf32> to vector<6x1xf32>
    %57 = vector.broadcast %56 : vector<6x1xf32> to vector<6x6xf32>
    %58 = arith.subf %54, %57 : vector<6x6xf32>
    %59 = math.exp %58 : vector<6x6xf32>
    %cst_17 = arith.constant dense<0.000000e+00> : vector<6xf32>
    %60 = vector.multi_reduction <add>, %59, %cst_17 [1] : vector<6x6xf32> to vector<6xf32>
    %61 = vector.shape_cast %60 : vector<6xf32> to vector<6x1xf32>
    %62 = tpu.reciprocal %61 {approx = true} : vector<6x1xf32> -> vector<6x1xf32>
    %63 = vector.broadcast %62 : vector<6x1xf32> to vector<6x6xf32>
    %64 = arith.mulf %59, %63 : vector<6x6xf32>
    %65 = arith.truncf %64 : vector<6x6xf32> to vector<6x6xbf16>
    %cst_18 = arith.constant dense<0.000000e+00> : vector<6x8xf32>
    %66 = tpu.matmul %65, %49, %cst_18 {dimension_numbers = #tpu.dot_dimension_numbers<[1], [0], [0], [1], [0, 0, 1, 1], [], []>} : vector<6x6xbf16>, vector<6x8xbf16>, vector<6x8xf32> -> vector<6x8xf32>
    %67 = vector.extract_strided_slice %2 {offsets = [0, 24], sizes = [6, 8], strides = [1, 1]} : vector<6x32xbf16> to vector<6x8xbf16>
    %68 = vector.extract_strided_slice %3 {offsets = [0, 24], sizes = [6, 8], strides = [1, 1]} : vector<6x32xbf16> to vector<6x8xbf16>
    %69 = vector.extract_strided_slice %4 {offsets = [0, 24], sizes = [6, 8], strides = [1, 1]} : vector<6x32xbf16> to vector<6x8xbf16>
    %70 = tpu.transpose %68, [1, 0] : vector<6x8xbf16> -> vector<8x6xbf16>
    %cst_19 = arith.constant dense<0.000000e+00> : vector<6x6xf32>
    %71 = tpu.matmul %67, %70, %cst_19 {dimension_numbers = #tpu.dot_dimension_numbers<[1], [0], [0], [1], [0, 0, 1, 1], [], []>} : vector<6x8xbf16>, vector<8x6xbf16>, vector<6x6xf32> -> vector<6x6xf32>
    %cst_20 = arith.constant 0.353553385 : f32
    %72 = vector.broadcast %cst_20 : f32 to vector<6x6xf32>
    %73 = arith.mulf %71, %72 : vector<6x6xf32>
    %74 = arith.addf %73, %6 : vector<6x6xf32>
    %cst_21 = arith.constant dense<0xFF800000> : vector<6xf32>
    %75 = vector.multi_reduction <maximumf>, %74, %cst_21 [1] : vector<6x6xf32> to vector<6xf32>
    %76 = vector.shape_cast %75 : vector<6xf32> to vector<6x1xf32>
    %77 = vector.broadcast %76 : vector<6x1xf32> to vector<6x6xf32>
    %78 = arith.subf %74, %77 : vector<6x6xf32>
    %79 = math.exp %78 : vector<6x6xf32>
    %cst_22 = arith.constant dense<0.000000e+00> : vector<6xf32>
    %80 = vector.multi_reduction <add>, %79, %cst_22 [1] : vector<6x6xf32> to vector<6xf32>
    %81 = vector.shape_cast %80 : vector<6xf32> to vector<6x1xf32>
    %82 = tpu.reciprocal %81 {approx = true} : vector<6x1xf32> -> vector<6x1xf32>
    %83 = vector.broadcast %82 : vector<6x1xf32> to vector<6x6xf32>
    %84 = arith.mulf %79, %83 : vector<6x6xf32>
    %85 = arith.truncf %84 : vector<6x6xf32> to vector<6x6xbf16>
    %cst_23 = arith.constant dense<0.000000e+00> : vector<6x8xf32>
    %86 = tpu.matmul %85, %69, %cst_23 {dimension_numbers = #tpu.dot_dimension_numbers<[1], [0], [0], [1], [0, 0, 1, 1], [], []>} : vector<6x6xbf16>, vector<6x8xbf16>, vector<6x8xf32> -> vector<6x8xf32>
    %87 = tpu.concatenate %26, %46, %66, %86 in 1 : vector<6x8xf32>, vector<6x8xf32>, vector<6x8xf32>, vector<6x8xf32> -> vector<6x32xf32>
    %88 = arith.truncf %87 : vector<6x32xf32> to vector<6x32xbf16>
    %c0_24 = arith.constant 0 : index
    %c0_25 = arith.constant 0 : index
    %c0_26 = arith.constant 0 : index
    %89 = vector.load %arg3[%c0_24, %c0_25, %c0_26] : memref<1x6x32xbf16, #tpu.memory_space<vmem>>, vector<1x6x32xbf16>
    %90 = vector.shape_cast %89 : vector<1x6x32xbf16> to vector<6x32xbf16>
    %91 = vector.shape_cast %88 : vector<6x32xbf16> to vector<1x6x32xbf16>
    tpu.vector_store %arg3[%c0_24, %c0_25, %c0_26], %91 {strides = array<i32>} : memref<1x6x32xbf16, #tpu.memory_space<vmem>>, vector<1x6x32xbf16>,
    return
  }
  func.func @transform_0(%arg0: i32) -> (i32, i32, i32) {
    %c0_i32 = arith.constant 0 : i32
    %c0_i32_0 = arith.constant 0 : i32
    %c0_i32_1 = arith.constant 0 : i32
    return %arg0, %c0_i32, %c0_i32_0 : i32, i32, i32
  }
  func.func @transform_1(%arg0: i32) -> (i32, i32, i32) {
    %c0_i32 = arith.constant 0 : i32
    %c0_i32_0 = arith.constant 0 : i32
    %c0_i32_1 = arith.constant 0 : i32
    %c0_i32_2 = arith.constant 0 : i32
    return %c0_i32, %c0_i32_0, %c0_i32_1 : i32, i32, i32
  }
  func.func @transform_2(%arg0: i32) -> (i32, i32, i32) {
    %c0_i32 = arith.constant 0 : i32
    %c0_i32_0 = arith.constant 0 : i32
    %c0_i32_1 = arith.constant 0 : i32
    return %arg0, %c0_i32, %c0_i32_0 : i32, i32, i32
  }
}

module attributes {stable_mosaic.version = 11 : i64} {
  func.func @_linear_kernel(%arg0: i32, %arg1: i32, %arg2: i32, %arg3: memref<16x128xbf16, #tpu.memory_space<vmem>>, %arg4: memref<128x128xbf16, #tpu.memory_space<vmem>>, %arg5: memref<1x128xf32, #tpu.memory_space<vmem>>, %arg6: memref<16x128xbf16, #tpu.memory_space<vmem>>, %arg7: memref<16x128xf32, #tpu.memory_space<vmem>>) attributes {dimension_semantics = [#tpu.dimension_semantics<parallel>, #tpu.dimension_semantics<parallel>, #tpu.dimension_semantics<arbitrary>], iteration_bounds = array<i64: 1, 1, 1>, scalar_prefetch = 0 : i64, scratch_operands = 1 : i64, tpu.core_type = #tpu.core_type<tc>, window_params = [{transform_indices = @transform_0, window_bounds = array<i64: 16, 128>}, {transform_indices = @transform_1, window_bounds = array<i64: 128, 128>}, {transform_indices = @transform_2, window_bounds = array<i64: 1, 128>}, {transform_indices = @transform_3, window_bounds = array<i64: 16, 128>}]} {
    %c0_i32 = arith.constant 0 : i32
    %0 = arith.cmpi eq, %arg2, %c0_i32 : i32
    %1 = arith.extui %0 : i1 to i32
    %c0_i32_0 = arith.constant 0 : i32
    %2 = arith.cmpi ne, %1, %c0_i32_0 : i32
    scf.if %2 {
      %cst_10 = arith.constant 0.000000e+00 : f32
      %12 = vector.broadcast %cst_10 : f32 to vector<16x128xf32>
      %c0_11 = arith.constant 0 : index
      %c0_12 = arith.constant 0 : index
      %13 = vector.load %arg7[%c0_11, %c0_12] : memref<16x128xf32, #tpu.memory_space<vmem>>, vector<16x128xf32>
      tpu.vector_store %arg7[%c0_11, %c0_12], %12 {strides = array<i32>} : memref<16x128xf32, #tpu.memory_space<vmem>>, vector<16x128xf32>,
    } else {
    }
    %c0 = arith.constant 0 : index
    %c0_1 = arith.constant 0 : index
    %3 = vector.load %arg7[%c0, %c0_1] : memref<16x128xf32, #tpu.memory_space<vmem>>, vector<16x128xf32>
    %c0_2 = arith.constant 0 : index
    %c0_3 = arith.constant 0 : index
    %4 = vector.load %arg3[%c0_2, %c0_3] : memref<16x128xbf16, #tpu.memory_space<vmem>>, vector<16x128xbf16>
    %c0_4 = arith.constant 0 : index
    %c0_5 = arith.constant 0 : index
    %5 = vector.load %arg4[%c0_4, %c0_5] : memref<128x128xbf16, #tpu.memory_space<vmem>>, vector<128x128xbf16>
    %cst = arith.constant dense<0.000000e+00> : vector<16x128xf32>
    %6 = tpu.matmul %4, %5, %cst {dimension_numbers = #tpu.dot_dimension_numbers<[1], [0], [0], [1], [0, 0, 1, 1], [], []>} : vector<16x128xbf16>, vector<128x128xbf16>, vector<16x128xf32> -> vector<16x128xf32>
    %7 = arith.addf %3, %6 : vector<16x128xf32>
    %c0_6 = arith.constant 0 : index
    %c0_7 = arith.constant 0 : index
    %8 = vector.load %arg7[%c0_6, %c0_7] : memref<16x128xf32, #tpu.memory_space<vmem>>, vector<16x128xf32>
    tpu.vector_store %arg7[%c0_6, %c0_7], %7 {strides = array<i32>} : memref<16x128xf32, #tpu.memory_space<vmem>>, vector<16x128xf32>,
    %c0_i32_8 = arith.constant 0 : i32
    %9 = arith.cmpi eq, %arg2, %c0_i32_8 : i32
    %10 = arith.extui %9 : i1 to i32
    %c0_i32_9 = arith.constant 0 : i32
    %11 = arith.cmpi ne, %10, %c0_i32_9 : i32
    scf.if %11 {
      %c0_10 = arith.constant 0 : index
      %c0_11 = arith.constant 0 : index
      %12 = vector.load %arg7[%c0_10, %c0_11] : memref<16x128xf32, #tpu.memory_space<vmem>>, vector<16x128xf32>
      %c0_12 = arith.constant 0 : index
      %c0_13 = arith.constant 0 : index
      %13 = vector.load %arg5[%c0_12, %c0_13] : memref<1x128xf32, #tpu.memory_space<vmem>>, vector<1x128xf32>
      %14 = vector.broadcast %13 : vector<1x128xf32> to vector<16x128xf32>
      %15 = arith.addf %12, %14 : vector<16x128xf32>
      %cst_14 = arith.constant 0.000000e+00 : f32
      %16 = vector.broadcast %cst_14 : f32 to vector<16x128xf32>
      %17 = arith.maximumf %15, %16 : vector<16x128xf32>
      %18 = arith.truncf %17 : vector<16x128xf32> to vector<16x128xbf16>
      %c0_15 = arith.constant 0 : index
      %c0_16 = arith.constant 0 : index
      %19 = vector.load %arg6[%c0_15, %c0_16] : memref<16x128xbf16, #tpu.memory_space<vmem>>, vector<16x128xbf16>
      tpu.vector_store %arg6[%c0_15, %c0_16], %18 {strides = array<i32>} : memref<16x128xbf16, #tpu.memory_space<vmem>>, vector<16x128xbf16>,
    } else {
    }
    return
  }
  func.func @transform_0(%arg0: i32, %arg1: i32, %arg2: i32) -> (i32, i32) {
    %c0_i32 = arith.constant 0 : i32
    return %arg0, %arg2 : i32, i32
  }
  func.func @transform_1(%arg0: i32, %arg1: i32, %arg2: i32) -> (i32, i32) {
    %c0_i32 = arith.constant 0 : i32
    return %arg2, %arg1 : i32, i32
  }
  func.func @transform_2(%arg0: i32, %arg1: i32, %arg2: i32) -> (i32, i32) {
    %c0_i32 = arith.constant 0 : i32
    %c0_i32_0 = arith.constant 0 : i32
    return %c0_i32, %arg1 : i32, i32
  }
  func.func @transform_3(%arg0: i32, %arg1: i32, %arg2: i32) -> (i32, i32) {
    %c0_i32 = arith.constant 0 : i32
    return %arg0, %arg1 : i32, i32
  }
}

module attributes {stable_mosaic.version = 11 : i64} {
  func.func @_cross_mha_kernel(%arg0: i32, %arg1: memref<1x6x32xbf16, #tpu.memory_space<vmem>>, %arg2: memref<1x8x64xbf16, #tpu.memory_space<vmem>>, %arg3: memref<1x1x8xf32, #tpu.memory_space<vmem>>, %arg4: memref<1x6x32xbf16, #tpu.memory_space<vmem>>) attributes {dimension_semantics = [#tpu.dimension_semantics<parallel>], iteration_bounds = array<i64: 2>, scalar_prefetch = 0 : i64, scratch_operands = 0 : i64, tpu.core_type = #tpu.core_type<tc>, window_params = [{transform_indices = @transform_0, window_bounds = array<i64: 1, 6, 32>}, {transform_indices = @transform_1, window_bounds = array<i64: 1, 8, 64>}, {transform_indices = @transform_2, window_bounds = array<i64: 1, 1, 8>}, {transform_indices = @transform_3, window_bounds = array<i64: 1, 6, 32>}]} {
    %c0 = arith.constant 0 : index
    %c0_0 = arith.constant 0 : index
    %c0_1 = arith.constant 0 : index
    %0 = vector.load %arg2[%c0, %c0_0, %c0_1] : memref<1x8x64xbf16, #tpu.memory_space<vmem>>, vector<1x8x64xbf16>
    %1 = vector.shape_cast %0 : vector<1x8x64xbf16> to vector<8x64xbf16>
    %c0_2 = arith.constant 0 : index
    %c0_3 = arith.constant 0 : index
    %c0_4 = arith.constant 0 : index
    %2 = vector.load %arg1[%c0_2, %c0_3, %c0_4] : memref<1x6x32xbf16, #tpu.memory_space<vmem>>, vector<1x6x32xbf16>
    %3 = vector.shape_cast %2 : vector<1x6x32xbf16> to vector<6x32xbf16>
    %4 = vector.extract_strided_slice %1 {offsets = [0, 0], sizes = [8, 32], strides = [1, 1]} : vector<8x64xbf16> to vector<8x32xbf16>
    %5 = vector.extract_strided_slice %1 {offsets = [0, 32], sizes = [8, 32], strides = [1, 1]} : vector<8x64xbf16> to vector<8x32xbf16>
    %c0_5 = arith.constant 0 : index
    %c0_6 = arith.constant 0 : index
    %c0_7 = arith.constant 0 : index
    %6 = vector.load %arg3[%c0_5, %c0_6, %c0_7] : memref<1x1x8xf32, #tpu.memory_space<vmem>>, vector<1x1x8xf32>
    %7 = vector.shape_cast %6 : vector<1x1x8xf32> to vector<1x8xf32>
    %8 = vector.extract_strided_slice %3 {offsets = [0, 0], sizes = [6, 8], strides = [1, 1]} : vector<6x32xbf16> to vector<6x8xbf16>
    %9 = vector.extract_strided_slice %4 {offsets = [0, 0], sizes = [8, 8], strides = [1, 1]} : vector<8x32xbf16> to vector<8x8xbf16>
    %10 = vector.extract_strided_slice %5 {offsets = [0, 0], sizes = [8, 8], strides = [1, 1]} : vector<8x32xbf16> to vector<8x8xbf16>
    %11 = tpu.transpose %9, [1, 0] : vector<8x8xbf16> -> vector<8x8xbf16>
    %cst = arith.constant dense<0.000000e+00> : vector<6x8xf32>
    %12 = tpu.matmul %8, %11, %cst {dimension_numbers = #tpu.dot_dimension_numbers<[1], [0], [0], [1], [0, 0, 1, 1], [], []>} : vector<6x8xbf16>, vector<8x8xbf16>, vector<6x8xf32> -> vector<6x8xf32>
    %cst_8 = arith.constant 0.353553385 : f32
    %13 = vector.broadcast %cst_8 : f32 to vector<6x8xf32>
    %14 = arith.mulf %12, %13 : vector<6x8xf32>
    %15 = vector.broadcast %7 : vector<1x8xf32> to vector<6x8xf32>
    %16 = arith.addf %14, %15 : vector<6x8xf32>
    %cst_9 = arith.constant dense<0xFF800000> : vector<6xf32>
    %17 = vector.multi_reduction <maximumf>, %16, %cst_9 [1] : vector<6x8xf32> to vector<6xf32>
    %18 = vector.shape_cast %17 : vector<6xf32> to vector<6x1xf32>
    %19 = vector.broadcast %18 : vector<6x1xf32> to vector<6x8xf32>
    %20 = arith.subf %16, %19 : vector<6x8xf32>
    %21 = math.exp %20 : vector<6x8xf32>
    %cst_10 = arith.constant dense<0.000000e+00> : vector<6xf32>
    %22 = vector.multi_reduction <add>, %21, %cst_10 [1] : vector<6x8xf32> to vector<6xf32>
    %23 = vector.shape_cast %22 : vector<6xf32> to vector<6x1xf32>
    %24 = tpu.reciprocal %23 {approx = true} : vector<6x1xf32> -> vector<6x1xf32>
    %25 = vector.broadcast %24 : vector<6x1xf32> to vector<6x8xf32>
    %26 = arith.mulf %21, %25 : vector<6x8xf32>
    %27 = arith.truncf %26 : vector<6x8xf32> to vector<6x8xbf16>
    %cst_11 = arith.constant dense<0.000000e+00> : vector<6x8xf32>
    %28 = tpu.matmul %27, %10, %cst_11 {dimension_numbers = #tpu.dot_dimension_numbers<[1], [0], [0], [1], [0, 0, 1, 1], [], []>} : vector<6x8xbf16>, vector<8x8xbf16>, vector<6x8xf32> -> vector<6x8xf32>
    %29 = vector.extract_strided_slice %3 {offsets = [0, 8], sizes = [6, 8], strides = [1, 1]} : vector<6x32xbf16> to vector<6x8xbf16>
    %30 = vector.extract_strided_slice %4 {offsets = [0, 8], sizes = [8, 8], strides = [1, 1]} : vector<8x32xbf16> to vector<8x8xbf16>
    %31 = vector.extract_strided_slice %5 {offsets = [0, 8], sizes = [8, 8], strides = [1, 1]} : vector<8x32xbf16> to vector<8x8xbf16>
    %32 = tpu.transpose %30, [1, 0] : vector<8x8xbf16> -> vector<8x8xbf16>
    %cst_12 = arith.constant dense<0.000000e+00> : vector<6x8xf32>
    %33 = tpu.matmul %29, %32, %cst_12 {dimension_numbers = #tpu.dot_dimension_numbers<[1], [0], [0], [1], [0, 0, 1, 1], [], []>} : vector<6x8xbf16>, vector<8x8xbf16>, vector<6x8xf32> -> vector<6x8xf32>
    %cst_13 = arith.constant 0.353553385 : f32
    %34 = vector.broadcast %cst_13 : f32 to vector<6x8xf32>
    %35 = arith.mulf %33, %34 : vector<6x8xf32>
    %36 = vector.broadcast %7 : vector<1x8xf32> to vector<6x8xf32>
    %37 = arith.addf %35, %36 : vector<6x8xf32>
    %cst_14 = arith.constant dense<0xFF800000> : vector<6xf32>
    %38 = vector.multi_reduction <maximumf>, %37, %cst_14 [1] : vector<6x8xf32> to vector<6xf32>
    %39 = vector.shape_cast %38 : vector<6xf32> to vector<6x1xf32>
    %40 = vector.broadcast %39 : vector<6x1xf32> to vector<6x8xf32>
    %41 = arith.subf %37, %40 : vector<6x8xf32>
    %42 = math.exp %41 : vector<6x8xf32>
    %cst_15 = arith.constant dense<0.000000e+00> : vector<6xf32>
    %43 = vector.multi_reduction <add>, %42, %cst_15 [1] : vector<6x8xf32> to vector<6xf32>
    %44 = vector.shape_cast %43 : vector<6xf32> to vector<6x1xf32>
    %45 = tpu.reciprocal %44 {approx = true} : vector<6x1xf32> -> vector<6x1xf32>
    %46 = vector.broadcast %45 : vector<6x1xf32> to vector<6x8xf32>
    %47 = arith.mulf %42, %46 : vector<6x8xf32>
    %48 = arith.truncf %47 : vector<6x8xf32> to vector<6x8xbf16>
    %cst_16 = arith.constant dense<0.000000e+00> : vector<6x8xf32>
    %49 = tpu.matmul %48, %31, %cst_16 {dimension_numbers = #tpu.dot_dimension_numbers<[1], [0], [0], [1], [0, 0, 1, 1], [], []>} : vector<6x8xbf16>, vector<8x8xbf16>, vector<6x8xf32> -> vector<6x8xf32>
    %50 = vector.extract_strided_slice %3 {offsets = [0, 16], sizes = [6, 8], strides = [1, 1]} : vector<6x32xbf16> to vector<6x8xbf16>
    %51 = vector.extract_strided_slice %4 {offsets = [0, 16], sizes = [8, 8], strides = [1, 1]} : vector<8x32xbf16> to vector<8x8xbf16>
    %52 = vector.extract_strided_slice %5 {offsets = [0, 16], sizes = [8, 8], strides = [1, 1]} : vector<8x32xbf16> to vector<8x8xbf16>
    %53 = tpu.transpose %51, [1, 0] : vector<8x8xbf16> -> vector<8x8xbf16>
    %cst_17 = arith.constant dense<0.000000e+00> : vector<6x8xf32>
    %54 = tpu.matmul %50, %53, %cst_17 {dimension_numbers = #tpu.dot_dimension_numbers<[1], [0], [0], [1], [0, 0, 1, 1], [], []>} : vector<6x8xbf16>, vector<8x8xbf16>, vector<6x8xf32> -> vector<6x8xf32>
    %cst_18 = arith.constant 0.353553385 : f32
    %55 = vector.broadcast %cst_18 : f32 to vector<6x8xf32>
    %56 = arith.mulf %54, %55 : vector<6x8xf32>
    %57 = vector.broadcast %7 : vector<1x8xf32> to vector<6x8xf32>
    %58 = arith.addf %56, %57 : vector<6x8xf32>
    %cst_19 = arith.constant dense<0xFF800000> : vector<6xf32>
    %59 = vector.multi_reduction <maximumf>, %58, %cst_19 [1] : vector<6x8xf32> to vector<6xf32>
    %60 = vector.shape_cast %59 : vector<6xf32> to vector<6x1xf32>
    %61 = vector.broadcast %60 : vector<6x1xf32> to vector<6x8xf32>
    %62 = arith.subf %58, %61 : vector<6x8xf32>
    %63 = math.exp %62 : vector<6x8xf32>
    %cst_20 = arith.constant dense<0.000000e+00> : vector<6xf32>
    %64 = vector.multi_reduction <add>, %63, %cst_20 [1] : vector<6x8xf32> to vector<6xf32>
    %65 = vector.shape_cast %64 : vector<6xf32> to vector<6x1xf32>
    %66 = tpu.reciprocal %65 {approx = true} : vector<6x1xf32> -> vector<6x1xf32>
    %67 = vector.broadcast %66 : vector<6x1xf32> to vector<6x8xf32>
    %68 = arith.mulf %63, %67 : vector<6x8xf32>
    %69 = arith.truncf %68 : vector<6x8xf32> to vector<6x8xbf16>
    %cst_21 = arith.constant dense<0.000000e+00> : vector<6x8xf32>
    %70 = tpu.matmul %69, %52, %cst_21 {dimension_numbers = #tpu.dot_dimension_numbers<[1], [0], [0], [1], [0, 0, 1, 1], [], []>} : vector<6x8xbf16>, vector<8x8xbf16>, vector<6x8xf32> -> vector<6x8xf32>
    %71 = vector.extract_strided_slice %3 {offsets = [0, 24], sizes = [6, 8], strides = [1, 1]} : vector<6x32xbf16> to vector<6x8xbf16>
    %72 = vector.extract_strided_slice %4 {offsets = [0, 24], sizes = [8, 8], strides = [1, 1]} : vector<8x32xbf16> to vector<8x8xbf16>
    %73 = vector.extract_strided_slice %5 {offsets = [0, 24], sizes = [8, 8], strides = [1, 1]} : vector<8x32xbf16> to vector<8x8xbf16>
    %74 = tpu.transpose %72, [1, 0] : vector<8x8xbf16> -> vector<8x8xbf16>
    %cst_22 = arith.constant dense<0.000000e+00> : vector<6x8xf32>
    %75 = tpu.matmul %71, %74, %cst_22 {dimension_numbers = #tpu.dot_dimension_numbers<[1], [0], [0], [1], [0, 0, 1, 1], [], []>} : vector<6x8xbf16>, vector<8x8xbf16>, vector<6x8xf32> -> vector<6x8xf32>
    %cst_23 = arith.constant 0.353553385 : f32
    %76 = vector.broadcast %cst_23 : f32 to vector<6x8xf32>
    %77 = arith.mulf %75, %76 : vector<6x8xf32>
    %78 = vector.broadcast %7 : vector<1x8xf32> to vector<6x8xf32>
    %79 = arith.addf %77, %78 : vector<6x8xf32>
    %cst_24 = arith.constant dense<0xFF800000> : vector<6xf32>
    %80 = vector.multi_reduction <maximumf>, %79, %cst_24 [1] : vector<6x8xf32> to vector<6xf32>
    %81 = vector.shape_cast %80 : vector<6xf32> to vector<6x1xf32>
    %82 = vector.broadcast %81 : vector<6x1xf32> to vector<6x8xf32>
    %83 = arith.subf %79, %82 : vector<6x8xf32>
    %84 = math.exp %83 : vector<6x8xf32>
    %cst_25 = arith.constant dense<0.000000e+00> : vector<6xf32>
    %85 = vector.multi_reduction <add>, %84, %cst_25 [1] : vector<6x8xf32> to vector<6xf32>
    %86 = vector.shape_cast %85 : vector<6xf32> to vector<6x1xf32>
    %87 = tpu.reciprocal %86 {approx = true} : vector<6x1xf32> -> vector<6x1xf32>
    %88 = vector.broadcast %87 : vector<6x1xf32> to vector<6x8xf32>
    %89 = arith.mulf %84, %88 : vector<6x8xf32>
    %90 = arith.truncf %89 : vector<6x8xf32> to vector<6x8xbf16>
    %cst_26 = arith.constant dense<0.000000e+00> : vector<6x8xf32>
    %91 = tpu.matmul %90, %73, %cst_26 {dimension_numbers = #tpu.dot_dimension_numbers<[1], [0], [0], [1], [0, 0, 1, 1], [], []>} : vector<6x8xbf16>, vector<8x8xbf16>, vector<6x8xf32> -> vector<6x8xf32>
    %92 = tpu.concatenate %28, %49, %70, %91 in 1 : vector<6x8xf32>, vector<6x8xf32>, vector<6x8xf32>, vector<6x8xf32> -> vector<6x32xf32>
    %93 = arith.truncf %92 : vector<6x32xf32> to vector<6x32xbf16>
    %c0_27 = arith.constant 0 : index
    %c0_28 = arith.constant 0 : index
    %c0_29 = arith.constant 0 : index
    %94 = vector.load %arg4[%c0_27, %c0_28, %c0_29] : memref<1x6x32xbf16, #tpu.memory_space<vmem>>, vector<1x6x32xbf16>
    %95 = vector.shape_cast %94 : vector<1x6x32xbf16> to vector<6x32xbf16>
    %96 = vector.shape_cast %93 : vector<6x32xbf16> to vector<1x6x32xbf16>
    tpu.vector_store %arg4[%c0_27, %c0_28, %c0_29], %96 {strides = array<i32>} : memref<1x6x32xbf16, #tpu.memory_space<vmem>>, vector<1x6x32xbf16>,
    return
  }
  func.func @transform_0(%arg0: i32) -> (i32, i32, i32) {
    %c0_i32 = arith.constant 0 : i32
    %c0_i32_0 = arith.constant 0 : i32
    %c0_i32_1 = arith.constant 0 : i32
    return %arg0, %c0_i32, %c0_i32_0 : i32, i32, i32
  }
  func.func @transform_1(%arg0: i32) -> (i32, i32, i32) {
    %c0_i32 = arith.constant 0 : i32
    %c0_i32_0 = arith.constant 0 : i32
    %c0_i32_1 = arith.constant 0 : i32
    return %arg0, %c0_i32, %c0_i32_0 : i32, i32, i32
  }
  func.func @transform_2(%arg0: i32) -> (i32, i32, i32) {
    %c0_i32 = arith.constant 0 : i32
    %c0_i32_0 = arith.constant 0 : i32
    %c0_i32_1 = arith.constant 0 : i32
    return %arg0, %c0_i32, %c0_i32_0 : i32, i32, i32
  }
  func.func @transform_3(%arg0: i32) -> (i32, i32, i32) {
    %c0_i32 = arith.constant 0 : i32
    %c0_i32_0 = arith.constant 0 : i32
    %c0_i32_1 = arith.constant 0 : i32
    return %arg0, %c0_i32, %c0_i32_0 : i32, i32, i32
  }
}

module attributes {stable_mosaic.version = 11 : i64} {
  func.func @_cross_mha_kernel(%arg0: i32, %arg1: memref<1x6x32xbf16, #tpu.memory_space<vmem>>, %arg2: memref<1x8x64xbf16, #tpu.memory_space<vmem>>, %arg3: memref<1x1x8xf32, #tpu.memory_space<vmem>>, %arg4: memref<1x6x32xbf16, #tpu.memory_space<vmem>>, %arg5: memref<1x6x8xf32, #tpu.memory_space<vmem>>) attributes {dimension_semantics = [#tpu.dimension_semantics<parallel>], iteration_bounds = array<i64: 2>, scalar_prefetch = 0 : i64, scratch_operands = 0 : i64, tpu.core_type = #tpu.core_type<tc>, window_params = [{transform_indices = @transform_0, window_bounds = array<i64: 1, 6, 32>}, {transform_indices = @transform_1, window_bounds = array<i64: 1, 8, 64>}, {transform_indices = @transform_2, window_bounds = array<i64: 1, 1, 8>}, {transform_indices = @transform_3, window_bounds = array<i64: 1, 6, 32>}, {transform_indices = @transform_4, window_bounds = array<i64: 1, 6, 8>}]} {
    %c0 = arith.constant 0 : index
    %c0_0 = arith.constant 0 : index
    %c0_1 = arith.constant 0 : index
    %0 = vector.load %arg2[%c0, %c0_0, %c0_1] : memref<1x8x64xbf16, #tpu.memory_space<vmem>>, vector<1x8x64xbf16>
    %1 = vector.shape_cast %0 : vector<1x8x64xbf16> to vector<8x64xbf16>
    %c0_2 = arith.constant 0 : index
    %c0_3 = arith.constant 0 : index
    %c0_4 = arith.constant 0 : index
    %2 = vector.load %arg1[%c0_2, %c0_3, %c0_4] : memref<1x6x32xbf16, #tpu.memory_space<vmem>>, vector<1x6x32xbf16>
    %3 = vector.shape_cast %2 : vector<1x6x32xbf16> to vector<6x32xbf16>
    %4 = vector.extract_strided_slice %1 {offsets = [0, 0], sizes = [8, 32], strides = [1, 1]} : vector<8x64xbf16> to vector<8x32xbf16>
    %5 = vector.extract_strided_slice %1 {offsets = [0, 32], sizes = [8, 32], strides = [1, 1]} : vector<8x64xbf16> to vector<8x32xbf16>
    %c0_5 = arith.constant 0 : index
    %c0_6 = arith.constant 0 : index
    %c0_7 = arith.constant 0 : index
    %6 = vector.load %arg3[%c0_5, %c0_6, %c0_7] : memref<1x1x8xf32, #tpu.memory_space<vmem>>, vector<1x1x8xf32>
    %7 = vector.shape_cast %6 : vector<1x1x8xf32> to vector<1x8xf32>
    %8 = vector.extract_strided_slice %3 {offsets = [0, 0], sizes = [6, 8], strides = [1, 1]} : vector<6x32xbf16> to vector<6x8xbf16>
    %9 = vector.extract_strided_slice %4 {offsets = [0, 0], sizes = [8, 8], strides = [1, 1]} : vector<8x32xbf16> to vector<8x8xbf16>
    %10 = vector.extract_strided_slice %5 {offsets = [0, 0], sizes = [8, 8], strides = [1, 1]} : vector<8x32xbf16> to vector<8x8xbf16>
    %11 = tpu.transpose %9, [1, 0] : vector<8x8xbf16> -> vector<8x8xbf16>
    %cst = arith.constant dense<0.000000e+00> : vector<6x8xf32>
    %12 = tpu.matmul %8, %11, %cst {dimension_numbers = #tpu.dot_dimension_numbers<[1], [0], [0], [1], [0, 0, 1, 1], [], []>} : vector<6x8xbf16>, vector<8x8xbf16>, vector<6x8xf32> -> vector<6x8xf32>
    %cst_8 = arith.constant 0.353553385 : f32
    %13 = vector.broadcast %cst_8 : f32 to vector<6x8xf32>
    %14 = arith.mulf %12, %13 : vector<6x8xf32>
    %15 = vector.broadcast %7 : vector<1x8xf32> to vector<6x8xf32>
    %16 = arith.addf %14, %15 : vector<6x8xf32>
    %cst_9 = arith.constant dense<0xFF800000> : vector<6xf32>
    %17 = vector.multi_reduction <maximumf>, %16, %cst_9 [1] : vector<6x8xf32> to vector<6xf32>
    %18 = vector.shape_cast %17 : vector<6xf32> to vector<6x1xf32>
    %19 = vector.broadcast %18 : vector<6x1xf32> to vector<6x8xf32>
    %20 = arith.subf %16, %19 : vector<6x8xf32>
    %21 = math.exp %20 : vector<6x8xf32>
    %cst_10 = arith.constant dense<0.000000e+00> : vector<6xf32>
    %22 = vector.multi_reduction <add>, %21, %cst_10 [1] : vector<6x8xf32> to vector<6xf32>
    %23 = vector.shape_cast %22 : vector<6xf32> to vector<6x1xf32>
    %24 = tpu.reciprocal %23 {approx = true} : vector<6x1xf32> -> vector<6x1xf32>
    %25 = vector.broadcast %24 : vector<6x1xf32> to vector<6x8xf32>
    %26 = arith.mulf %21, %25 : vector<6x8xf32>
    %27 = arith.truncf %26 : vector<6x8xf32> to vector<6x8xbf16>
    %cst_11 = arith.constant dense<0.000000e+00> : vector<6x8xf32>
    %28 = tpu.matmul %27, %10, %cst_11 {dimension_numbers = #tpu.dot_dimension_numbers<[1], [0], [0], [1], [0, 0, 1, 1], [], []>} : vector<6x8xbf16>, vector<8x8xbf16>, vector<6x8xf32> -> vector<6x8xf32>
    %29 = vector.extract_strided_slice %3 {offsets = [0, 8], sizes = [6, 8], strides = [1, 1]} : vector<6x32xbf16> to vector<6x8xbf16>
    %30 = vector.extract_strided_slice %4 {offsets = [0, 8], sizes = [8, 8], strides = [1, 1]} : vector<8x32xbf16> to vector<8x8xbf16>
    %31 = vector.extract_strided_slice %5 {offsets = [0, 8], sizes = [8, 8], strides = [1, 1]} : vector<8x32xbf16> to vector<8x8xbf16>
    %32 = tpu.transpose %30, [1, 0] : vector<8x8xbf16> -> vector<8x8xbf16>
    %cst_12 = arith.constant dense<0.000000e+00> : vector<6x8xf32>
    %33 = tpu.matmul %29, %32, %cst_12 {dimension_numbers = #tpu.dot_dimension_numbers<[1], [0], [0], [1], [0, 0, 1, 1], [], []>} : vector<6x8xbf16>, vector<8x8xbf16>, vector<6x8xf32> -> vector<6x8xf32>
    %cst_13 = arith.constant 0.353553385 : f32
    %34 = vector.broadcast %cst_13 : f32 to vector<6x8xf32>
    %35 = arith.mulf %33, %34 : vector<6x8xf32>
    %36 = vector.broadcast %7 : vector<1x8xf32> to vector<6x8xf32>
    %37 = arith.addf %35, %36 : vector<6x8xf32>
    %cst_14 = arith.constant dense<0xFF800000> : vector<6xf32>
    %38 = vector.multi_reduction <maximumf>, %37, %cst_14 [1] : vector<6x8xf32> to vector<6xf32>
    %39 = vector.shape_cast %38 : vector<6xf32> to vector<6x1xf32>
    %40 = vector.broadcast %39 : vector<6x1xf32> to vector<6x8xf32>
    %41 = arith.subf %37, %40 : vector<6x8xf32>
    %42 = math.exp %41 : vector<6x8xf32>
    %cst_15 = arith.constant dense<0.000000e+00> : vector<6xf32>
    %43 = vector.multi_reduction <add>, %42, %cst_15 [1] : vector<6x8xf32> to vector<6xf32>
    %44 = vector.shape_cast %43 : vector<6xf32> to vector<6x1xf32>
    %45 = tpu.reciprocal %44 {approx = true} : vector<6x1xf32> -> vector<6x1xf32>
    %46 = vector.broadcast %45 : vector<6x1xf32> to vector<6x8xf32>
    %47 = arith.mulf %42, %46 : vector<6x8xf32>
    %48 = arith.truncf %47 : vector<6x8xf32> to vector<6x8xbf16>
    %cst_16 = arith.constant dense<0.000000e+00> : vector<6x8xf32>
    %49 = tpu.matmul %48, %31, %cst_16 {dimension_numbers = #tpu.dot_dimension_numbers<[1], [0], [0], [1], [0, 0, 1, 1], [], []>} : vector<6x8xbf16>, vector<8x8xbf16>, vector<6x8xf32> -> vector<6x8xf32>
    %50 = arith.addf %26, %47 : vector<6x8xf32>
    %51 = vector.extract_strided_slice %3 {offsets = [0, 16], sizes = [6, 8], strides = [1, 1]} : vector<6x32xbf16> to vector<6x8xbf16>
    %52 = vector.extract_strided_slice %4 {offsets = [0, 16], sizes = [8, 8], strides = [1, 1]} : vector<8x32xbf16> to vector<8x8xbf16>
    %53 = vector.extract_strided_slice %5 {offsets = [0, 16], sizes = [8, 8], strides = [1, 1]} : vector<8x32xbf16> to vector<8x8xbf16>
    %54 = tpu.transpose %52, [1, 0] : vector<8x8xbf16> -> vector<8x8xbf16>
    %cst_17 = arith.constant dense<0.000000e+00> : vector<6x8xf32>
    %55 = tpu.matmul %51, %54, %cst_17 {dimension_numbers = #tpu.dot_dimension_numbers<[1], [0], [0], [1], [0, 0, 1, 1], [], []>} : vector<6x8xbf16>, vector<8x8xbf16>, vector<6x8xf32> -> vector<6x8xf32>
    %cst_18 = arith.constant 0.353553385 : f32
    %56 = vector.broadcast %cst_18 : f32 to vector<6x8xf32>
    %57 = arith.mulf %55, %56 : vector<6x8xf32>
    %58 = vector.broadcast %7 : vector<1x8xf32> to vector<6x8xf32>
    %59 = arith.addf %57, %58 : vector<6x8xf32>
    %cst_19 = arith.constant dense<0xFF800000> : vector<6xf32>
    %60 = vector.multi_reduction <maximumf>, %59, %cst_19 [1] : vector<6x8xf32> to vector<6xf32>
    %61 = vector.shape_cast %60 : vector<6xf32> to vector<6x1xf32>
    %62 = vector.broadcast %61 : vector<6x1xf32> to vector<6x8xf32>
    %63 = arith.subf %59, %62 : vector<6x8xf32>
    %64 = math.exp %63 : vector<6x8xf32>
    %cst_20 = arith.constant dense<0.000000e+00> : vector<6xf32>
    %65 = vector.multi_reduction <add>, %64, %cst_20 [1] : vector<6x8xf32> to vector<6xf32>
    %66 = vector.shape_cast %65 : vector<6xf32> to vector<6x1xf32>
    %67 = tpu.reciprocal %66 {approx = true} : vector<6x1xf32> -> vector<6x1xf32>
    %68 = vector.broadcast %67 : vector<6x1xf32> to vector<6x8xf32>
    %69 = arith.mulf %64, %68 : vector<6x8xf32>
    %70 = arith.truncf %69 : vector<6x8xf32> to vector<6x8xbf16>
    %cst_21 = arith.constant dense<0.000000e+00> : vector<6x8xf32>
    %71 = tpu.matmul %70, %53, %cst_21 {dimension_numbers = #tpu.dot_dimension_numbers<[1], [0], [0], [1], [0, 0, 1, 1], [], []>} : vector<6x8xbf16>, vector<8x8xbf16>, vector<6x8xf32> -> vector<6x8xf32>
    %72 = arith.addf %50, %69 : vector<6x8xf32>
    %73 = vector.extract_strided_slice %3 {offsets = [0, 24], sizes = [6, 8], strides = [1, 1]} : vector<6x32xbf16> to vector<6x8xbf16>
    %74 = vector.extract_strided_slice %4 {offsets = [0, 24], sizes = [8, 8], strides = [1, 1]} : vector<8x32xbf16> to vector<8x8xbf16>
    %75 = vector.extract_strided_slice %5 {offsets = [0, 24], sizes = [8, 8], strides = [1, 1]} : vector<8x32xbf16> to vector<8x8xbf16>
    %76 = tpu.transpose %74, [1, 0] : vector<8x8xbf16> -> vector<8x8xbf16>
    %cst_22 = arith.constant dense<0.000000e+00> : vector<6x8xf32>
    %77 = tpu.matmul %73, %76, %cst_22 {dimension_numbers = #tpu.dot_dimension_numbers<[1], [0], [0], [1], [0, 0, 1, 1], [], []>} : vector<6x8xbf16>, vector<8x8xbf16>, vector<6x8xf32> -> vector<6x8xf32>
    %cst_23 = arith.constant 0.353553385 : f32
    %78 = vector.broadcast %cst_23 : f32 to vector<6x8xf32>
    %79 = arith.mulf %77, %78 : vector<6x8xf32>
    %80 = vector.broadcast %7 : vector<1x8xf32> to vector<6x8xf32>
    %81 = arith.addf %79, %80 : vector<6x8xf32>
    %cst_24 = arith.constant dense<0xFF800000> : vector<6xf32>
    %82 = vector.multi_reduction <maximumf>, %81, %cst_24 [1] : vector<6x8xf32> to vector<6xf32>
    %83 = vector.shape_cast %82 : vector<6xf32> to vector<6x1xf32>
    %84 = vector.broadcast %83 : vector<6x1xf32> to vector<6x8xf32>
    %85 = arith.subf %81, %84 : vector<6x8xf32>
    %86 = math.exp %85 : vector<6x8xf32>
    %cst_25 = arith.constant dense<0.000000e+00> : vector<6xf32>
    %87 = vector.multi_reduction <add>, %86, %cst_25 [1] : vector<6x8xf32> to vector<6xf32>
    %88 = vector.shape_cast %87 : vector<6xf32> to vector<6x1xf32>
    %89 = tpu.reciprocal %88 {approx = true} : vector<6x1xf32> -> vector<6x1xf32>
    %90 = vector.broadcast %89 : vector<6x1xf32> to vector<6x8xf32>
    %91 = arith.mulf %86, %90 : vector<6x8xf32>
    %92 = arith.truncf %91 : vector<6x8xf32> to vector<6x8xbf16>
    %cst_26 = arith.constant dense<0.000000e+00> : vector<6x8xf32>
    %93 = tpu.matmul %92, %75, %cst_26 {dimension_numbers = #tpu.dot_dimension_numbers<[1], [0], [0], [1], [0, 0, 1, 1], [], []>} : vector<6x8xbf16>, vector<8x8xbf16>, vector<6x8xf32> -> vector<6x8xf32>
    %94 = arith.addf %72, %91 : vector<6x8xf32>
    %95 = tpu.concatenate %28, %49, %71, %93 in 1 : vector<6x8xf32>, vector<6x8xf32>, vector<6x8xf32>, vector<6x8xf32> -> vector<6x32xf32>
    %96 = arith.truncf %95 : vector<6x32xf32> to vector<6x32xbf16>
    %c0_27 = arith.constant 0 : index
    %c0_28 = arith.constant 0 : index
    %c0_29 = arith.constant 0 : index
    %97 = vector.load %arg4[%c0_27, %c0_28, %c0_29] : memref<1x6x32xbf16, #tpu.memory_space<vmem>>, vector<1x6x32xbf16>
    %98 = vector.shape_cast %97 : vector<1x6x32xbf16> to vector<6x32xbf16>
    %99 = vector.shape_cast %96 : vector<6x32xbf16> to vector<1x6x32xbf16>
    tpu.vector_store %arg4[%c0_27, %c0_28, %c0_29], %99 {strides = array<i32>} : memref<1x6x32xbf16, #tpu.memory_space<vmem>>, vector<1x6x32xbf16>,
    %cst_30 = arith.constant 2.500000e-01 : f32
    %100 = vector.broadcast %cst_30 : f32 to vector<6x8xf32>
    %101 = arith.mulf %94, %100 : vector<6x8xf32>
    %c0_31 = arith.constant 0 : index
    %c0_32 = arith.constant 0 : index
    %c0_33 = arith.constant 0 : index
    %102 = vector.load %arg5[%c0_31, %c0_32, %c0_33] : memref<1x6x8xf32, #tpu.memory_space<vmem>>, vector<1x6x8xf32>
    %103 = vector.shape_cast %102 : vector<1x6x8xf32> to vector<6x8xf32>
    %104 = vector.shape_cast %101 : vector<6x8xf32> to vector<1x6x8xf32>
    tpu.vector_store %arg5[%c0_31, %c0_32, %c0_33], %104 {strides = array<i32>} : memref<1x6x8xf32, #tpu.memory_space<vmem>>, vector<1x6x8xf32>,
    return
  }
  func.func @transform_0(%arg0: i32) -> (i32, i32, i32) {
    %c0_i32 = arith.constant 0 : i32
    %c0_i32_0 = arith.constant 0 : i32
    %c0_i32_1 = arith.constant 0 : i32
    return %arg0, %c0_i32, %c0_i32_0 : i32, i32, i32
  }
  func.func @transform_1(%arg0: i32) -> (i32, i32, i32) {
    %c0_i32 = arith.constant 0 : i32
    %c0_i32_0 = arith.constant 0 : i32
    %c0_i32_1 = arith.constant 0 : i32
    return %arg0, %c0_i32, %c0_i32_0 : i32, i32, i32
  }
  func.func @transform_2(%arg0: i32) -> (i32, i32, i32) {
    %c0_i32 = arith.constant 0 : i32
    %c0_i32_0 = arith.constant 0 : i32
    %c0_i32_1 = arith.constant 0 : i32
    return %arg0, %c0_i32, %c0_i32_0 : i32, i32, i32
  }
  func.func @transform_3(%arg0: i32) -> (i32, i32, i32) {
    %c0_i32 = arith.constant 0 : i32
    %c0_i32_0 = arith.constant 0 : i32
    %c0_i32_1 = arith.constant 0 : i32
    return %arg0, %c0_i32, %c0_i32_0 : i32, i32, i32
  }
  func.func @transform_4(%arg0: i32) -> (i32, i32, i32) {
    %c0_i32 = arith.constant 0 : i32
    %c0_i32_0 = arith.constant 0 : i32
    %c0_i32_1 = arith.constant 0 : i32
    return %arg0, %c0_i32, %c0_i32_0 : i32, i32, i32
  }
}

module attributes {stable_mosaic.version = 11 : i64} {
  func.func @_pgen_kernel(%arg0: i32, %arg1: memref<1x6x8xf32, #tpu.memory_space<vmem>>, %arg2: memref<1x8x32xf32, #tpu.memory_space<vmem>>, %arg3: memref<1x6x32xf32, #tpu.memory_space<vmem>>, %arg4: memref<1x6x32xf32, #tpu.memory_space<vmem>>, %arg5: memref<96x1xf32, #tpu.memory_space<vmem>>, %arg6: memref<1x1xf32, #tpu.memory_space<vmem>>, %arg7: memref<1x6x1xf32, #tpu.memory_space<vmem>>) attributes {dimension_semantics = [#tpu.dimension_semantics<parallel>], iteration_bounds = array<i64: 2>, scalar_prefetch = 0 : i64, scratch_operands = 0 : i64, tpu.core_type = #tpu.core_type<tc>, window_params = [{transform_indices = @transform_0, window_bounds = array<i64: 1, 6, 8>}, {transform_indices = @transform_1, window_bounds = array<i64: 1, 8, 32>}, {transform_indices = @transform_2, window_bounds = array<i64: 1, 6, 32>}, {transform_indices = @transform_3, window_bounds = array<i64: 1, 6, 32>}, {pipeline_mode = #tpu.pipeline_mode<synchronous>, transform_indices = @transform_4, window_bounds = array<i64: 96, 1>}, {pipeline_mode = #tpu.pipeline_mode<synchronous>, transform_indices = @transform_5, window_bounds = array<i64: 1, 1>}, {transform_indices = @transform_6, window_bounds = array<i64: 1, 6, 1>}]} {
    %c0 = arith.constant 0 : index
    %c0_0 = arith.constant 0 : index
    %c0_1 = arith.constant 0 : index
    %0 = vector.load %arg1[%c0, %c0_0, %c0_1] : memref<1x6x8xf32, #tpu.memory_space<vmem>>, vector<1x6x8xf32>
    %1 = vector.shape_cast %0 : vector<1x6x8xf32> to vector<6x8xf32>
    %c0_2 = arith.constant 0 : index
    %c0_3 = arith.constant 0 : index
    %c0_4 = arith.constant 0 : index
    %2 = vector.load %arg2[%c0_2, %c0_3, %c0_4] : memref<1x8x32xf32, #tpu.memory_space<vmem>>, vector<1x8x32xf32>
    %3 = vector.shape_cast %2 : vector<1x8x32xf32> to vector<8x32xf32>
    %cst = arith.constant dense<0.000000e+00> : vector<6x32xf32>
    %4 = tpu.matmul %1, %3, %cst {dimension_numbers = #tpu.dot_dimension_numbers<[1], [0], [0], [1], [0, 0, 1, 1], [], []>} : vector<6x8xf32>, vector<8x32xf32>, vector<6x32xf32> -> vector<6x32xf32>
    %c0_5 = arith.constant 0 : index
    %c0_6 = arith.constant 0 : index
    %5 = vector.load %arg5[%c0_5, %c0_6] : memref<96x1xf32, #tpu.memory_space<vmem>>, vector<96x1xf32>
    %c0_7 = arith.constant 0 : index
    %c0_8 = arith.constant 0 : index
    %c0_9 = arith.constant 0 : index
    %6 = vector.load %arg3[%c0_7, %c0_8, %c0_9] : memref<1x6x32xf32, #tpu.memory_space<vmem>>, vector<1x6x32xf32>
    %7 = vector.shape_cast %6 : vector<1x6x32xf32> to vector<6x32xf32>
    %8 = vector.extract_strided_slice %5 {offsets = [0, 0], sizes = [32, 1], strides = [1, 1]} : vector<96x1xf32> to vector<32x1xf32>
    %cst_10 = arith.constant dense<0.000000e+00> : vector<6x1xf32>
    %9 = tpu.matmul %7, %8, %cst_10 {dimension_numbers = #tpu.dot_dimension_numbers<[1], [0], [0], [1], [0, 0, 1, 1], [], []>} : vector<6x32xf32>, vector<32x1xf32>, vector<6x1xf32> -> vector<6x1xf32>
    %10 = vector.extract_strided_slice %5 {offsets = [32, 0], sizes = [32, 1], strides = [1, 1]} : vector<96x1xf32> to vector<32x1xf32>
    %cst_11 = arith.constant dense<0.000000e+00> : vector<6x1xf32>
    %11 = tpu.matmul %4, %10, %cst_11 {dimension_numbers = #tpu.dot_dimension_numbers<[1], [0], [0], [1], [0, 0, 1, 1], [], []>} : vector<6x32xf32>, vector<32x1xf32>, vector<6x1xf32> -> vector<6x1xf32>
    %12 = arith.addf %9, %11 : vector<6x1xf32>
    %c0_12 = arith.constant 0 : index
    %c0_13 = arith.constant 0 : index
    %c0_14 = arith.constant 0 : index
    %13 = vector.load %arg4[%c0_12, %c0_13, %c0_14] : memref<1x6x32xf32, #tpu.memory_space<vmem>>, vector<1x6x32xf32>
    %14 = vector.shape_cast %13 : vector<1x6x32xf32> to vector<6x32xf32>
    %15 = vector.extract_strided_slice %5 {offsets = [64, 0], sizes = [32, 1], strides = [1, 1]} : vector<96x1xf32> to vector<32x1xf32>
    %cst_15 = arith.constant dense<0.000000e+00> : vector<6x1xf32>
    %16 = tpu.matmul %14, %15, %cst_15 {dimension_numbers = #tpu.dot_dimension_numbers<[1], [0], [0], [1], [0, 0, 1, 1], [], []>} : vector<6x32xf32>, vector<32x1xf32>, vector<6x1xf32> -> vector<6x1xf32>
    %17 = arith.addf %12, %16 : vector<6x1xf32>
    %c0_16 = arith.constant 0 : index
    %c0_17 = arith.constant 0 : index
    %18 = vector.load %arg6[%c0_16, %c0_17] : memref<1x1xf32, #tpu.memory_space<vmem>>, vector<1x1xf32>
    %19 = vector.broadcast %18 : vector<1x1xf32> to vector<6x1xf32>
    %20 = arith.addf %17, %19 : vector<6x1xf32>
    %cst_18 = arith.constant 0.000000e+00 : f32
    %21 = vector.broadcast %cst_18 : f32 to vector<6x1xf32>
    %22 = arith.subf %21, %20 : vector<6x1xf32>
    %23 = math.exp %22 : vector<6x1xf32>
    %cst_19 = arith.constant 1.000000e+00 : f32
    %24 = vector.broadcast %cst_19 : f32 to vector<6x1xf32>
    %25 = arith.addf %24, %23 : vector<6x1xf32>
    %cst_20 = arith.constant 1.000000e+00 : f32
    %26 = vector.broadcast %cst_20 : f32 to vector<6x1xf32>
    %27 = arith.divf %26, %25 : vector<6x1xf32>
    %c0_21 = arith.constant 0 : index
    %c0_22 = arith.constant 0 : index
    %c0_23 = arith.constant 0 : index
    %28 = vector.load %arg7[%c0_21, %c0_22, %c0_23] : memref<1x6x1xf32, #tpu.memory_space<vmem>>, vector<1x6x1xf32>
    %29 = vector.shape_cast %28 : vector<1x6x1xf32> to vector<6x1xf32>
    %30 = vector.shape_cast %27 : vector<6x1xf32> to vector<1x6x1xf32>
    tpu.vector_store %arg7[%c0_21, %c0_22, %c0_23], %30 {strides = array<i32>} : memref<1x6x1xf32, #tpu.memory_space<vmem>>, vector<1x6x1xf32>,
    return
  }
  func.func @transform_0(%arg0: i32) -> (i32, i32, i32) {
    %c0_i32 = arith.constant 0 : i32
    %c0_i32_0 = arith.constant 0 : i32
    %c0_i32_1 = arith.constant 0 : i32
    return %arg0, %c0_i32, %c0_i32_0 : i32, i32, i32
  }
  func.func @transform_1(%arg0: i32) -> (i32, i32, i32) {
    %c0_i32 = arith.constant 0 : i32
    %c0_i32_0 = arith.constant 0 : i32
    %c0_i32_1 = arith.constant 0 : i32
    return %arg0, %c0_i32, %c0_i32_0 : i32, i32, i32
  }
  func.func @transform_2(%arg0: i32) -> (i32, i32, i32) {
    %c0_i32 = arith.constant 0 : i32
    %c0_i32_0 = arith.constant 0 : i32
    %c0_i32_1 = arith.constant 0 : i32
    return %arg0, %c0_i32, %c0_i32_0 : i32, i32, i32
  }
  func.func @transform_3(%arg0: i32) -> (i32, i32, i32) {
    %c0_i32 = arith.constant 0 : i32
    %c0_i32_0 = arith.constant 0 : i32
    %c0_i32_1 = arith.constant 0 : i32
    return %arg0, %c0_i32, %c0_i32_0 : i32, i32, i32
  }
  func.func @transform_4(%arg0: i32) -> (i32, i32) {
    %c0_i32 = arith.constant 0 : i32
    %c0_i32_0 = arith.constant 0 : i32
    %c0_i32_1 = arith.constant 0 : i32
    return %c0_i32, %c0_i32_0 : i32, i32
  }
  func.func @transform_5(%arg0: i32) -> (i32, i32) {
    %c0_i32 = arith.constant 0 : i32
    %c0_i32_0 = arith.constant 0 : i32
    %c0_i32_1 = arith.constant 0 : i32
    return %c0_i32, %c0_i32_0 : i32, i32
  }
  func.func @transform_6(%arg0: i32) -> (i32, i32, i32) {
    %c0_i32 = arith.constant 0 : i32
    %c0_i32_0 = arith.constant 0 : i32
    %c0_i32_1 = arith.constant 0 : i32
    return %arg0, %c0_i32, %c0_i32_0 : i32, i32, i32
  }
}

module attributes {stable_mosaic.version = 11 : i64} {
  func.func @_output_dist_kernel(%arg0: i32, %arg1: i32, %arg2: memref<1x6x128xf32, #tpu.memory_space<vmem>>, %arg3: memref<1x6x1xf32, #tpu.memory_space<vmem>>, %arg4: memref<1x6x1xf32, #tpu.memory_space<vmem>>, %arg5: memref<1x6x8xf32, #tpu.memory_space<vmem>>, %arg6: memref<1x8x1xi32, #tpu.memory_space<vmem>>, %arg7: memref<1x6x128xf32, #tpu.memory_space<vmem>>) attributes {dimension_semantics = [#tpu.dimension_semantics<parallel>, #tpu.dimension_semantics<parallel>], iteration_bounds = array<i64: 2, 1>, scalar_prefetch = 0 : i64, scratch_operands = 0 : i64, tpu.core_type = #tpu.core_type<tc>, window_params = [{transform_indices = @transform_0, window_bounds = array<i64: 1, 6, 128>}, {transform_indices = @transform_1, window_bounds = array<i64: 1, 6, 1>}, {transform_indices = @transform_2, window_bounds = array<i64: 1, 6, 1>}, {transform_indices = @transform_3, window_bounds = array<i64: 1, 6, 8>}, {transform_indices = @transform_4, window_bounds = array<i64: 1, 8, 1>}, {transform_indices = @transform_5, window_bounds = array<i64: 1, 6, 128>}]} {
    %c128_i32 = arith.constant 128 : i32
    %0 = arith.muli %arg1, %c128_i32 : i32
    %c0 = arith.constant 0 : index
    %c0_0 = arith.constant 0 : index
    %c0_1 = arith.constant 0 : index
    %1 = vector.load %arg2[%c0, %c0_0, %c0_1] : memref<1x6x128xf32, #tpu.memory_space<vmem>>, vector<1x6x128xf32>
    %2 = vector.shape_cast %1 : vector<1x6x128xf32> to vector<6x128xf32>
    %c0_2 = arith.constant 0 : index
    %c0_3 = arith.constant 0 : index
    %c0_4 = arith.constant 0 : index
    %3 = vector.load %arg4[%c0_2, %c0_3, %c0_4] : memref<1x6x1xf32, #tpu.memory_space<vmem>>, vector<1x6x1xf32>
    %4 = vector.shape_cast %3 : vector<1x6x1xf32> to vector<6x1xf32>
    %5 = tpu.iota {dimensions = array<i32: 1>} : vector<6x128xi32>
    %6 = vector.broadcast %0 : i32 to vector<6x128xi32>
    %7 = arith.addi %5, %6 : vector<6x128xi32>
    %c50_i32 = arith.constant 50 : i32
    %8 = vector.broadcast %c50_i32 : i32 to vector<6x128xi32>
    %9 = arith.cmpi slt, %7, %8 : vector<6x128xi32>
    %c0_5 = arith.constant 0 : index
    %c0_6 = arith.constant 0 : index
    %c0_7 = arith.constant 0 : index
    %10 = vector.load %arg3[%c0_5, %c0_6, %c0_7] : memref<1x6x1xf32, #tpu.memory_space<vmem>>, vector<1x6x1xf32>
    %11 = vector.shape_cast %10 : vector<1x6x1xf32> to vector<6x1xf32>
    %12 = vector.broadcast %11 : vector<6x1xf32> to vector<6x128xf32>
    %13 = arith.subf %2, %12 : vector<6x128xf32>
    %14 = math.exp %13 : vector<6x128xf32>
    %15 = vector.broadcast %4 : vector<6x1xf32> to vector<6x128xf32>
    %16 = arith.mulf %14, %15 : vector<6x128xf32>
    %cst = arith.constant 0.000000e+00 : f32
    %17 = vector.broadcast %cst : f32 to vector<6x128xf32>
    %18 = arith.select %9, %16, %17 : vector<6x128xi1>, vector<6x128xf32>
    %19 = tpu.iota {dimensions = array<i32: 1>} : vector<8x128xi32>
    %20 = vector.broadcast %0 : i32 to vector<8x128xi32>
    %21 = arith.addi %19, %20 : vector<8x128xi32>
    %c0_8 = arith.constant 0 : index
    %c0_9 = arith.constant 0 : index
    %c0_10 = arith.constant 0 : index
    %22 = vector.load %arg6[%c0_8, %c0_9, %c0_10] : memref<1x8x1xi32, #tpu.memory_space<vmem>>, vector<1x8x1xi32>
    %23 = vector.shape_cast %22 : vector<1x8x1xi32> to vector<8x1xi32>
    %24 = vector.broadcast %23 : vector<8x1xi32> to vector<8x128xi32>
    %25 = arith.cmpi eq, %24, %21 : vector<8x128xi32>
    %26 = arith.extui %25 : vector<8x128xi1> to vector<8x128xi32>
    %27 = arith.sitofp %26 : vector<8x128xi32> to vector<8x128xf32>
    %c0_11 = arith.constant 0 : index
    %c0_12 = arith.constant 0 : index
    %c0_13 = arith.constant 0 : index
    %28 = vector.load %arg5[%c0_11, %c0_12, %c0_13] : memref<1x6x8xf32, #tpu.memory_space<vmem>>, vector<1x6x8xf32>
    %29 = vector.shape_cast %28 : vector<1x6x8xf32> to vector<6x8xf32>
    %cst_14 = arith.constant 1.000000e+00 : f32
    %30 = vector.broadcast %cst_14 : f32 to vector<6x1xf32>
    %31 = arith.subf %30, %4 : vector<6x1xf32>
    %32 = vector.broadcast %31 : vector<6x1xf32> to vector<6x8xf32>
    %33 = arith.mulf %29, %32 : vector<6x8xf32>
    %cst_15 = arith.constant dense<0.000000e+00> : vector<6x128xf32>
    %34 = tpu.matmul %33, %27, %cst_15 {dimension_numbers = #tpu.dot_dimension_numbers<[1], [0], [0], [1], [0, 0, 1, 1], [], []>} : vector<6x8xf32>, vector<8x128xf32>, vector<6x128xf32> -> vector<6x128xf32>
    %35 = arith.addf %18, %34 : vector<6x128xf32>
    %c0_16 = arith.constant 0 : index
    %c0_17 = arith.constant 0 : index
    %c0_18 = arith.constant 0 : index
    %36 = vector.load %arg7[%c0_16, %c0_17, %c0_18] : memref<1x6x128xf32, #tpu.memory_space<vmem>>, vector<1x6x128xf32>
    %37 = vector.shape_cast %36 : vector<1x6x128xf32> to vector<6x128xf32>
    %38 = vector.shape_cast %35 : vector<6x128xf32> to vector<1x6x128xf32>
    tpu.vector_store %arg7[%c0_16, %c0_17, %c0_18], %38 {strides = array<i32>} : memref<1x6x128xf32, #tpu.memory_space<vmem>>, vector<1x6x128xf32>,
    return
  }
  func.func @transform_0(%arg0: i32, %arg1: i32) -> (i32, i32, i32) {
    %c0_i32 = arith.constant 0 : i32
    %c0_i32_0 = arith.constant 0 : i32
    return %arg0, %c0_i32, %arg1 : i32, i32, i32
  }
  func.func @transform_1(%arg0: i32, %arg1: i32) -> (i32, i32, i32) {
    %c0_i32 = arith.constant 0 : i32
    %c0_i32_0 = arith.constant 0 : i32
    %c0_i32_1 = arith.constant 0 : i32
    return %arg0, %c0_i32, %c0_i32_0 : i32, i32, i32
  }
  func.func @transform_2(%arg0: i32, %arg1: i32) -> (i32, i32, i32) {
    %c0_i32 = arith.constant 0 : i32
    %c0_i32_0 = arith.constant 0 : i32
    %c0_i32_1 = arith.constant 0 : i32
    return %arg0, %c0_i32, %c0_i32_0 : i32, i32, i32
  }
  func.func @transform_3(%arg0: i32, %arg1: i32) -> (i32, i32, i32) {
    %c0_i32 = arith.constant 0 : i32
    %c0_i32_0 = arith.constant 0 : i32
    %c0_i32_1 = arith.constant 0 : i32
    return %arg0, %c0_i32, %c0_i32_0 : i32, i32, i32
  }
  func.func @transform_4(%arg0: i32, %arg1: i32) -> (i32, i32, i32) {
    %c0_i32 = arith.constant 0 : i32
    %c0_i32_0 = arith.constant 0 : i32
    %c0_i32_1 = arith.constant 0 : i32
    return %arg0, %c0_i32, %c0_i32_0 : i32, i32, i32
  }
  func.func @transform_5(%arg0: i32, %arg1: i32) -> (i32, i32, i32) {
    %c0_i32 = arith.constant 0 : i32
    %c0_i32_0 = arith.constant 0 : i32
    return %arg0, %c0_i32, %arg1 : i32, i32, i32
  }
}

</mosaic_0001>

<llo_original>
// kernel: forward.32
$region0: #{forward.32}
  #allocation0 [shape = 'u32[]', space=smem, size = 0x4, offset = 0x4, fixed_abs, tag = 'smem constant byte address 0x4 - core index']
  #allocation1 [shape = 'u32[72,128]{1,0:T(1,128)}', space=vmem, size = 0x9000, scoped, tag = 'internal scratch']
  %s0 = inlined_call_operand.vmem [shape: bf16[2,8,96], index: 0, kind: input, shape index: {}]
  %s1 = inlined_call_operand.vmem [shape: f32[2,1,8], index: 1, kind: input, shape index: {}]
  %s2 = inlined_call_operand.vmem [shape: bf16[2,8,32], index: 2, kind: output, shape index: {}]
  %s3 = sld [smem:[#allocation0]]
  $region41: #{forward.32} parent=0
    _
  %s5 = ssub.s32 1, %s3
  %s6 = scalar_select 0, %s5, %s3
  loop: start=0, step=1, limit=4
  $region2: #{forward.32} parent=0 // loop_pre_header
    _
  $region3: #{forward.32} parent=0 // loop_header
    %s8 = sphi 0, %s12
    %p9 = scmp.ge.s32.totalorder %s8, 4
    %s18 = sphi 0, %s20
    %s21 = sphi 0, %s18
    %s22 = sphi 0, %s21
    %s38 = sphi 0, %s22
    %s44 = sphi 0, %s46
    %s47 = sphi 0, %s44
    %s48 = sphi 0, %s47
    %s64 = sphi 0, %s48
    %s70 = sphi 0, %s72
    %s73 = sphi 0, %s70
    %s74 = sphi 0, %s73
    %s90 = sphi 0, %s74
  $region4: #{forward.32} parent=0 // loop_header_branch
    %11 = sbr.rel (%p9) target = $region8
  $region5: #{forward.32} parent=0 // loop_body
    %s13 = ssub.s32 %s8, 1
    %s14 = ssub.s32 %s8, 2
    %s15 = sadd.s32 %s8, 1
    %s16 = ssub.s32 %s8, %s15
    %p17 = scmp.eq.s32.totalorder %s16, 0
    %s19 = sadd.s32 %s18, 1
    %s20 = scalar_select %p17, %s18, %s19
    %p23 = pneg %p17
    %p24 = scmp.eq.s32.totalorder %s8, 1
    %p25 = por %p23, %p24
    %p26 = scmp.ne.s32.totalorder %s18, %s21
    %p27 = scmp.eq.s32.totalorder %s8, 0
    %p28 = por %p26, %p27
    %p29 = scmp.ne.s32.totalorder %s18, %s21
    %p30 = scmp.eq.s32.totalorder %s13, 1
    %p31 = por %p29, %p30
    %p32 = scmp.ne.s32.totalorder %s21, %s22
    %p33 = scmp.eq.s32.totalorder %s13, 0
    %p34 = por %p32, %p33
    %p35 = scmp.ne.s32.totalorder %s21, %s22
    %p36 = scmp.eq.s32.totalorder %s14, 1
    %p37 = por %p35, %p36
    %p39 = scmp.ne.s32.totalorder %s22, %s38
    %p40 = scmp.eq.s32.totalorder %s14, 0
    %p41 = por %p39, %p40
    %s42 = ssub.s32 %s8, %s15
    %p43 = scmp.eq.s32.totalorder %s42, 0
    %s45 = sadd.s32 %s44, 1
    %s46 = scalar_select %p43, %s44, %s45
    %p49 = pneg %p43
    %p50 = scmp.eq.s32.totalorder %s8, 1
    %p51 = por %p49, %p50
    %p52 = scmp.ne.s32.totalorder %s44, %s47
    %p53 = scmp.eq.s32.totalorder %s8, 0
    %p54 = por %p52, %p53
    %p55 = scmp.ne.s32.totalorder %s44, %s47
    %p56 = scmp.eq.s32.totalorder %s13, 1
    %p57 = por %p55, %p56
    %p58 = scmp.ne.s32.totalorder %s47, %s48
    %p59 = scmp.eq.s32.totalorder %s13, 0
    %p60 = por %p58, %p59
    %p61 = scmp.ne.s32.totalorder %s47, %s48
    %p62 = scmp.eq.s32.totalorder %s14, 1
    %p63 = por %p61, %p62
    %p65 = scmp.ne.s32.totalorder %s48, %s64
    %p66 = scmp.eq.s32.totalorder %s14, 0
    %p67 = por %p65, %p66
    %s68 = ssub.s32 %s8, %s15
    %p69 = scmp.eq.s32.totalorder %s68, 0
    %s71 = sadd.s32 %s70, 1
    %s72 = scalar_select %p69, %s70, %s71
    %p75 = pneg %p69
    %p76 = scmp.eq.s32.totalorder %s8, 1
    %p77 = por %p75, %p76
    %p78 = scmp.ne.s32.totalorder %s70, %s73
    %p79 = scmp.eq.s32.totalorder %s8, 0
    %p80 = por %p78, %p79
    %p81 = scmp.ne.s32.totalorder %s70, %s73
    %p82 = scmp.eq.s32.totalorder %s13, 1
    %p83 = por %p81, %p82
    %p84 = scmp.ne.s32.totalorder %s73, %s74
    %p85 = scmp.eq.s32.totalorder %s13, 0
    %p86 = por %p84, %p85
    %p87 = scmp.ne.s32.totalorder %s73, %s74
    %p88 = scmp.eq.s32.totalorder %s14, 1
    %p89 = por %p87, %p88
    %p91 = scmp.ne.s32.totalorder %s74, %s90
    %p92 = scmp.eq.s32.totalorder %s14, 0
    %p93 = por %p91, %p92
    %p94 = scmp.le.s32.totalorder 1, %s8
    %p95 = scmp.lt.s32.totalorder %s8, 3
    %p96 = pnand %p94, %p95
    %p97 = pneg %p96
    // Predicated region
    $region9: #{forward.32} parent=5 // pred_check
      _
    $region10: #{forward.32} parent=5 // pred_check_branch
      %99 = sbr.rel (%p96) target = $region12
    $region11: #{forward.32} parent=5 // pred_region
      %s100 = ssub.s32 %s8, 1
    $region12: #{forward.32} parent=5 // pred_fallthru
      _
    %p101 = scmp.lt.s32.totalorder %s8, 2
    // Predicated region
    $region13: #{forward.32} parent=5 // pred_check
      %p102 = pneg %p101
    $region14: #{forward.32} parent=5 // pred_check_branch
      %104 = sbr.rel (%p102) target = $region16
    $region15: #{forward.32} parent=5 // pred_region
      // Predicated region
      $region17: #{forward.32} parent=15 // pred_check
        %p105 = pneg %p28
      $region18: #{forward.32} parent=15 // pred_check_branch
        %107 = sbr.rel (%p105) target = $region20
      $region19: #{forward.32} parent=15 // pred_region
        %p108 = scmp.lt.s32.totalorder %s8, 1
        %s109 = scalar_select %p108, %s8, 1
        %s110 = smul.addr %s109, 4
        %s111 = scalar_lea.vmem %s0, %s110
      $region20: #{forward.32} parent=15 // pred_fallthru
        _
      // Predicated region
      $region21: #{forward.32} parent=15 // pred_check
        %p112 = pneg %p54
      $region22: #{forward.32} parent=15 // pred_check_branch
        %114 = sbr.rel (%p112) target = $region24
      $region23: #{forward.32} parent=15 // pred_region
        %p115 = scmp.lt.s32.totalorder %s8, 1
        %s116 = scalar_select %p115, %s8, 1
        %s117 = scalar_lea.vmem %s1, %s116
      $region24: #{forward.32} parent=15 // pred_fallthru
        _
    $region16: #{forward.32} parent=5 // pred_fallthru
      _
    %p118 = scmp.le.s32.totalorder 1, %s8
    %p119 = scmp.lt.s32.totalorder %s8, 3
    %p120 = pnand %p118, %p119
    %p121 = pneg %p120
    // Predicated region
    $region25: #{forward.32} parent=5 // pred_check
      _
    $region26: #{forward.32} parent=5 // pred_check_branch
      %123 = sbr.rel (%p120) target = $region28
    $region27: #{forward.32} parent=5 // pred_region
      %s124 = ssub.s32 %s8, 1
      %p125 = scmp.lt.s32.totalorder %s13, 1
      %s126 = scalar_select %p125, %s13, 1
      %s127 = smul.addr %s126, 4
      %s128 = scalar_lea.vmem %s0, %s127
      %p129 = pneg %p34
      %p130 = pneg %p31
      %p131 = scmp.lt.s32.totalorder %s13, 1
      %s132 = scalar_select %p131, %s13, 1
      %s133 = scalar_lea.vmem %s1, %s132
      %p134 = pneg %p60
      %p135 = pneg %p57
      %p136 = pneg %p86
      %p137 = pneg %p83
      %p138 = scmp.lt.s32.totalorder %s13, 1
      %s139 = scalar_select %p138, %s13, 1
      %s140 = smul.addr %s139, 4
      %s141 = scalar_lea.vmem %s2, %s140
      %p142 = scmp.lt.s32.totalorder %s13, 1
      %s143 = scalar_select %p142, %s13, 1
      %s144 = smul.addr %s143, 4
      %s145 = scalar_lea.vmem %s0, %s144
      %p146 = scmp.lt.s32.totalorder %s13, 1
      %s147 = scalar_select %p146, %s13, 1
      %s148 = scalar_lea.vmem %s1, %s147
      %p149 = scmp.lt.s32.totalorder %s13, 1
      %s150 = scalar_select %p149, %s13, 1
      %s151 = smul.addr %s150, 4
      %s152 = scalar_lea.vmem %s2, %s151
      %v154 = vld [vmem:[%s145] sm:$0xf]
      %v155 = vld [vmem:[%s148] sm:$0x1]
      %v157 = vunpack.c.l.b16 %v154
      %v158 = vpack.c.b16 %v157, %v157
      %159 = vrot.lane.b32.xlu0 %v158, 96
      %v160 = vpop.permute.xlu0 %159
      %vm161 = vcmask 64512
      %v163 = vsel %vm161, %v154, 0
      %v166 = vsel %vm161, %v160, 0
      %168 = vmatpush.bf16.xpose.msra.mxu0 0
      %169 = vmatpush.bf16.xpose.msra.mxu0 0
      %170 = vmatpush.bf16.xpose.msra.mxu0 0
      %171 = vmatpush.bf16.xpose.msra.mxu0 0
      %172 = vmatpush.bf16.xpose.msra.mxu0 0
      %173 = vmatpush.bf16.xpose.msra.mxu0 0
      %174 = vmatpush.bf16.xpose.msra.mxu0 0
      %175 = vmatpush.bf16.xpose.msra.mxu0 %v166
      %176 = vmatmul.bf16.gmra.mxu0 %v163
      %v177 = vpop.f32.mrf.mxu0
      %v178 = vadd.f32 0.0, %v177
      %v179 = vpop.f32.mrf.mxu0
      %180 = vdwg.mxu0
      %v181 = vmul.f32 %v178, 0.35355338
      %v183 = vperm.slane %v155, 0
      %v185 = vadd.f32 %v181, %v183
      %v186 = vsel %vm161, %v185, -inf
      %187 = vmax.xlane.f32.xlu0 %v186
      %v188 = vpop.xlane.xlu0 %187
      %v189 = vsub.f32 %v185, %v188
      %v190 = vmul.f32 %v189, 1.442695
      %v191 = vpow.pop %v190
      %v192 = vsel %vm161, %v191, 0.0
      %193 = vadd.xlane.f32.xlu0 %v192
      %v194 = vpop.xlane.xlu0 %193
      %v195 = vrcp.pop %v194
      %v196 = vmul.f32 %v191, %v195
      %v197 = vpack.c.bf16 %v196, %v196
      %198 = vrot.lane.b32.xlu0 %v158, 64
      %v199 = vpop.permute.xlu0 %198
      %v201 = vsel %vm161, %v197, 0
      %vm203 = vcmask 1043456
      %v205 = vsel %vm203, %v199, 0
      %207 = vmatpush.bf16.msra.mxu0 0
      %208 = vmatpush.bf16.msra.mxu0 0
      %209 = vmatpush.bf16.msra.mxu0 0
      %210 = vmatpush.bf16.msra.mxu0 0
      %211 = vmatpush.bf16.msra.mxu0 0
      %212 = vmatpush.bf16.msra.mxu0 0
      %213 = vmatpush.bf16.msra.mxu0 0
      %214 = vmatpush.bf16.msra.mxu0 %v205
      %215 = vmatmul.bf16.gmra.mxu0 %v201
      %v216 = vpop.f32.mrf.mxu0
      %v217 = vadd.f32 0.0, %v216
      %v218 = vpop.f32.mrf.mxu0
      %219 = vdwg.mxu0
      %220 = vrot.lane.b32.xlu0 %v158, 120
      %v221 = vpop.permute.xlu0 %220
      %222 = vrot.lane.b32.xlu0 %v158, 88
      %v223 = vpop.permute.xlu0 %222
      %v225 = vsel %vm161, %v221, 0
      %v228 = vsel %vm161, %v223, 0
      %230 = vmatpush.bf16.xpose.msra.mxu0 0
      %231 = vmatpush.bf16.xpose.msra.mxu0 0
      %232 = vmatpush.bf16.xpose.msra.mxu0 0
      %233 = vmatpush.bf16.xpose.msra.mxu0 0
      %234 = vmatpush.bf16.xpose.msra.mxu0 0
      %235 = vmatpush.bf16.xpose.msra.mxu0 0
      %236 = vmatpush.bf16.xpose.msra.mxu0 0
      %237 = vmatpush.bf16.xpose.msra.mxu0 %v228
      %238 = vmatmul.bf16.gmra.mxu0 %v225
      %v239 = vpop.f32.mrf.mxu0
      %v240 = vadd.f32 0.0, %v239
      %v241 = vpop.f32.mrf.mxu0
      %242 = vdwg.mxu0
      %v243 = vmul.f32 %v240, 0.35355338
      %v244 = vadd.f32 %v243, %v183
      %v245 = vsel %vm161, %v244, -inf
      %246 = vmax.xlane.f32.xlu0 %v245
      %v247 = vpop.xlane.xlu0 %246
      %v248 = vsub.f32 %v244, %v247
      %v249 = vmul.f32 %v248, 1.442695
      %v250 = vpow.pop %v249
      %v251 = vsel %vm161, %v250, 0.0
      %252 = vadd.xlane.f32.xlu0 %v251
      %v253 = vpop.xlane.xlu0 %252
      %v254 = vrcp.pop %v253
      %v255 = vmul.f32 %v250, %v254
      %v256 = vpack.c.bf16 %v255, %v255
      %257 = vrot.lane.b32.xlu0 %v158, 56
      %v258 = vpop.permute.xlu0 %257
      %v260 = vsel %vm161, %v256, 0
      %v263 = vsel %vm203, %v258, 0
      %265 = vmatpush.bf16.msra.mxu0 0
      %266 = vmatpush.bf16.msra.mxu0 0
      %267 = vmatpush.bf16.msra.mxu0 0
      %268 = vmatpush.bf16.msra.mxu0 0
      %269 = vmatpush.bf16.msra.mxu0 0
      %270 = vmatpush.bf16.msra.mxu0 0
      %271 = vmatpush.bf16.msra.mxu0 0
      %272 = vmatpush.bf16.msra.mxu0 %v263
      %273 = vmatmul.bf16.gmra.mxu0 %v260
      %v274 = vpop.f32.mrf.mxu0
      %v275 = vadd.f32 0.0, %v274
      %v276 = vpop.f32.mrf.mxu0
      %277 = vdwg.mxu0
      %278 = vrot.lane.b32.xlu0 %v158, 112
      %v279 = vpop.permute.xlu0 %278
      %280 = vrot.lane.b32.xlu0 %v158, 80
      %v281 = vpop.permute.xlu0 %280
      %v283 = vsel %vm161, %v279, 0
      %v286 = vsel %vm161, %v281, 0
      %288 = vmatpush.bf16.xpose.msra.mxu0 0
      %289 = vmatpush.bf16.xpose.msra.mxu0 0
      %290 = vmatpush.bf16.xpose.msra.mxu0 0
      %291 = vmatpush.bf16.xpose.msra.mxu0 0
      %292 = vmatpush.bf16.xpose.msra.mxu0 0
      %293 = vmatpush.bf16.xpose.msra.mxu0 0
      %294 = vmatpush.bf16.xpose.msra.mxu0 0
      %295 = vmatpush.bf16.xpose.msra.mxu0 %v286
      %296 = vmatmul.bf16.gmra.mxu0 %v283
      %v297 = vpop.f32.mrf.mxu0
      %v298 = vadd.f32 0.0, %v297
      %v299 = vpop.f32.mrf.mxu0
      %300 = vdwg.mxu0
      %v301 = vmul.f32 %v298, 0.35355338
      %v302 = vadd.f32 %v301, %v183
      %v303 = vsel %vm161, %v302, -inf
      %304 = vmax.xlane.f32.xlu0 %v303
      %v305 = vpop.xlane.xlu0 %304
      %v306 = vsub.f32 %v302, %v305
      %v307 = vmul.f32 %v306, 1.442695
      %v308 = vpow.pop %v307
      %v309 = vsel %vm161, %v308, 0.0
      %310 = vadd.xlane.f32.xlu0 %v309
      %v311 = vpop.xlane.xlu0 %310
      %v312 = vrcp.pop %v311
      %v313 = vmul.f32 %v308, %v312
      %v314 = vpack.c.bf16 %v313, %v313
      %315 = vrot.lane.b32.xlu0 %v158, 48
      %v316 = vpop.permute.xlu0 %315
      %v318 = vsel %vm161, %v314, 0
      %v321 = vsel %vm203, %v316, 0
      %323 = vmatpush.bf16.msra.mxu0 0
      %324 = vmatpush.bf16.msra.mxu0 0
      %325 = vmatpush.bf16.msra.mxu0 0
      %326 = vmatpush.bf16.msra.mxu0 0
      %327 = vmatpush.bf16.msra.mxu0 0
      %328 = vmatpush.bf16.msra.mxu0 0
      %329 = vmatpush.bf16.msra.mxu0 0
      %330 = vmatpush.bf16.msra.mxu0 %v321
      %331 = vmatmul.bf16.gmra.mxu0 %v318
      %v332 = vpop.f32.mrf.mxu0
      %v333 = vadd.f32 0.0, %v332
      %v334 = vpop.f32.mrf.mxu0
      %335 = vdwg.mxu0
      %336 = vrot.lane.b32.xlu0 %v158, 104
      %v337 = vpop.permute.xlu0 %336
      %338 = vrot.lane.b32.xlu0 %v158, 72
      %v339 = vpop.permute.xlu0 %338
      %v341 = vsel %vm161, %v337, 0
      %v344 = vsel %vm161, %v339, 0
      %346 = vmatpush.bf16.xpose.msra.mxu0 0
      %347 = vmatpush.bf16.xpose.msra.mxu0 0
      %348 = vmatpush.bf16.xpose.msra.mxu0 0
      %349 = vmatpush.bf16.xpose.msra.mxu0 0
      %350 = vmatpush.bf16.xpose.msra.mxu0 0
      %351 = vmatpush.bf16.xpose.msra.mxu0 0
      %352 = vmatpush.bf16.xpose.msra.mxu0 0
      %353 = vmatpush.bf16.xpose.msra.mxu0 %v344
      %354 = vmatmul.bf16.gmra.mxu0 %v341
      %v355 = vpop.f32.mrf.mxu0
      %v356 = vadd.f32 0.0, %v355
      %v357 = vpop.f32.mrf.mxu0
      %358 = vdwg.mxu0
      %v359 = vmul.f32 %v356, 0.35355338
      %v360 = vadd.f32 %v359, %v183
      %v361 = vsel %vm161, %v360, -inf
      %362 = vmax.xlane.f32.xlu0 %v361
      %v363 = vpop.xlane.xlu0 %362
      %v364 = vsub.f32 %v360, %v363
      %v365 = vmul.f32 %v364, 1.442695
      %v366 = vpow.pop %v365
      %v367 = vsel %vm161, %v366, 0.0
      %368 = vadd.xlane.f32.xlu0 %v367
      %v369 = vpop.xlane.xlu0 %368
      %v370 = vrcp.pop %v369
      %v371 = vmul.f32 %v366, %v370
      %v372 = vpack.c.bf16 %v371, %v371
      %373 = vrot.lane.b32.xlu0 %v158, 40
      %v374 = vpop.permute.xlu0 %373
      %v376 = vsel %vm161, %v372, 0
      %v379 = vsel %vm203, %v374, 0
      %381 = vmatpush.bf16.msra.mxu0 0
      %382 = vmatpush.bf16.msra.mxu0 0
      %383 = vmatpush.bf16.msra.mxu0 0
      %384 = vmatpush.bf16.msra.mxu0 0
      %385 = vmatpush.bf16.msra.mxu0 0
      %386 = vmatpush.bf16.msra.mxu0 0
      %387 = vmatpush.bf16.msra.mxu0 0
      %388 = vmatpush.bf16.msra.mxu0 %v379
      %389 = vmatmul.bf16.gmra.mxu0 %v376
      %v390 = vpop.f32.mrf.mxu0
      %v391 = vadd.f32 0.0, %v390
      %v392 = vpop.f32.mrf.mxu0
      %393 = vdwg.mxu0
      %395 = vrot.lane.b32.xlu0 %v275, 8
      %v396 = vpop.permute.xlu0 %395
      %399 = vrot.lane.b32.xlu0 %v333, 16
      %v400 = vpop.permute.xlu0 %399
      %403 = vrot.lane.b32.xlu0 %v391, 24
      %v404 = vpop.permute.xlu0 %403
      %v406 = vsel %vm161, %v217, %v396
      %vm407 = vcmask 130048
      %v408 = vsel %vm407, %v406, %v400
      %vm409 = vcmask 195584
      %v410 = vsel %vm409, %v408, %v404
      %v411 = vpack.c.bf16 %v410, %v410
      %vm412 = vcmask 257024
      %413 = vst.msk [vmem:[%s152] sm:$0xf] %vm412, %v411
      %p414 = scmp.lt.s32.totalorder %s13, 1
      %s415 = scalar_select %p414, %s13, 1
      %s416 = smul.addr %s415, 4
      %s417 = scalar_lea.vmem %s2, %s416
      // Predicated region
      $region29: #{forward.32} parent=27 // pred_check
        %p418 = pneg %p83
      $region30: #{forward.32} parent=27 // pred_check_branch
        %420 = sbr.rel (%p418) target = $region32
      $region31: #{forward.32} parent=27 // pred_region
        _
      $region32: #{forward.32} parent=27 // pred_fallthru
        _
    $region28: #{forward.32} parent=5 // pred_fallthru
      _
    %p421 = scmp.le.s32.totalorder 2, %s8
    // Predicated region
    $region33: #{forward.32} parent=5 // pred_check
      %p422 = pneg %p421
    $region34: #{forward.32} parent=5 // pred_check_branch
      %424 = sbr.rel (%p422) target = $region36
    $region35: #{forward.32} parent=5 // pred_region
      %s425 = ssub.s32 %s8, 2
      // Predicated region
      $region37: #{forward.32} parent=35 // pred_check
        %p426 = pneg %p89
      $region38: #{forward.32} parent=35 // pred_check_branch
        %428 = sbr.rel (%p426) target = $region40
      $region39: #{forward.32} parent=35 // pred_region
        %p429 = scmp.lt.s32.totalorder %s14, 1
        %s430 = scalar_select %p429, %s14, 1
        %s431 = smul.addr %s430, 4
        %s432 = scalar_lea.vmem %s2, %s431
      $region40: #{forward.32} parent=35 // pred_fallthru
        _
    $region36: #{forward.32} parent=5 // pred_fallthru
      _
  $region6: #{forward.32} parent=0 // loop_footer
    %s12 = sadd.s32 1, %s8
  $region7: #{forward.32} parent=0 // loop_footer_branch
    %7 = sbr.rel target = $region3
  $region8: #{forward.32} parent=0 // loop_exit
    _

// kernel: forward.31
$region0: #{forward.31}
  #allocation0 [shape = 'u32[]', space=smem, size = 0x4, offset = 0x4, fixed_abs, tag = 'smem constant byte address 0x4 - core index']
  #allocation1 [shape = 'u32[72,128]{1,0:T(1,128)}', space=vmem, size = 0x9000, scoped, tag = 'internal scratch']
  #allocation2 [shape = 'f32[16,128]{1,0:T(8,128)}', space=vmem, size = 0x2000, scoped, tag = 'scratch operand']
  %s0 = inlined_call_operand.vmem [shape: bf16[16,128], index: 0, kind: input, shape index: {}]
  %s1 = inlined_call_operand.hbm [shape: bf16[128,128], index: 1, kind: input, shape index: {}]
  %s2 = inlined_call_operand.vmem [shape: f32[1,128], index: 2, kind: input, shape index: {}]
  %s3 = inlined_call_operand.vmem [shape: bf16[16,128], index: 3, kind: output, shape index: {}]
  %s4 = sld [smem:[#allocation0]]
  $region34: #{forward.31} parent=0
    _
  %s6 = ssub.s32 1, %s4
  %s7 = scalar_select 0, %s6, %s4
  $region1: #{forward.31} parent=0
    #allocation3 [shape = 'u8[32768]{0}', space=vmem, size = 0x8000, scoped, tag = 'input window, operand 1, single buffered']
    #allocation4 [shape = 's32[1]{0}', space=sflag, size = 0x4, scoped, tag = 'scoped memory for forward.31']
    %8 = vsyncpa [#allocation4], 0
    // Predicated region
    $region2: #{forward.31} parent=1 // pred_check
      _
    $region3: #{forward.31} parent=1 // pred_check_branch
      %10 = sbr.rel (0) target = $region5
    $region4: #{forward.31} parent=1 // pred_region
      _
    $region5: #{forward.31} parent=1 // pred_fallthru
      _
    // Predicated region
    $region6: #{forward.31} parent=1 // pred_check
      _
    $region7: #{forward.31} parent=1 // pred_check_branch
      %12 = sbr.rel (0) target = $region9
    $region8: #{forward.31} parent=1 // pred_region
      %14 = vsyncadd [#allocation4], 0
      %s15 = sshll.u32 %s1, 4
      %s16 = int_to_ptr.hbm [resolvable:$true] %s15
      %s17 = sshll.u32 [#allocation3], 4
      %s18 = int_to_ptr.vmem [resolvable:$true] %s17
      %23 = dma.hbm_to_vmem [thread:$0]  %s16, 1024, %s18, [#allocation4], 64, 64, 4
    $region9: #{forward.31} parent=1 // pred_fallthru
      _
    // Predicated region
    $region10: #{forward.31} parent=1 // pred_check
      _
    $region11: #{forward.31} parent=1 // pred_check_branch
      %25 = sbr.rel (0) target = $region13
    $region12: #{forward.31} parent=1 // pred_region
      _
    $region13: #{forward.31} parent=1 // pred_fallthru
      _
    // Predicated region
    $region14: #{forward.31} parent=1 // pred_check
      _
    $region15: #{forward.31} parent=1 // pred_check_branch
      %27 = sbr.rel (0) target = $region17
    $region16: #{forward.31} parent=1 // pred_region
      %29 = dma.done [#allocation4], 1024
    $region17: #{forward.31} parent=1 // pred_fallthru
      _
    %p30 = scmp.eq.s32.totalorder 0, 0
    // Predicated region
    $region18: #{forward.31} parent=1 // pred_check
      %p31 = pneg %p30
    $region19: #{forward.31} parent=1 // pred_check_branch
      %33 = sbr.rel (%p31) target = $region21
    $region20: #{forward.31} parent=1 // pred_region
      %34 = vst [vmem:[#allocation2] sm:$0xff] 0.0
      %35 = vst [vmem:[#allocation2 + $0x8] sm:$0xff] 0.0
    $region21: #{forward.31} parent=1 // pred_fallthru
      _
    %v36 = vld [vmem:[#allocation2] sm:$0xff]
    %v37 = vld [vmem:[#allocation2 + $0x8] sm:$0xff]
    %v38 = vld [vmem:[%s0] sm:$0xf]
    %v39 = vld [vmem:[%s0 + $0x4] sm:$0xf]
    %v40 = vld [vmem:[#allocation3] sm:$0xf]
    %v41 = vld [vmem:[#allocation3 + $0x4] sm:$0xf]
    %v42 = vld [vmem:[#allocation3 + $0x8] sm:$0xf]
    %v43 = vld [vmem:[#allocation3 + $0xc] sm:$0xf]
    %v44 = vld [vmem:[#allocation3 + $0x10] sm:$0xf]
    %v45 = vld [vmem:[#allocation3 + $0x14] sm:$0xf]
    %v46 = vld [vmem:[#allocation3 + $0x18] sm:$0xf]
    %v47 = vld [vmem:[#allocation3 + $0x1c] sm:$0xf]
    %v48 = vld [vmem:[#allocation3 + $0x20] sm:$0xf]
    %v49 = vld [vmem:[#allocation3 + $0x24] sm:$0xf]
    %v50 = vld [vmem:[#allocation3 + $0x28] sm:$0xf]
    %v51 = vld [vmem:[#allocation3 + $0x2c] sm:$0xf]
    %v52 = vld [vmem:[#allocation3 + $0x30] sm:$0xf]
    %v53 = vld [vmem:[#allocation3 + $0x34] sm:$0xf]
    %v54 = vld [vmem:[#allocation3 + $0x38] sm:$0xf]
    %v55 = vld [vmem:[#allocation3 + $0x3c] sm:$0xf]
    %v58 = vunpack.c.l.b16 %v38
    %v59 = vunpack.c.l.b16 %v39
    %v60 = vpack.c.b16 %v59, %v58
    %v78 = vunpack.c.l.b16 %v40
    %v79 = vunpack.c.l.b16 %v41
    %v80 = vunpack.c.l.b16 %v42
    %v81 = vunpack.c.l.b16 %v43
    %v82 = vunpack.c.l.b16 %v44
    %v83 = vunpack.c.l.b16 %v45
    %v84 = vunpack.c.l.b16 %v46
    %v85 = vunpack.c.l.b16 %v47
    %v86 = vunpack.c.l.b16 %v48
    %v87 = vunpack.c.l.b16 %v49
    %v88 = vunpack.c.l.b16 %v50
    %v89 = vunpack.c.l.b16 %v51
    %v90 = vunpack.c.l.b16 %v52
    %v91 = vunpack.c.l.b16 %v53
    %v92 = vunpack.c.l.b16 %v54
    %v93 = vunpack.c.l.b16 %v55
    %v94 = vpack.c.b16 %v79, %v78
    %v95 = vpack.c.b16 %v81, %v80
    %v96 = vpack.c.b16 %v83, %v82
    %v97 = vpack.c.b16 %v85, %v84
    %v98 = vpack.c.b16 %v87, %v86
    %v99 = vpack.c.b16 %v89, %v88
    %v100 = vpack.c.b16 %v91, %v90
    %v101 = vpack.c.b16 %v93, %v92
    %110 = vmatpush.bf16.msra.mxu0 %v101
    %111 = vmatpush.bf16.msra.mxu0 %v100
    %112 = vmatpush.bf16.msra.mxu0 %v99
    %113 = vmatpush.bf16.msra.mxu0 %v98
    %114 = vmatpush.bf16.msra.mxu0 %v97
    %115 = vmatpush.bf16.msra.mxu0 %v96
    %116 = vmatpush.bf16.msra.mxu0 %v95
    %117 = vmatpush.bf16.msra.mxu0 %v94
    %118 = vmatmul.bf16.gmra.mxu0 %v60
    %v119 = vpop.f32.mrf.mxu0
    %v120 = vadd.f32 0.0, %v119
    %v121 = vpop.f32.mrf.mxu0
    %v122 = vadd.f32 0.0, %v121
    %123 = vdwg.mxu0
    %v124 = vadd.f32 %v36, %v120
    %v125 = vadd.f32 %v37, %v122
    %126 = vst [vmem:[#allocation2] sm:$0xff] %v124
    %127 = vst [vmem:[#allocation2 + $0x8] sm:$0xff] %v125
    // Predicated region
    $region22: #{forward.31} parent=1 // pred_check
      %p128 = pneg %p30
    $region23: #{forward.31} parent=1 // pred_check_branch
      %130 = sbr.rel (%p128) target = $region25
    $region24: #{forward.31} parent=1 // pred_region
      %v131 = vld [vmem:[#allocation2] sm:$0xff]
      %v132 = vld [vmem:[#allocation2 + $0x8] sm:$0xff]
      %v133 = vld [vmem:[%s2] sm:$0x1]
      %v135 = vperm.slane %v133, 0
      %v137 = vadd.f32 %v131, %v135
      %v138 = vadd.f32 %v132, %v135
      %v139 = vpack.c.bf16 %v137, %v137
      %v140 = vpack.c.bf16 %v138, %v138
      %141 = vst [vmem:[%s3] sm:$0xf] %v139
      %142 = vst [vmem:[%s3 + $0x4] sm:$0xf] %v140
    $region25: #{forward.31} parent=1 // pred_fallthru
      _
    // Predicated region
    $region26: #{forward.31} parent=1 // pred_check
      _
    $region27: #{forward.31} parent=1 // pred_check_branch
      %144 = sbr.rel (0) target = $region29
    $region28: #{forward.31} parent=1 // pred_region
      _
    $region29: #{forward.31} parent=1 // pred_fallthru
      _
    // Predicated region
    $region30: #{forward.31} parent=1 // pred_check
      _
    $region31: #{forward.31} parent=1 // pred_check_branch
      %146 = sbr.rel (0) target = $region33
    $region32: #{forward.31} parent=1 // pred_region
      _
    $region33: #{forward.31} parent=1 // pred_fallthru
      _
    %147 = vsyncpa [#allocation4], 1

// kernel: forward.33
$region0: #{forward.33}
  #allocation0 [shape = 'u32[]', space=smem, size = 0x4, offset = 0x4, fixed_abs, tag = 'smem constant byte address 0x4 - core index']
  #allocation1 [shape = 'u32[72,128]{1,0:T(1,128)}', space=vmem, size = 0x9000, scoped, tag = 'internal scratch']
  #allocation2 [shape = 'f32[16,128]{1,0:T(8,128)}', space=vmem, size = 0x2000, scoped, tag = 'scratch operand']
  %s0 = inlined_call_operand.vmem [shape: bf16[16,128], index: 0, kind: input, shape index: {}]
  %s1 = inlined_call_operand.hbm [shape: bf16[128,128], index: 1, kind: input, shape index: {}]
  %s2 = inlined_call_operand.vmem [shape: f32[1,128], index: 2, kind: input, shape index: {}]
  %s3 = inlined_call_operand.vmem [shape: f32[16,128], index: 3, kind: output, shape index: {}]
  %s4 = sld [smem:[#allocation0]]
  $region34: #{forward.33} parent=0
    _
  %s6 = ssub.s32 1, %s4
  %s7 = scalar_select 0, %s6, %s4
  $region1: #{forward.33} parent=0
    #allocation3 [shape = 'u8[32768]{0}', space=vmem, size = 0x8000, scoped, tag = 'input window, operand 1, single buffered']
    #allocation4 [shape = 's32[1]{0}', space=sflag, size = 0x4, scoped, tag = 'scoped memory for forward.33']
    %8 = vsyncpa [#allocation4], 0
    // Predicated region
    $region2: #{forward.33} parent=1 // pred_check
      _
    $region3: #{forward.33} parent=1 // pred_check_branch
      %10 = sbr.rel (0) target = $region5
    $region4: #{forward.33} parent=1 // pred_region
      _
    $region5: #{forward.33} parent=1 // pred_fallthru
      _
    // Predicated region
    $region6: #{forward.33} parent=1 // pred_check
      _
    $region7: #{forward.33} parent=1 // pred_check_branch
      %12 = sbr.rel (0) target = $region9
    $region8: #{forward.33} parent=1 // pred_region
      %14 = vsyncadd [#allocation4], 0
      %s15 = sshll.u32 %s1, 4
      %s16 = int_to_ptr.hbm [resolvable:$true] %s15
      %s17 = sshll.u32 [#allocation3], 4
      %s18 = int_to_ptr.vmem [resolvable:$true] %s17
      %23 = dma.hbm_to_vmem [thread:$0]  %s16, 1024, %s18, [#allocation4], 64, 64, 4
    $region9: #{forward.33} parent=1 // pred_fallthru
      _
    // Predicated region
    $region10: #{forward.33} parent=1 // pred_check
      _
    $region11: #{forward.33} parent=1 // pred_check_branch
      %25 = sbr.rel (0) target = $region13
    $region12: #{forward.33} parent=1 // pred_region
      _
    $region13: #{forward.33} parent=1 // pred_fallthru
      _
    // Predicated region
    $region14: #{forward.33} parent=1 // pred_check
      _
    $region15: #{forward.33} parent=1 // pred_check_branch
      %27 = sbr.rel (0) target = $region17
    $region16: #{forward.33} parent=1 // pred_region
      %29 = dma.done [#allocation4], 1024
    $region17: #{forward.33} parent=1 // pred_fallthru
      _
    %p30 = scmp.eq.s32.totalorder 0, 0
    // Predicated region
    $region18: #{forward.33} parent=1 // pred_check
      %p31 = pneg %p30
    $region19: #{forward.33} parent=1 // pred_check_branch
      %33 = sbr.rel (%p31) target = $region21
    $region20: #{forward.33} parent=1 // pred_region
      %34 = vst [vmem:[#allocation2] sm:$0xff] 0.0
      %35 = vst [vmem:[#allocation2 + $0x8] sm:$0xff] 0.0
    $region21: #{forward.33} parent=1 // pred_fallthru
      _
    %v36 = vld [vmem:[#allocation2] sm:$0xff]
    %v37 = vld [vmem:[#allocation2 + $0x8] sm:$0xff]
    %v38 = vld [vmem:[%s0] sm:$0xf]
    %v39 = vld [vmem:[%s0 + $0x4] sm:$0xf]
    %v40 = vld [vmem:[#allocation3] sm:$0xf]
    %v41 = vld [vmem:[#allocation3 + $0x4] sm:$0xf]
    %v42 = vld [vmem:[#allocation3 + $0x8] sm:$0xf]
    %v43 = vld [vmem:[#allocation3 + $0xc] sm:$0xf]
    %v44 = vld [vmem:[#allocation3 + $0x10] sm:$0xf]
    %v45 = vld [vmem:[#allocation3 + $0x14] sm:$0xf]
    %v46 = vld [vmem:[#allocation3 + $0x18] sm:$0xf]
    %v47 = vld [vmem:[#allocation3 + $0x1c] sm:$0xf]
    %v48 = vld [vmem:[#allocation3 + $0x20] sm:$0xf]
    %v49 = vld [vmem:[#allocation3 + $0x24] sm:$0xf]
    %v50 = vld [vmem:[#allocation3 + $0x28] sm:$0xf]
    %v51 = vld [vmem:[#allocation3 + $0x2c] sm:$0xf]
    %v52 = vld [vmem:[#allocation3 + $0x30] sm:$0xf]
    %v53 = vld [vmem:[#allocation3 + $0x34] sm:$0xf]
    %v54 = vld [vmem:[#allocation3 + $0x38] sm:$0xf]
    %v55 = vld [vmem:[#allocation3 + $0x3c] sm:$0xf]
    %v58 = vunpack.c.l.b16 %v38
    %v59 = vunpack.c.l.b16 %v39
    %v60 = vpack.c.b16 %v59, %v58
    %v78 = vunpack.c.l.b16 %v40
    %v79 = vunpack.c.l.b16 %v41
    %v80 = vunpack.c.l.b16 %v42
    %v81 = vunpack.c.l.b16 %v43
    %v82 = vunpack.c.l.b16 %v44
    %v83 = vunpack.c.l.b16 %v45
    %v84 = vunpack.c.l.b16 %v46
    %v85 = vunpack.c.l.b16 %v47
    %v86 = vunpack.c.l.b16 %v48
    %v87 = vunpack.c.l.b16 %v49
    %v88 = vunpack.c.l.b16 %v50
    %v89 = vunpack.c.l.b16 %v51
    %v90 = vunpack.c.l.b16 %v52
    %v91 = vunpack.c.l.b16 %v53
    %v92 = vunpack.c.l.b16 %v54
    %v93 = vunpack.c.l.b16 %v55
    %v94 = vpack.c.b16 %v79, %v78
    %v95 = vpack.c.b16 %v81, %v80
    %v96 = vpack.c.b16 %v83, %v82
    %v97 = vpack.c.b16 %v85, %v84
    %v98 = vpack.c.b16 %v87, %v86
    %v99 = vpack.c.b16 %v89, %v88
    %v100 = vpack.c.b16 %v91, %v90
    %v101 = vpack.c.b16 %v93, %v92
    %110 = vmatpush.bf16.msra.mxu0 %v101
    %111 = vmatpush.bf16.msra.mxu0 %v100
    %112 = vmatpush.bf16.msra.mxu0 %v99
    %113 = vmatpush.bf16.msra.mxu0 %v98
    %114 = vmatpush.bf16.msra.mxu0 %v97
    %115 = vmatpush.bf16.msra.mxu0 %v96
    %116 = vmatpush.bf16.msra.mxu0 %v95
    %117 = vmatpush.bf16.msra.mxu0 %v94
    %118 = vmatmul.bf16.gmra.mxu0 %v60
    %v119 = vpop.f32.mrf.mxu0
    %v120 = vadd.f32 0.0, %v119
    %v121 = vpop.f32.mrf.mxu0
    %v122 = vadd.f32 0.0, %v121
    %123 = vdwg.mxu0
    %v124 = vadd.f32 %v36, %v120
    %v125 = vadd.f32 %v37, %v122
    %126 = vst [vmem:[#allocation2] sm:$0xff] %v124
    %127 = vst [vmem:[#allocation2 + $0x8] sm:$0xff] %v125
    // Predicated region
    $region22: #{forward.33} parent=1 // pred_check
      %p128 = pneg %p30
    $region23: #{forward.33} parent=1 // pred_check_branch
      %130 = sbr.rel (%p128) target = $region25
    $region24: #{forward.33} parent=1 // pred_region
      %v131 = vld [vmem:[#allocation2] sm:$0xff]
      %v132 = vld [vmem:[#allocation2 + $0x8] sm:$0xff]
      %v133 = vld [vmem:[%s2] sm:$0x1]
      %v135 = vperm.slane %v133, 0
      %v137 = vadd.f32 %v131, %v135
      %v138 = vadd.f32 %v132, %v135
      %139 = vst [vmem:[%s3] sm:$0xff] %v137
      %140 = vst [vmem:[%s3 + $0x8] sm:$0xff] %v138
    $region25: #{forward.33} parent=1 // pred_fallthru
      _
    // Predicated region
    $region26: #{forward.33} parent=1 // pred_check
      _
    $region27: #{forward.33} parent=1 // pred_check_branch
      %142 = sbr.rel (0) target = $region29
    $region28: #{forward.33} parent=1 // pred_region
      _
    $region29: #{forward.33} parent=1 // pred_fallthru
      _
    // Predicated region
    $region30: #{forward.33} parent=1 // pred_check
      _
    $region31: #{forward.33} parent=1 // pred_check_branch
      %144 = sbr.rel (0) target = $region33
    $region32: #{forward.33} parent=1 // pred_region
      _
    $region33: #{forward.33} parent=1 // pred_fallthru
      _
    %145 = vsyncpa [#allocation4], 1

// kernel: forward.42
$region0: #{forward.42}
  #allocation0 [shape = 'u32[]', space=smem, size = 0x4, offset = 0x4, fixed_abs, tag = 'smem constant byte address 0x4 - core index']
  #allocation1 [shape = 'u32[72,128]{1,0:T(1,128)}', space=vmem, size = 0x9000, scoped, tag = 'internal scratch']
  %s0 = inlined_call_operand.vmem [shape: bf16[2,6,96], index: 0, kind: input, shape index: {}]
  %s1 = inlined_call_operand.vmem [shape: f32[1,6,6], index: 1, kind: input, shape index: {}]
  %s2 = inlined_call_operand.vmem [shape: bf16[2,6,32], index: 2, kind: output, shape index: {}]
  %s3 = sld [smem:[#allocation0]]
  $region41: #{forward.42} parent=0
    _
  %s5 = ssub.s32 1, %s3
  %s6 = scalar_select 0, %s5, %s3
  loop: start=0, step=1, limit=4
  $region2: #{forward.42} parent=0 // loop_pre_header
    _
  $region3: #{forward.42} parent=0 // loop_header
    %s8 = sphi 0, %s12
    %p9 = scmp.ge.s32.totalorder %s8, 4
    %s18 = sphi 0, %s20
    %s21 = sphi 0, %s18
    %s22 = sphi 0, %s21
    %s38 = sphi 0, %s22
    %s42 = sphi 0, %s42
    %s44 = sphi 0, %s42
    %s45 = sphi 0, %s44
    %s59 = sphi 0, %s45
    %s65 = sphi 0, %s67
    %s68 = sphi 0, %s65
    %s69 = sphi 0, %s68
    %s85 = sphi 0, %s69
  $region4: #{forward.42} parent=0 // loop_header_branch
    %11 = sbr.rel (%p9) target = $region8
  $region5: #{forward.42} parent=0 // loop_body
    %s13 = ssub.s32 %s8, 1
    %s14 = ssub.s32 %s8, 2
    %s15 = sadd.s32 %s8, 1
    %s16 = ssub.s32 %s8, %s15
    %p17 = scmp.eq.s32.totalorder %s16, 0
    %s19 = sadd.s32 %s18, 1
    %s20 = scalar_select %p17, %s18, %s19
    %p23 = pneg %p17
    %p24 = scmp.eq.s32.totalorder %s8, 1
    %p25 = por %p23, %p24
    %p26 = scmp.ne.s32.totalorder %s18, %s21
    %p27 = scmp.eq.s32.totalorder %s8, 0
    %p28 = por %p26, %p27
    %p29 = scmp.ne.s32.totalorder %s18, %s21
    %p30 = scmp.eq.s32.totalorder %s13, 1
    %p31 = por %p29, %p30
    %p32 = scmp.ne.s32.totalorder %s21, %s22
    %p33 = scmp.eq.s32.totalorder %s13, 0
    %p34 = por %p32, %p33
    %p35 = scmp.ne.s32.totalorder %s21, %s22
    %p36 = scmp.eq.s32.totalorder %s14, 1
    %p37 = por %p35, %p36
    %p39 = scmp.ne.s32.totalorder %s22, %s38
    %p40 = scmp.eq.s32.totalorder %s14, 0
    %p41 = por %p39, %p40
    %s43 = sadd.s32 %s42, 1
    %p46 = scmp.eq.s32.totalorder %s8, 1
    %p47 = scmp.ne.s32.totalorder %s42, %s44
    %p48 = scmp.eq.s32.totalorder %s8, 0
    %p49 = por %p47, %p48
    %p50 = scmp.ne.s32.totalorder %s42, %s44
    %p51 = scmp.eq.s32.totalorder %s13, 1
    %p52 = por %p50, %p51
    %p53 = scmp.ne.s32.totalorder %s44, %s45
    %p54 = scmp.eq.s32.totalorder %s13, 0
    %p55 = por %p53, %p54
    %p56 = scmp.ne.s32.totalorder %s44, %s45
    %p57 = scmp.eq.s32.totalorder %s14, 1
    %p58 = por %p56, %p57
    %p60 = scmp.ne.s32.totalorder %s45, %s59
    %p61 = scmp.eq.s32.totalorder %s14, 0
    %p62 = por %p60, %p61
    %s63 = ssub.s32 %s8, %s15
    %p64 = scmp.eq.s32.totalorder %s63, 0
    %s66 = sadd.s32 %s65, 1
    %s67 = scalar_select %p64, %s65, %s66
    %p70 = pneg %p64
    %p71 = scmp.eq.s32.totalorder %s8, 1
    %p72 = por %p70, %p71
    %p73 = scmp.ne.s32.totalorder %s65, %s68
    %p74 = scmp.eq.s32.totalorder %s8, 0
    %p75 = por %p73, %p74
    %p76 = scmp.ne.s32.totalorder %s65, %s68
    %p77 = scmp.eq.s32.totalorder %s13, 1
    %p78 = por %p76, %p77
    %p79 = scmp.ne.s32.totalorder %s68, %s69
    %p80 = scmp.eq.s32.totalorder %s13, 0
    %p81 = por %p79, %p80
    %p82 = scmp.ne.s32.totalorder %s68, %s69
    %p83 = scmp.eq.s32.totalorder %s14, 1
    %p84 = por %p82, %p83
    %p86 = scmp.ne.s32.totalorder %s69, %s85
    %p87 = scmp.eq.s32.totalorder %s14, 0
    %p88 = por %p86, %p87
    %p89 = scmp.le.s32.totalorder 1, %s8
    %p90 = scmp.lt.s32.totalorder %s8, 3
    %p91 = pnand %p89, %p90
    %p92 = pneg %p91
    // Predicated region
    $region9: #{forward.42} parent=5 // pred_check
      _
    $region10: #{forward.42} parent=5 // pred_check_branch
      %94 = sbr.rel (%p91) target = $region12
    $region11: #{forward.42} parent=5 // pred_region
      %s95 = ssub.s32 %s8, 1
      // Predicated region
      $region13: #{forward.42} parent=11 // pred_check
        %p96 = pneg %p55
      $region14: #{forward.42} parent=11 // pred_check_branch
        %98 = sbr.rel (%p96) target = $region16
      $region15: #{forward.42} parent=11 // pred_region
        _
      $region16: #{forward.42} parent=11 // pred_fallthru
        _
    $region12: #{forward.42} parent=5 // pred_fallthru
      _
    %p99 = scmp.lt.s32.totalorder %s8, 2
    // Predicated region
    $region17: #{forward.42} parent=5 // pred_check
      %p100 = pneg %p99
    $region18: #{forward.42} parent=5 // pred_check_branch
      %102 = sbr.rel (%p100) target = $region20
    $region19: #{forward.42} parent=5 // pred_region
      // Predicated region
      $region21: #{forward.42} parent=19 // pred_check
        %p103 = pneg %p28
      $region22: #{forward.42} parent=19 // pred_check_branch
        %105 = sbr.rel (%p103) target = $region24
      $region23: #{forward.42} parent=19 // pred_region
        %p106 = scmp.lt.s32.totalorder %s8, 1
        %s107 = scalar_select %p106, %s8, 1
        %s108 = smul.addr %s107, 4
        %s109 = scalar_lea.vmem %s0, %s108
      $region24: #{forward.42} parent=19 // pred_fallthru
        _
    $region20: #{forward.42} parent=5 // pred_fallthru
      _
    %p110 = scmp.le.s32.totalorder 1, %s8
    %p111 = scmp.lt.s32.totalorder %s8, 3
    %p112 = pnand %p110, %p111
    %p113 = pneg %p112
    // Predicated region
    $region25: #{forward.42} parent=5 // pred_check
      _
    $region26: #{forward.42} parent=5 // pred_check_branch
      %115 = sbr.rel (%p112) target = $region28
    $region27: #{forward.42} parent=5 // pred_region
      %s116 = ssub.s32 %s8, 1
      %p117 = scmp.lt.s32.totalorder %s13, 1
      %s118 = scalar_select %p117, %s13, 1
      %s119 = smul.addr %s118, 4
      %s120 = scalar_lea.vmem %s0, %s119
      %p121 = pneg %p34
      %p122 = pneg %p31
      %p123 = pneg %p55
      %p124 = pneg %p52
      %p125 = pneg %p81
      %p126 = pneg %p78
      %p127 = scmp.lt.s32.totalorder %s13, 1
      %s128 = scalar_select %p127, %s13, 1
      %s129 = smul.addr %s128, 4
      %s130 = scalar_lea.vmem %s2, %s129
      %p131 = scmp.lt.s32.totalorder %s13, 1
      %s132 = scalar_select %p131, %s13, 1
      %s133 = smul.addr %s132, 4
      %s134 = scalar_lea.vmem %s0, %s133
      %p135 = scmp.lt.s32.totalorder %s13, 1
      %s136 = scalar_select %p135, %s13, 1
      %s137 = smul.addr %s136, 4
      %s138 = scalar_lea.vmem %s2, %s137
      %v140 = vld [vmem:[%s134] sm:$0x7]
      %v141 = vld [vmem:[%s1] sm:$0x3f]
      %v143 = vunpack.c.l.b16 %v140
      %v144 = vpack.c.b16 %v143, %v143
      %145 = vrot.lane.b32.xlu0 %v144, 96
      %v146 = vpop.permute.xlu0 %145
      %vm147 = vcmask 64512
      %v149 = vsel %vm147, %v140, 0
      %v152 = vsel %vm147, %v146, 0
      %154 = vmatpush.bf16.xpose.msra.mxu0 0
      %155 = vmatpush.bf16.xpose.msra.mxu0 0
      %156 = vmatpush.bf16.xpose.msra.mxu0 0
      %157 = vmatpush.bf16.xpose.msra.mxu0 0
      %158 = vmatpush.bf16.xpose.msra.mxu0 0
      %159 = vmatpush.bf16.xpose.msra.mxu0 0
      %160 = vmatpush.bf16.xpose.msra.mxu0 0
      %161 = vmatpush.bf16.xpose.msra.mxu0 %v152
      %162 = vmatmul.bf16.gmra.mxu0 %v149
      %v163 = vpop.f32.mrf.mxu0
      %v164 = vadd.f32 0.0, %v163
      %v165 = vpop.f32.mrf.mxu0
      %166 = vdwg.mxu0
      %v167 = vmul.f32 %v164, 0.35355338
      %v168 = vadd.f32 %v167, %v141
      %vm169 = vcmask 46080
      %v170 = vsel %vm169, %v168, -inf
      %171 = vmax.xlane.f32.xlu0 %v170
      %v172 = vpop.xlane.xlu0 %171
      %v173 = vsub.f32 %v168, %v172
      %v174 = vmul.f32 %v173, 1.442695
      %v175 = vpow.pop %v174
      %v176 = vsel %vm169, %v175, 0.0
      %177 = vadd.xlane.f32.xlu0 %v176
      %v178 = vpop.xlane.xlu0 %177
      %v179 = vrcp.pop %v178
      %v180 = vmul.f32 %v175, %v179
      %v181 = vpack.c.bf16 %v180, %v180
      %182 = vrot.lane.b32.xlu0 %v144, 64
      %v183 = vpop.permute.xlu0 %182
      %vm184 = vcmask 48128
      %v186 = vsel %vm184, %v181, 0
      %vm188 = vcmask 1042432
      %v190 = vsel %vm188, %v183, 0
      %192 = vmatpush.bf16.msra.mxu0 0
      %193 = vmatpush.bf16.msra.mxu0 0
      %194 = vmatpush.bf16.msra.mxu0 0
      %195 = vmatpush.bf16.msra.mxu0 0
      %196 = vmatpush.bf16.msra.mxu0 0
      %197 = vmatpush.bf16.msra.mxu0 0
      %198 = vmatpush.bf16.msra.mxu0 0
      %199 = vmatpush.bf16.msra.mxu0 %v190
      %200 = vmatmul.bf16.gmra.mxu0 %v186
      %v201 = vpop.f32.mrf.mxu0
      %v202 = vadd.f32 0.0, %v201
      %v203 = vpop.f32.mrf.mxu0
      %204 = vdwg.mxu0
      %205 = vrot.lane.b32.xlu0 %v144, 120
      %v206 = vpop.permute.xlu0 %205
      %207 = vrot.lane.b32.xlu0 %v144, 88
      %v208 = vpop.permute.xlu0 %207
      %v210 = vsel %vm147, %v206, 0
      %v213 = vsel %vm147, %v208, 0
      %215 = vmatpush.bf16.xpose.msra.mxu0 0
      %216 = vmatpush.bf16.xpose.msra.mxu0 0
      %217 = vmatpush.bf16.xpose.msra.mxu0 0
      %218 = vmatpush.bf16.xpose.msra.mxu0 0
      %219 = vmatpush.bf16.xpose.msra.mxu0 0
      %220 = vmatpush.bf16.xpose.msra.mxu0 0
      %221 = vmatpush.bf16.xpose.msra.mxu0 0
      %222 = vmatpush.bf16.xpose.msra.mxu0 %v213
      %223 = vmatmul.bf16.gmra.mxu0 %v210
      %v224 = vpop.f32.mrf.mxu0
      %v225 = vadd.f32 0.0, %v224
      %v226 = vpop.f32.mrf.mxu0
      %227 = vdwg.mxu0
      %v228 = vmul.f32 %v225, 0.35355338
      %v229 = vadd.f32 %v228, %v141
      %v230 = vsel %vm169, %v229, -inf
      %231 = vmax.xlane.f32.xlu0 %v230
      %v232 = vpop.xlane.xlu0 %231
      %v233 = vsub.f32 %v229, %v232
      %v234 = vmul.f32 %v233, 1.442695
      %v235 = vpow.pop %v234
      %v236 = vsel %vm169, %v235, 0.0
      %237 = vadd.xlane.f32.xlu0 %v236
      %v238 = vpop.xlane.xlu0 %237
      %v239 = vrcp.pop %v238
      %v240 = vmul.f32 %v235, %v239
      %v241 = vpack.c.bf16 %v240, %v240
      %242 = vrot.lane.b32.xlu0 %v144, 56
      %v243 = vpop.permute.xlu0 %242
      %v245 = vsel %vm184, %v241, 0
      %v248 = vsel %vm188, %v243, 0
      %250 = vmatpush.bf16.msra.mxu0 0
      %251 = vmatpush.bf16.msra.mxu0 0
      %252 = vmatpush.bf16.msra.mxu0 0
      %253 = vmatpush.bf16.msra.mxu0 0
      %254 = vmatpush.bf16.msra.mxu0 0
      %255 = vmatpush.bf16.msra.mxu0 0
      %256 = vmatpush.bf16.msra.mxu0 0
      %257 = vmatpush.bf16.msra.mxu0 %v248
      %258 = vmatmul.bf16.gmra.mxu0 %v245
      %v259 = vpop.f32.mrf.mxu0
      %v260 = vadd.f32 0.0, %v259
      %v261 = vpop.f32.mrf.mxu0
      %262 = vdwg.mxu0
      %263 = vrot.lane.b32.xlu0 %v144, 112
      %v264 = vpop.permute.xlu0 %263
      %265 = vrot.lane.b32.xlu0 %v144, 80
      %v266 = vpop.permute.xlu0 %265
      %v268 = vsel %vm147, %v264, 0
      %v271 = vsel %vm147, %v266, 0
      %273 = vmatpush.bf16.xpose.msra.mxu0 0
      %274 = vmatpush.bf16.xpose.msra.mxu0 0
      %275 = vmatpush.bf16.xpose.msra.mxu0 0
      %276 = vmatpush.bf16.xpose.msra.mxu0 0
      %277 = vmatpush.bf16.xpose.msra.mxu0 0
      %278 = vmatpush.bf16.xpose.msra.mxu0 0
      %279 = vmatpush.bf16.xpose.msra.mxu0 0
      %280 = vmatpush.bf16.xpose.msra.mxu0 %v271
      %281 = vmatmul.bf16.gmra.mxu0 %v268
      %v282 = vpop.f32.mrf.mxu0
      %v283 = vadd.f32 0.0, %v282
      %v284 = vpop.f32.mrf.mxu0
      %285 = vdwg.mxu0
      %v286 = vmul.f32 %v283, 0.35355338
      %v287 = vadd.f32 %v286, %v141
      %v288 = vsel %vm169, %v287, -inf
      %289 = vmax.xlane.f32.xlu0 %v288
      %v290 = vpop.xlane.xlu0 %289
      %v291 = vsub.f32 %v287, %v290
      %v292 = vmul.f32 %v291, 1.442695
      %v293 = vpow.pop %v292
      %v294 = vsel %vm169, %v293, 0.0
      %295 = vadd.xlane.f32.xlu0 %v294
      %v296 = vpop.xlane.xlu0 %295
      %v297 = vrcp.pop %v296
      %v298 = vmul.f32 %v293, %v297
      %v299 = vpack.c.bf16 %v298, %v298
      %300 = vrot.lane.b32.xlu0 %v144, 48
      %v301 = vpop.permute.xlu0 %300
      %v303 = vsel %vm184, %v299, 0
      %v306 = vsel %vm188, %v301, 0
      %308 = vmatpush.bf16.msra.mxu0 0
      %309 = vmatpush.bf16.msra.mxu0 0
      %310 = vmatpush.bf16.msra.mxu0 0
      %311 = vmatpush.bf16.msra.mxu0 0
      %312 = vmatpush.bf16.msra.mxu0 0
      %313 = vmatpush.bf16.msra.mxu0 0
      %314 = vmatpush.bf16.msra.mxu0 0
      %315 = vmatpush.bf16.msra.mxu0 %v306
      %316 = vmatmul.bf16.gmra.mxu0 %v303
      %v317 = vpop.f32.mrf.mxu0
      %v318 = vadd.f32 0.0, %v317
      %v319 = vpop.f32.mrf.mxu0
      %320 = vdwg.mxu0
      %321 = vrot.lane.b32.xlu0 %v144, 104
      %v322 = vpop.permute.xlu0 %321
      %323 = vrot.lane.b32.xlu0 %v144, 72
      %v324 = vpop.permute.xlu0 %323
      %v326 = vsel %vm147, %v322, 0
      %v329 = vsel %vm147, %v324, 0
      %331 = vmatpush.bf16.xpose.msra.mxu0 0
      %332 = vmatpush.bf16.xpose.msra.mxu0 0
      %333 = vmatpush.bf16.xpose.msra.mxu0 0
      %334 = vmatpush.bf16.xpose.msra.mxu0 0
      %335 = vmatpush.bf16.xpose.msra.mxu0 0
      %336 = vmatpush.bf16.xpose.msra.mxu0 0
      %337 = vmatpush.bf16.xpose.msra.mxu0 0
      %338 = vmatpush.bf16.xpose.msra.mxu0 %v329
      %339 = vmatmul.bf16.gmra.mxu0 %v326
      %v340 = vpop.f32.mrf.mxu0
      %v341 = vadd.f32 0.0, %v340
      %v342 = vpop.f32.mrf.mxu0
      %343 = vdwg.mxu0
      %v344 = vmul.f32 %v341, 0.35355338
      %v345 = vadd.f32 %v344, %v141
      %v346 = vsel %vm169, %v345, -inf
      %347 = vmax.xlane.f32.xlu0 %v346
      %v348 = vpop.xlane.xlu0 %347
      %v349 = vsub.f32 %v345, %v348
      %v350 = vmul.f32 %v349, 1.442695
      %v351 = vpow.pop %v350
      %v352 = vsel %vm169, %v351, 0.0
      %353 = vadd.xlane.f32.xlu0 %v352
      %v354 = vpop.xlane.xlu0 %353
      %v355 = vrcp.pop %v354
      %v356 = vmul.f32 %v351, %v355
      %v357 = vpack.c.bf16 %v356, %v356
      %358 = vrot.lane.b32.xlu0 %v144, 40
      %v359 = vpop.permute.xlu0 %358
      %v361 = vsel %vm184, %v357, 0
      %v364 = vsel %vm188, %v359, 0
      %366 = vmatpush.bf16.msra.mxu0 0
      %367 = vmatpush.bf16.msra.mxu0 0
      %368 = vmatpush.bf16.msra.mxu0 0
      %369 = vmatpush.bf16.msra.mxu0 0
      %370 = vmatpush.bf16.msra.mxu0 0
      %371 = vmatpush.bf16.msra.mxu0 0
      %372 = vmatpush.bf16.msra.mxu0 0
      %373 = vmatpush.bf16.msra.mxu0 %v364
      %374 = vmatmul.bf16.gmra.mxu0 %v361
      %v375 = vpop.f32.mrf.mxu0
      %v376 = vadd.f32 0.0, %v375
      %v377 = vpop.f32.mrf.mxu0
      %378 = vdwg.mxu0
      %380 = vrot.lane.b32.xlu0 %v260, 8
      %v381 = vpop.permute.xlu0 %380
      %384 = vrot.lane.b32.xlu0 %v318, 16
      %v385 = vpop.permute.xlu0 %384
      %388 = vrot.lane.b32.xlu0 %v376, 24
      %v389 = vpop.permute.xlu0 %388
      %v391 = vsel %vm147, %v202, %v381
      %vm392 = vcmask 130048
      %v393 = vsel %vm392, %v391, %v385
      %vm394 = vcmask 195584
      %v395 = vsel %vm394, %v393, %v389
      %v396 = vpack.c.bf16 %v395, %v395
      %vm397 = vcmask 256000
      %398 = vst.msk [vmem:[%s138] sm:$0x7] %vm397, %v396
      %p399 = scmp.lt.s32.totalorder %s13, 1
      %s400 = scalar_select %p399, %s13, 1
      %s401 = smul.addr %s400, 4
      %s402 = scalar_lea.vmem %s2, %s401
      // Predicated region
      $region29: #{forward.42} parent=27 // pred_check
        %p403 = pneg %p78
      $region30: #{forward.42} parent=27 // pred_check_branch
        %405 = sbr.rel (%p403) target = $region32
      $region31: #{forward.42} parent=27 // pred_region
        _
      $region32: #{forward.42} parent=27 // pred_fallthru
        _
    $region28: #{forward.42} parent=5 // pred_fallthru
      _
    %p406 = scmp.le.s32.totalorder 2, %s8
    // Predicated region
    $region33: #{forward.42} parent=5 // pred_check
      %p407 = pneg %p406
    $region34: #{forward.42} parent=5 // pred_check_branch
      %409 = sbr.rel (%p407) target = $region36
    $region35: #{forward.42} parent=5 // pred_region
      %s410 = ssub.s32 %s8, 2
      // Predicated region
      $region37: #{forward.42} parent=35 // pred_check
        %p411 = pneg %p84
      $region38: #{forward.42} parent=35 // pred_check_branch
        %413 = sbr.rel (%p411) target = $region40
      $region39: #{forward.42} parent=35 // pred_region
        %p414 = scmp.lt.s32.totalorder %s14, 1
        %s415 = scalar_select %p414, %s14, 1
        %s416 = smul.addr %s415, 4
        %s417 = scalar_lea.vmem %s2, %s416
      $region40: #{forward.42} parent=35 // pred_fallthru
        _
    $region36: #{forward.42} parent=5 // pred_fallthru
      _
  $region6: #{forward.42} parent=0 // loop_footer
    %s12 = sadd.s32 1, %s8
  $region7: #{forward.42} parent=0 // loop_footer_branch
    %7 = sbr.rel target = $region3
  $region8: #{forward.42} parent=0 // loop_exit
    _

// kernel: forward.34
$region0: #{forward.34}
  #allocation0 [shape = 'u32[]', space=smem, size = 0x4, offset = 0x4, fixed_abs, tag = 'smem constant byte address 0x4 - core index']
  #allocation1 [shape = 'u32[72,128]{1,0:T(1,128)}', space=vmem, size = 0x9000, scoped, tag = 'internal scratch']
  #allocation2 [shape = 'f32[16,128]{1,0:T(8,128)}', space=vmem, size = 0x2000, scoped, tag = 'scratch operand']
  %s0 = inlined_call_operand.vmem [shape: bf16[16,128], index: 0, kind: input, shape index: {}]
  %s1 = inlined_call_operand.hbm [shape: bf16[128,128], index: 1, kind: input, shape index: {}]
  %s2 = inlined_call_operand.vmem [shape: f32[1,128], index: 2, kind: input, shape index: {}]
  %s3 = inlined_call_operand.vmem [shape: bf16[16,128], index: 3, kind: output, shape index: {}]
  %s4 = sld [smem:[#allocation0]]
  $region34: #{forward.34} parent=0
    _
  %s6 = ssub.s32 1, %s4
  %s7 = scalar_select 0, %s6, %s4
  $region1: #{forward.34} parent=0
    #allocation3 [shape = 'u8[32768]{0}', space=vmem, size = 0x8000, scoped, tag = 'input window, operand 1, single buffered']
    #allocation4 [shape = 's32[1]{0}', space=sflag, size = 0x4, scoped, tag = 'scoped memory for forward.34']
    %8 = vsyncpa [#allocation4], 0
    // Predicated region
    $region2: #{forward.34} parent=1 // pred_check
      _
    $region3: #{forward.34} parent=1 // pred_check_branch
      %10 = sbr.rel (0) target = $region5
    $region4: #{forward.34} parent=1 // pred_region
      _
    $region5: #{forward.34} parent=1 // pred_fallthru
      _
    // Predicated region
    $region6: #{forward.34} parent=1 // pred_check
      _
    $region7: #{forward.34} parent=1 // pred_check_branch
      %12 = sbr.rel (0) target = $region9
    $region8: #{forward.34} parent=1 // pred_region
      %14 = vsyncadd [#allocation4], 0
      %s15 = sshll.u32 %s1, 4
      %s16 = int_to_ptr.hbm [resolvable:$true] %s15
      %s17 = sshll.u32 [#allocation3], 4
      %s18 = int_to_ptr.vmem [resolvable:$true] %s17
      %23 = dma.hbm_to_vmem [thread:$0]  %s16, 1024, %s18, [#allocation4], 64, 64, 4
    $region9: #{forward.34} parent=1 // pred_fallthru
      _
    // Predicated region
    $region10: #{forward.34} parent=1 // pred_check
      _
    $region11: #{forward.34} parent=1 // pred_check_branch
      %25 = sbr.rel (0) target = $region13
    $region12: #{forward.34} parent=1 // pred_region
      _
    $region13: #{forward.34} parent=1 // pred_fallthru
      _
    // Predicated region
    $region14: #{forward.34} parent=1 // pred_check
      _
    $region15: #{forward.34} parent=1 // pred_check_branch
      %27 = sbr.rel (0) target = $region17
    $region16: #{forward.34} parent=1 // pred_region
      %29 = dma.done [#allocation4], 1024
    $region17: #{forward.34} parent=1 // pred_fallthru
      _
    %p30 = scmp.eq.s32.totalorder 0, 0
    // Predicated region
    $region18: #{forward.34} parent=1 // pred_check
      %p31 = pneg %p30
    $region19: #{forward.34} parent=1 // pred_check_branch
      %33 = sbr.rel (%p31) target = $region21
    $region20: #{forward.34} parent=1 // pred_region
      %34 = vst [vmem:[#allocation2] sm:$0xff] 0.0
      %35 = vst [vmem:[#allocation2 + $0x8] sm:$0xff] 0.0
    $region21: #{forward.34} parent=1 // pred_fallthru
      _
    %v36 = vld [vmem:[#allocation2] sm:$0xff]
    %v37 = vld [vmem:[#allocation2 + $0x8] sm:$0xff]
    %v38 = vld [vmem:[%s0] sm:$0xf]
    %v39 = vld [vmem:[%s0 + $0x4] sm:$0xf]
    %v40 = vld [vmem:[#allocation3] sm:$0xf]
    %v41 = vld [vmem:[#allocation3 + $0x4] sm:$0xf]
    %v42 = vld [vmem:[#allocation3 + $0x8] sm:$0xf]
    %v43 = vld [vmem:[#allocation3 + $0xc] sm:$0xf]
    %v44 = vld [vmem:[#allocation3 + $0x10] sm:$0xf]
    %v45 = vld [vmem:[#allocation3 + $0x14] sm:$0xf]
    %v46 = vld [vmem:[#allocation3 + $0x18] sm:$0xf]
    %v47 = vld [vmem:[#allocation3 + $0x1c] sm:$0xf]
    %v48 = vld [vmem:[#allocation3 + $0x20] sm:$0xf]
    %v49 = vld [vmem:[#allocation3 + $0x24] sm:$0xf]
    %v50 = vld [vmem:[#allocation3 + $0x28] sm:$0xf]
    %v51 = vld [vmem:[#allocation3 + $0x2c] sm:$0xf]
    %v52 = vld [vmem:[#allocation3 + $0x30] sm:$0xf]
    %v53 = vld [vmem:[#allocation3 + $0x34] sm:$0xf]
    %v54 = vld [vmem:[#allocation3 + $0x38] sm:$0xf]
    %v55 = vld [vmem:[#allocation3 + $0x3c] sm:$0xf]
    %v58 = vunpack.c.l.b16 %v38
    %v59 = vunpack.c.l.b16 %v39
    %v60 = vpack.c.b16 %v59, %v58
    %v78 = vunpack.c.l.b16 %v40
    %v79 = vunpack.c.l.b16 %v41
    %v80 = vunpack.c.l.b16 %v42
    %v81 = vunpack.c.l.b16 %v43
    %v82 = vunpack.c.l.b16 %v44
    %v83 = vunpack.c.l.b16 %v45
    %v84 = vunpack.c.l.b16 %v46
    %v85 = vunpack.c.l.b16 %v47
    %v86 = vunpack.c.l.b16 %v48
    %v87 = vunpack.c.l.b16 %v49
    %v88 = vunpack.c.l.b16 %v50
    %v89 = vunpack.c.l.b16 %v51
    %v90 = vunpack.c.l.b16 %v52
    %v91 = vunpack.c.l.b16 %v53
    %v92 = vunpack.c.l.b16 %v54
    %v93 = vunpack.c.l.b16 %v55
    %v94 = vpack.c.b16 %v79, %v78
    %v95 = vpack.c.b16 %v81, %v80
    %v96 = vpack.c.b16 %v83, %v82
    %v97 = vpack.c.b16 %v85, %v84
    %v98 = vpack.c.b16 %v87, %v86
    %v99 = vpack.c.b16 %v89, %v88
    %v100 = vpack.c.b16 %v91, %v90
    %v101 = vpack.c.b16 %v93, %v92
    %110 = vmatpush.bf16.msra.mxu0 %v101
    %111 = vmatpush.bf16.msra.mxu0 %v100
    %112 = vmatpush.bf16.msra.mxu0 %v99
    %113 = vmatpush.bf16.msra.mxu0 %v98
    %114 = vmatpush.bf16.msra.mxu0 %v97
    %115 = vmatpush.bf16.msra.mxu0 %v96
    %116 = vmatpush.bf16.msra.mxu0 %v95
    %117 = vmatpush.bf16.msra.mxu0 %v94
    %118 = vmatmul.bf16.gmra.mxu0 %v60
    %v119 = vpop.f32.mrf.mxu0
    %v120 = vadd.f32 0.0, %v119
    %v121 = vpop.f32.mrf.mxu0
    %v122 = vadd.f32 0.0, %v121
    %123 = vdwg.mxu0
    %v124 = vadd.f32 %v36, %v120
    %v125 = vadd.f32 %v37, %v122
    %126 = vst [vmem:[#allocation2] sm:$0xff] %v124
    %127 = vst [vmem:[#allocation2 + $0x8] sm:$0xff] %v125
    // Predicated region
    $region22: #{forward.34} parent=1 // pred_check
      %p128 = pneg %p30
    $region23: #{forward.34} parent=1 // pred_check_branch
      %130 = sbr.rel (%p128) target = $region25
    $region24: #{forward.34} parent=1 // pred_region
      %v131 = vld [vmem:[#allocation2] sm:$0xff]
      %v132 = vld [vmem:[#allocation2 + $0x8] sm:$0xff]
      %v133 = vld [vmem:[%s2] sm:$0x1]
      %v135 = vperm.slane %v133, 0
      %v137 = vadd.f32 %v131, %v135
      %v138 = vadd.f32 %v132, %v135
      %v139 = vmax.f32 %v137, 0.0
      %v140 = vmax.f32 %v138, 0.0
      %v141 = vpack.c.bf16 %v139, %v139
      %v142 = vpack.c.bf16 %v140, %v140
      %143 = vst [vmem:[%s3] sm:$0xf] %v141
      %144 = vst [vmem:[%s3 + $0x4] sm:$0xf] %v142
    $region25: #{forward.34} parent=1 // pred_fallthru
      _
    // Predicated region
    $region26: #{forward.34} parent=1 // pred_check
      _
    $region27: #{forward.34} parent=1 // pred_check_branch
      %146 = sbr.rel (0) target = $region29
    $region28: #{forward.34} parent=1 // pred_region
      _
    $region29: #{forward.34} parent=1 // pred_fallthru
      _
    // Predicated region
    $region30: #{forward.34} parent=1 // pred_check
      _
    $region31: #{forward.34} parent=1 // pred_check_branch
      %148 = sbr.rel (0) target = $region33
    $region32: #{forward.34} parent=1 // pred_region
      _
    $region33: #{forward.34} parent=1 // pred_fallthru
      _
    %149 = vsyncpa [#allocation4], 1

// kernel: forward.46
$region0: #{forward.46}
  #allocation0 [shape = 'u32[]', space=smem, size = 0x4, offset = 0x4, fixed_abs, tag = 'smem constant byte address 0x4 - core index']
  #allocation1 [shape = 'u32[72,128]{1,0:T(1,128)}', space=vmem, size = 0x9000, scoped, tag = 'internal scratch']
  %s0 = inlined_call_operand.vmem [shape: bf16[2,6,32], index: 0, kind: input, shape index: {}]
  %s1 = inlined_call_operand.vmem [shape: bf16[2,8,64], index: 1, kind: input, shape index: {}]
  %s2 = inlined_call_operand.vmem [shape: f32[2,1,8], index: 2, kind: input, shape index: {}]
  %s3 = inlined_call_operand.vmem [shape: bf16[2,6,32], index: 3, kind: output, shape index: {}]
  %s4 = sld [smem:[#allocation0]]
  $region45: #{forward.46} parent=0
    _
  %s6 = ssub.s32 1, %s4
  %s7 = scalar_select 0, %s6, %s4
  loop: start=0, step=1, limit=4
  $region2: #{forward.46} parent=0 // loop_pre_header
    _
  $region3: #{forward.46} parent=0 // loop_header
    %s9 = sphi 0, %s13
    %p10 = scmp.ge.s32.totalorder %s9, 4
    %s19 = sphi 0, %s21
    %s22 = sphi 0, %s19
    %s23 = sphi 0, %s22
    %s39 = sphi 0, %s23
    %s45 = sphi 0, %s47
    %s48 = sphi 0, %s45
    %s49 = sphi 0, %s48
    %s65 = sphi 0, %s49
    %s71 = sphi 0, %s73
    %s74 = sphi 0, %s71
    %s75 = sphi 0, %s74
    %s91 = sphi 0, %s75
    %s97 = sphi 0, %s99
    %s100 = sphi 0, %s97
    %s101 = sphi 0, %s100
    %s117 = sphi 0, %s101
  $region4: #{forward.46} parent=0 // loop_header_branch
    %12 = sbr.rel (%p10) target = $region8
  $region5: #{forward.46} parent=0 // loop_body
    %s14 = ssub.s32 %s9, 1
    %s15 = ssub.s32 %s9, 2
    %s16 = sadd.s32 %s9, 1
    %s17 = ssub.s32 %s9, %s16
    %p18 = scmp.eq.s32.totalorder %s17, 0
    %s20 = sadd.s32 %s19, 1
    %s21 = scalar_select %p18, %s19, %s20
    %p24 = pneg %p18
    %p25 = scmp.eq.s32.totalorder %s9, 1
    %p26 = por %p24, %p25
    %p27 = scmp.ne.s32.totalorder %s19, %s22
    %p28 = scmp.eq.s32.totalorder %s9, 0
    %p29 = por %p27, %p28
    %p30 = scmp.ne.s32.totalorder %s19, %s22
    %p31 = scmp.eq.s32.totalorder %s14, 1
    %p32 = por %p30, %p31
    %p33 = scmp.ne.s32.totalorder %s22, %s23
    %p34 = scmp.eq.s32.totalorder %s14, 0
    %p35 = por %p33, %p34
    %p36 = scmp.ne.s32.totalorder %s22, %s23
    %p37 = scmp.eq.s32.totalorder %s15, 1
    %p38 = por %p36, %p37
    %p40 = scmp.ne.s32.totalorder %s23, %s39
    %p41 = scmp.eq.s32.totalorder %s15, 0
    %p42 = por %p40, %p41
    %s43 = ssub.s32 %s9, %s16
    %p44 = scmp.eq.s32.totalorder %s43, 0
    %s46 = sadd.s32 %s45, 1
    %s47 = scalar_select %p44, %s45, %s46
    %p50 = pneg %p44
    %p51 = scmp.eq.s32.totalorder %s9, 1
    %p52 = por %p50, %p51
    %p53 = scmp.ne.s32.totalorder %s45, %s48
    %p54 = scmp.eq.s32.totalorder %s9, 0
    %p55 = por %p53, %p54
    %p56 = scmp.ne.s32.totalorder %s45, %s48
    %p57 = scmp.eq.s32.totalorder %s14, 1
    %p58 = por %p56, %p57
    %p59 = scmp.ne.s32.totalorder %s48, %s49
    %p60 = scmp.eq.s32.totalorder %s14, 0
    %p61 = por %p59, %p60
    %p62 = scmp.ne.s32.totalorder %s48, %s49
    %p63 = scmp.eq.s32.totalorder %s15, 1
    %p64 = por %p62, %p63
    %p66 = scmp.ne.s32.totalorder %s49, %s65
    %p67 = scmp.eq.s32.totalorder %s15, 0
    %p68 = por %p66, %p67
    %s69 = ssub.s32 %s9, %s16
    %p70 = scmp.eq.s32.totalorder %s69, 0
    %s72 = sadd.s32 %s71, 1
    %s73 = scalar_select %p70, %s71, %s72
    %p76 = pneg %p70
    %p77 = scmp.eq.s32.totalorder %s9, 1
    %p78 = por %p76, %p77
    %p79 = scmp.ne.s32.totalorder %s71, %s74
    %p80 = scmp.eq.s32.totalorder %s9, 0
    %p81 = por %p79, %p80
    %p82 = scmp.ne.s32.totalorder %s71, %s74
    %p83 = scmp.eq.s32.totalorder %s14, 1
    %p84 = por %p82, %p83
    %p85 = scmp.ne.s32.totalorder %s74, %s75
    %p86 = scmp.eq.s32.totalorder %s14, 0
    %p87 = por %p85, %p86
    %p88 = scmp.ne.s32.totalorder %s74, %s75
    %p89 = scmp.eq.s32.totalorder %s15, 1
    %p90 = por %p88, %p89
    %p92 = scmp.ne.s32.totalorder %s75, %s91
    %p93 = scmp.eq.s32.totalorder %s15, 0
    %p94 = por %p92, %p93
    %s95 = ssub.s32 %s9, %s16
    %p96 = scmp.eq.s32.totalorder %s95, 0
    %s98 = sadd.s32 %s97, 1
    %s99 = scalar_select %p96, %s97, %s98
    %p102 = pneg %p96
    %p103 = scmp.eq.s32.totalorder %s9, 1
    %p104 = por %p102, %p103
    %p105 = scmp.ne.s32.totalorder %s97, %s100
    %p106 = scmp.eq.s32.totalorder %s9, 0
    %p107 = por %p105, %p106
    %p108 = scmp.ne.s32.totalorder %s97, %s100
    %p109 = scmp.eq.s32.totalorder %s14, 1
    %p110 = por %p108, %p109
    %p111 = scmp.ne.s32.totalorder %s100, %s101
    %p112 = scmp.eq.s32.totalorder %s14, 0
    %p113 = por %p111, %p112
    %p114 = scmp.ne.s32.totalorder %s100, %s101
    %p115 = scmp.eq.s32.totalorder %s15, 1
    %p116 = por %p114, %p115
    %p118 = scmp.ne.s32.totalorder %s101, %s117
    %p119 = scmp.eq.s32.totalorder %s15, 0
    %p120 = por %p118, %p119
    %p121 = scmp.le.s32.totalorder 1, %s9
    %p122 = scmp.lt.s32.totalorder %s9, 3
    %p123 = pnand %p121, %p122
    %p124 = pneg %p123
    // Predicated region
    $region9: #{forward.46} parent=5 // pred_check
      _
    $region10: #{forward.46} parent=5 // pred_check_branch
      %126 = sbr.rel (%p123) target = $region12
    $region11: #{forward.46} parent=5 // pred_region
      %s127 = ssub.s32 %s9, 1
    $region12: #{forward.46} parent=5 // pred_fallthru
      _
    %p128 = scmp.lt.s32.totalorder %s9, 2
    // Predicated region
    $region13: #{forward.46} parent=5 // pred_check
      %p129 = pneg %p128
    $region14: #{forward.46} parent=5 // pred_check_branch
      %131 = sbr.rel (%p129) target = $region16
    $region15: #{forward.46} parent=5 // pred_region
      // Predicated region
      $region17: #{forward.46} parent=15 // pred_check
        %p132 = pneg %p29
      $region18: #{forward.46} parent=15 // pred_check_branch
        %134 = sbr.rel (%p132) target = $region20
      $region19: #{forward.46} parent=15 // pred_region
        %p135 = scmp.lt.s32.totalorder %s9, 1
        %s136 = scalar_select %p135, %s9, 1
        %s137 = smul.addr %s136, 4
        %s138 = scalar_lea.vmem %s0, %s137
      $region20: #{forward.46} parent=15 // pred_fallthru
        _
      // Predicated region
      $region21: #{forward.46} parent=15 // pred_check
        %p139 = pneg %p55
      $region22: #{forward.46} parent=15 // pred_check_branch
        %141 = sbr.rel (%p139) target = $region24
      $region23: #{forward.46} parent=15 // pred_region
        %p142 = scmp.lt.s32.totalorder %s9, 1
        %s143 = scalar_select %p142, %s9, 1
        %s144 = smul.addr %s143, 4
        %s145 = scalar_lea.vmem %s1, %s144
      $region24: #{forward.46} parent=15 // pred_fallthru
        _
      // Predicated region
      $region25: #{forward.46} parent=15 // pred_check
        %p146 = pneg %p81
      $region26: #{forward.46} parent=15 // pred_check_branch
        %148 = sbr.rel (%p146) target = $region28
      $region27: #{forward.46} parent=15 // pred_region
        %p149 = scmp.lt.s32.totalorder %s9, 1
        %s150 = scalar_select %p149, %s9, 1
        %s151 = scalar_lea.vmem %s2, %s150
      $region28: #{forward.46} parent=15 // pred_fallthru
        _
    $region16: #{forward.46} parent=5 // pred_fallthru
      _
    %p152 = scmp.le.s32.totalorder 1, %s9
    %p153 = scmp.lt.s32.totalorder %s9, 3
    %p154 = pnand %p152, %p153
    %p155 = pneg %p154
    // Predicated region
    $region29: #{forward.46} parent=5 // pred_check
      _
    $region30: #{forward.46} parent=5 // pred_check_branch
      %157 = sbr.rel (%p154) target = $region32
    $region31: #{forward.46} parent=5 // pred_region
      %s158 = ssub.s32 %s9, 1
      %p159 = scmp.lt.s32.totalorder %s14, 1
      %s160 = scalar_select %p159, %s14, 1
      %s161 = smul.addr %s160, 4
      %s162 = scalar_lea.vmem %s0, %s161
      %p163 = pneg %p35
      %p164 = pneg %p32
      %p165 = scmp.lt.s32.totalorder %s14, 1
      %s166 = scalar_select %p165, %s14, 1
      %s167 = smul.addr %s166, 4
      %s168 = scalar_lea.vmem %s1, %s167
      %p169 = pneg %p61
      %p170 = pneg %p58
      %p171 = scmp.lt.s32.totalorder %s14, 1
      %s172 = scalar_select %p171, %s14, 1
      %s173 = scalar_lea.vmem %s2, %s172
      %p174 = pneg %p87
      %p175 = pneg %p84
      %p176 = pneg %p113
      %p177 = pneg %p110
      %p178 = scmp.lt.s32.totalorder %s14, 1
      %s179 = scalar_select %p178, %s14, 1
      %s180 = smul.addr %s179, 4
      %s181 = scalar_lea.vmem %s3, %s180
      %p182 = scmp.lt.s32.totalorder %s14, 1
      %s183 = scalar_select %p182, %s14, 1
      %s184 = smul.addr %s183, 4
      %s185 = scalar_lea.vmem %s0, %s184
      %p186 = scmp.lt.s32.totalorder %s14, 1
      %s187 = scalar_select %p186, %s14, 1
      %s188 = smul.addr %s187, 4
      %s189 = scalar_lea.vmem %s1, %s188
      %p190 = scmp.lt.s32.totalorder %s14, 1
      %s191 = scalar_select %p190, %s14, 1
      %s192 = scalar_lea.vmem %s2, %s191
      %p193 = scmp.lt.s32.totalorder %s14, 1
      %s194 = scalar_select %p193, %s14, 1
      %s195 = smul.addr %s194, 4
      %s196 = scalar_lea.vmem %s3, %s195
      %v198 = vld [vmem:[%s189] sm:$0xf]
      %v199 = vld [vmem:[%s185] sm:$0x7]
      %v200 = vld [vmem:[%s192] sm:$0x1]
      %vm201 = vcmask 64512
      %v203 = vsel %vm201, %v199, 0
      %v206 = vsel %vm201, %v198, 0
      %208 = vmatpush.bf16.xpose.msra.mxu0 0
      %209 = vmatpush.bf16.xpose.msra.mxu0 0
      %210 = vmatpush.bf16.xpose.msra.mxu0 0
      %211 = vmatpush.bf16.xpose.msra.mxu0 0
      %212 = vmatpush.bf16.xpose.msra.mxu0 0
      %213 = vmatpush.bf16.xpose.msra.mxu0 0
      %214 = vmatpush.bf16.xpose.msra.mxu0 0
      %215 = vmatpush.bf16.xpose.msra.mxu0 %v206
      %216 = vmatmul.bf16.gmra.mxu0 %v203
      %v217 = vpop.f32.mrf.mxu0
      %v218 = vadd.f32 0.0, %v217
      %v219 = vpop.f32.mrf.mxu0
      %220 = vdwg.mxu0
      %v221 = vmul.f32 %v218, 0.35355338
      %v223 = vperm.slane %v200, 0
      %v225 = vadd.f32 %v221, %v223
      %vm226 = vcmask 62464
      %v227 = vsel %vm226, %v225, -inf
      %228 = vmax.xlane.f32.xlu0 %v227
      %v229 = vpop.xlane.xlu0 %228
      %v230 = vsub.f32 %v225, %v229
      %v231 = vmul.f32 %v230, 1.442695
      %v232 = vpow.pop %v231
      %v233 = vsel %vm226, %v232, 0.0
      %234 = vadd.xlane.f32.xlu0 %v233
      %v235 = vpop.xlane.xlu0 %234
      %v236 = vrcp.pop %v235
      %v237 = vmul.f32 %v232, %v236
      %v238 = vpack.c.bf16 %v237, %v237
      %v240 = vunpack.c.l.b16 %v198
      %v241 = vpack.c.b16 %v240, %v240
      %242 = vrot.lane.b32.xlu0 %v241, 96
      %v243 = vpop.permute.xlu0 %242
      %v245 = vsel %vm201, %v238, 0
      %vm247 = vcmask 1043456
      %v249 = vsel %vm247, %v243, 0
      %251 = vmatpush.bf16.msra.mxu0 0
      %252 = vmatpush.bf16.msra.mxu0 0
      %253 = vmatpush.bf16.msra.mxu0 0
      %254 = vmatpush.bf16.msra.mxu0 0
      %255 = vmatpush.bf16.msra.mxu0 0
      %256 = vmatpush.bf16.msra.mxu0 0
      %257 = vmatpush.bf16.msra.mxu0 0
      %258 = vmatpush.bf16.msra.mxu0 %v249
      %259 = vmatmul.bf16.gmra.mxu0 %v245
      %v260 = vpop.f32.mrf.mxu0
      %v261 = vadd.f32 0.0, %v260
      %v262 = vpop.f32.mrf.mxu0
      %263 = vdwg.mxu0
      %v265 = vunpack.c.l.b16 %v199
      %v266 = vpack.c.b16 %v265, %v265
      %267 = vrot.lane.b32.xlu0 %v266, 120
      %v268 = vpop.permute.xlu0 %267
      %269 = vrot.lane.b32.xlu0 %v241, 120
      %v270 = vpop.permute.xlu0 %269
      %v272 = vsel %vm201, %v268, 0
      %v275 = vsel %vm201, %v270, 0
      %277 = vmatpush.bf16.xpose.msra.mxu0 0
      %278 = vmatpush.bf16.xpose.msra.mxu0 0
      %279 = vmatpush.bf16.xpose.msra.mxu0 0
      %280 = vmatpush.bf16.xpose.msra.mxu0 0
      %281 = vmatpush.bf16.xpose.msra.mxu0 0
      %282 = vmatpush.bf16.xpose.msra.mxu0 0
      %283 = vmatpush.bf16.xpose.msra.mxu0 0
      %284 = vmatpush.bf16.xpose.msra.mxu0 %v275
      %285 = vmatmul.bf16.gmra.mxu0 %v272
      %v286 = vpop.f32.mrf.mxu0
      %v287 = vadd.f32 0.0, %v286
      %v288 = vpop.f32.mrf.mxu0
      %289 = vdwg.mxu0
      %v290 = vmul.f32 %v287, 0.35355338
      %v291 = vadd.f32 %v290, %v223
      %v292 = vsel %vm226, %v291, -inf
      %293 = vmax.xlane.f32.xlu0 %v292
      %v294 = vpop.xlane.xlu0 %293
      %v295 = vsub.f32 %v291, %v294
      %v296 = vmul.f32 %v295, 1.442695
      %v297 = vpow.pop %v296
      %v298 = vsel %vm226, %v297, 0.0
      %299 = vadd.xlane.f32.xlu0 %v298
      %v300 = vpop.xlane.xlu0 %299
      %v301 = vrcp.pop %v300
      %v302 = vmul.f32 %v297, %v301
      %v303 = vpack.c.bf16 %v302, %v302
      %304 = vrot.lane.b32.xlu0 %v241, 88
      %v305 = vpop.permute.xlu0 %304
      %v307 = vsel %vm201, %v303, 0
      %v310 = vsel %vm247, %v305, 0
      %312 = vmatpush.bf16.msra.mxu0 0
      %313 = vmatpush.bf16.msra.mxu0 0
      %314 = vmatpush.bf16.msra.mxu0 0
      %315 = vmatpush.bf16.msra.mxu0 0
      %316 = vmatpush.bf16.msra.mxu0 0
      %317 = vmatpush.bf16.msra.mxu0 0
      %318 = vmatpush.bf16.msra.mxu0 0
      %319 = vmatpush.bf16.msra.mxu0 %v310
      %320 = vmatmul.bf16.gmra.mxu0 %v307
      %v321 = vpop.f32.mrf.mxu0
      %v322 = vadd.f32 0.0, %v321
      %v323 = vpop.f32.mrf.mxu0
      %324 = vdwg.mxu0
      %325 = vrot.lane.b32.xlu0 %v266, 112
      %v326 = vpop.permute.xlu0 %325
      %327 = vrot.lane.b32.xlu0 %v241, 112
      %v328 = vpop.permute.xlu0 %327
      %v330 = vsel %vm201, %v326, 0
      %v333 = vsel %vm201, %v328, 0
      %335 = vmatpush.bf16.xpose.msra.mxu0 0
      %336 = vmatpush.bf16.xpose.msra.mxu0 0
      %337 = vmatpush.bf16.xpose.msra.mxu0 0
      %338 = vmatpush.bf16.xpose.msra.mxu0 0
      %339 = vmatpush.bf16.xpose.msra.mxu0 0
      %340 = vmatpush.bf16.xpose.msra.mxu0 0
      %341 = vmatpush.bf16.xpose.msra.mxu0 0
      %342 = vmatpush.bf16.xpose.msra.mxu0 %v333
      %343 = vmatmul.bf16.gmra.mxu0 %v330
      %v344 = vpop.f32.mrf.mxu0
      %v345 = vadd.f32 0.0, %v344
      %v346 = vpop.f32.mrf.mxu0
      %347 = vdwg.mxu0
      %v348 = vmul.f32 %v345, 0.35355338
      %v349 = vadd.f32 %v348, %v223
      %v350 = vsel %vm226, %v349, -inf
      %351 = vmax.xlane.f32.xlu0 %v350
      %v352 = vpop.xlane.xlu0 %351
      %v353 = vsub.f32 %v349, %v352
      %v354 = vmul.f32 %v353, 1.442695
      %v355 = vpow.pop %v354
      %v356 = vsel %vm226, %v355, 0.0
      %357 = vadd.xlane.f32.xlu0 %v356
      %v358 = vpop.xlane.xlu0 %357
      %v359 = vrcp.pop %v358
      %v360 = vmul.f32 %v355, %v359
      %v361 = vpack.c.bf16 %v360, %v360
      %362 = vrot.lane.b32.xlu0 %v241, 80
      %v363 = vpop.permute.xlu0 %362
      %v365 = vsel %vm201, %v361, 0
      %v368 = vsel %vm247, %v363, 0
      %370 = vmatpush.bf16.msra.mxu0 0
      %371 = vmatpush.bf16.msra.mxu0 0
      %372 = vmatpush.bf16.msra.mxu0 0
      %373 = vmatpush.bf16.msra.mxu0 0
      %374 = vmatpush.bf16.msra.mxu0 0
      %375 = vmatpush.bf16.msra.mxu0 0
      %376 = vmatpush.bf16.msra.mxu0 0
      %377 = vmatpush.bf16.msra.mxu0 %v368
      %378 = vmatmul.bf16.gmra.mxu0 %v365
      %v379 = vpop.f32.mrf.mxu0
      %v380 = vadd.f32 0.0, %v379
      %v381 = vpop.f32.mrf.mxu0
      %382 = vdwg.mxu0
      %383 = vrot.lane.b32.xlu0 %v266, 104
      %v384 = vpop.permute.xlu0 %383
      %385 = vrot.lane.b32.xlu0 %v241, 104
      %v386 = vpop.permute.xlu0 %385
      %v388 = vsel %vm201, %v384, 0
      %v391 = vsel %vm201, %v386, 0
      %393 = vmatpush.bf16.xpose.msra.mxu0 0
      %394 = vmatpush.bf16.xpose.msra.mxu0 0
      %395 = vmatpush.bf16.xpose.msra.mxu0 0
      %396 = vmatpush.bf16.xpose.msra.mxu0 0
      %397 = vmatpush.bf16.xpose.msra.mxu0 0
      %398 = vmatpush.bf16.xpose.msra.mxu0 0
      %399 = vmatpush.bf16.xpose.msra.mxu0 0
      %400 = vmatpush.bf16.xpose.msra.mxu0 %v391
      %401 = vmatmul.bf16.gmra.mxu0 %v388
      %v402 = vpop.f32.mrf.mxu0
      %v403 = vadd.f32 0.0, %v402
      %v404 = vpop.f32.mrf.mxu0
      %405 = vdwg.mxu0
      %v406 = vmul.f32 %v403, 0.35355338
      %v407 = vadd.f32 %v406, %v223
      %v408 = vsel %vm226, %v407, -inf
      %409 = vmax.xlane.f32.xlu0 %v408
      %v410 = vpop.xlane.xlu0 %409
      %v411 = vsub.f32 %v407, %v410
      %v412 = vmul.f32 %v411, 1.442695
      %v413 = vpow.pop %v412
      %v414 = vsel %vm226, %v413, 0.0
      %415 = vadd.xlane.f32.xlu0 %v414
      %v416 = vpop.xlane.xlu0 %415
      %v417 = vrcp.pop %v416
      %v418 = vmul.f32 %v413, %v417
      %v419 = vpack.c.bf16 %v418, %v418
      %420 = vrot.lane.b32.xlu0 %v241, 72
      %v421 = vpop.permute.xlu0 %420
      %v423 = vsel %vm201, %v419, 0
      %v426 = vsel %vm247, %v421, 0
      %428 = vmatpush.bf16.msra.mxu0 0
      %429 = vmatpush.bf16.msra.mxu0 0
      %430 = vmatpush.bf16.msra.mxu0 0
      %431 = vmatpush.bf16.msra.mxu0 0
      %432 = vmatpush.bf16.msra.mxu0 0
      %433 = vmatpush.bf16.msra.mxu0 0
      %434 = vmatpush.bf16.msra.mxu0 0
      %435 = vmatpush.bf16.msra.mxu0 %v426
      %436 = vmatmul.bf16.gmra.mxu0 %v423
      %v437 = vpop.f32.mrf.mxu0
      %v438 = vadd.f32 0.0, %v437
      %v439 = vpop.f32.mrf.mxu0
      %440 = vdwg.mxu0
      %442 = vrot.lane.b32.xlu0 %v322, 8
      %v443 = vpop.permute.xlu0 %442
      %446 = vrot.lane.b32.xlu0 %v380, 16
      %v447 = vpop.permute.xlu0 %446
      %450 = vrot.lane.b32.xlu0 %v438, 24
      %v451 = vpop.permute.xlu0 %450
      %v453 = vsel %vm201, %v261, %v443
      %vm454 = vcmask 130048
      %v455 = vsel %vm454, %v453, %v447
      %vm456 = vcmask 195584
      %v457 = vsel %vm456, %v455, %v451
      %v458 = vpack.c.bf16 %v457, %v457
      %vm459 = vcmask 256000
      %460 = vst.msk [vmem:[%s196] sm:$0x7] %vm459, %v458
      %p461 = scmp.lt.s32.totalorder %s14, 1
      %s462 = scalar_select %p461, %s14, 1
      %s463 = smul.addr %s462, 4
      %s464 = scalar_lea.vmem %s3, %s463
      // Predicated region
      $region33: #{forward.46} parent=31 // pred_check
        %p465 = pneg %p110
      $region34: #{forward.46} parent=31 // pred_check_branch
        %467 = sbr.rel (%p465) target = $region36
      $region35: #{forward.46} parent=31 // pred_region
        _
      $region36: #{forward.46} parent=31 // pred_fallthru
        _
    $region32: #{forward.46} parent=5 // pred_fallthru
      _
    %p468 = scmp.le.s32.totalorder 2, %s9
    // Predicated region
    $region37: #{forward.46} parent=5 // pred_check
      %p469 = pneg %p468
    $region38: #{forward.46} parent=5 // pred_check_branch
      %471 = sbr.rel (%p469) target = $region40
    $region39: #{forward.46} parent=5 // pred_region
      %s472 = ssub.s32 %s9, 2
      // Predicated region
      $region41: #{forward.46} parent=39 // pred_check
        %p473 = pneg %p116
      $region42: #{forward.46} parent=39 // pred_check_branch
        %475 = sbr.rel (%p473) target = $region44
      $region43: #{forward.46} parent=39 // pred_region
        %p476 = scmp.lt.s32.totalorder %s15, 1
        %s477 = scalar_select %p476, %s15, 1
        %s478 = smul.addr %s477, 4
        %s479 = scalar_lea.vmem %s3, %s478
      $region44: #{forward.46} parent=39 // pred_fallthru
        _
    $region40: #{forward.46} parent=5 // pred_fallthru
      _
  $region6: #{forward.46} parent=0 // loop_footer
    %s13 = sadd.s32 1, %s9
  $region7: #{forward.46} parent=0 // loop_footer_branch
    %8 = sbr.rel target = $region3
  $region8: #{forward.46} parent=0 // loop_exit
    _

// kernel: forward.55
$region0: #{forward.55}
  #allocation0 [shape = 'u32[]', space=smem, size = 0x4, offset = 0x4, fixed_abs, tag = 'smem constant byte address 0x4 - core index']
  #allocation1 [shape = 'u32[72,128]{1,0:T(1,128)}', space=vmem, size = 0x9000, scoped, tag = 'internal scratch']
  %s0 = inlined_call_operand.vmem [shape: bf16[2,6,32], index: 0, kind: input, shape index: {}]
  %s1 = inlined_call_operand.vmem [shape: bf16[2,8,64], index: 1, kind: input, shape index: {}]
  %s2 = inlined_call_operand.vmem [shape: f32[2,1,8], index: 2, kind: input, shape index: {}]
  %s3 = inlined_call_operand.vmem [shape: bf16[2,6,32], index: 3, kind: output, shape index: {0}]
  %s4 = inlined_call_operand.vmem [shape: f32[2,6,8], index: 4, kind: output, shape index: {1}]
  %5 = xla_tuple %s3, %s4
  %s6 = sld [smem:[#allocation0]]
  $region53: #{forward.55} parent=0
    _
  %s8 = ssub.s32 1, %s6
  %s9 = scalar_select 0, %s8, %s6
  loop: start=0, step=1, limit=4
  $region2: #{forward.55} parent=0 // loop_pre_header
    _
  $region3: #{forward.55} parent=0 // loop_header
    %s11 = sphi 0, %s15
    %p12 = scmp.ge.s32.totalorder %s11, 4
    %s21 = sphi 0, %s23
    %s24 = sphi 0, %s21
    %s25 = sphi 0, %s24
    %s41 = sphi 0, %s25
    %s47 = sphi 0, %s49
    %s50 = sphi 0, %s47
    %s51 = sphi 0, %s50
    %s67 = sphi 0, %s51
    %s73 = sphi 0, %s75
    %s76 = sphi 0, %s73
    %s77 = sphi 0, %s76
    %s93 = sphi 0, %s77
    %s99 = sphi 0, %s101
    %s102 = sphi 0, %s99
    %s103 = sphi 0, %s102
    %s119 = sphi 0, %s103
    %s125 = sphi 0, %s127
    %s128 = sphi 0, %s125
    %s129 = sphi 0, %s128
    %s145 = sphi 0, %s129
  $region4: #{forward.55} parent=0 // loop_header_branch
    %14 = sbr.rel (%p12) target = $region8
  $region5: #{forward.55} parent=0 // loop_body
    %s16 = ssub.s32 %s11, 1
    %s17 = ssub.s32 %s11, 2
    %s18 = sadd.s32 %s11, 1
    %s19 = ssub.s32 %s11, %s18
    %p20 = scmp.eq.s32.totalorder %s19, 0
    %s22 = sadd.s32 %s21, 1
    %s23 = scalar_select %p20, %s21, %s22
    %p26 = pneg %p20
    %p27 = scmp.eq.s32.totalorder %s11, 1
    %p28 = por %p26, %p27
    %p29 = scmp.ne.s32.totalorder %s21, %s24
    %p30 = scmp.eq.s32.totalorder %s11, 0
    %p31 = por %p29, %p30
    %p32 = scmp.ne.s32.totalorder %s21, %s24
    %p33 = scmp.eq.s32.totalorder %s16, 1
    %p34 = por %p32, %p33
    %p35 = scmp.ne.s32.totalorder %s24, %s25
    %p36 = scmp.eq.s32.totalorder %s16, 0
    %p37 = por %p35, %p36
    %p38 = scmp.ne.s32.totalorder %s24, %s25
    %p39 = scmp.eq.s32.totalorder %s17, 1
    %p40 = por %p38, %p39
    %p42 = scmp.ne.s32.totalorder %s25, %s41
    %p43 = scmp.eq.s32.totalorder %s17, 0
    %p44 = por %p42, %p43
    %s45 = ssub.s32 %s11, %s18
    %p46 = scmp.eq.s32.totalorder %s45, 0
    %s48 = sadd.s32 %s47, 1
    %s49 = scalar_select %p46, %s47, %s48
    %p52 = pneg %p46
    %p53 = scmp.eq.s32.totalorder %s11, 1
    %p54 = por %p52, %p53
    %p55 = scmp.ne.s32.totalorder %s47, %s50
    %p56 = scmp.eq.s32.totalorder %s11, 0
    %p57 = por %p55, %p56
    %p58 = scmp.ne.s32.totalorder %s47, %s50
    %p59 = scmp.eq.s32.totalorder %s16, 1
    %p60 = por %p58, %p59
    %p61 = scmp.ne.s32.totalorder %s50, %s51
    %p62 = scmp.eq.s32.totalorder %s16, 0
    %p63 = por %p61, %p62
    %p64 = scmp.ne.s32.totalorder %s50, %s51
    %p65 = scmp.eq.s32.totalorder %s17, 1
    %p66 = por %p64, %p65
    %p68 = scmp.ne.s32.totalorder %s51, %s67
    %p69 = scmp.eq.s32.totalorder %s17, 0
    %p70 = por %p68, %p69
    %s71 = ssub.s32 %s11, %s18
    %p72 = scmp.eq.s32.totalorder %s71, 0
    %s74 = sadd.s32 %s73, 1
    %s75 = scalar_select %p72, %s73, %s74
    %p78 = pneg %p72
    %p79 = scmp.eq.s32.totalorder %s11, 1
    %p80 = por %p78, %p79
    %p81 = scmp.ne.s32.totalorder %s73, %s76
    %p82 = scmp.eq.s32.totalorder %s11, 0
    %p83 = por %p81, %p82
    %p84 = scmp.ne.s32.totalorder %s73, %s76
    %p85 = scmp.eq.s32.totalorder %s16, 1
    %p86 = por %p84, %p85
    %p87 = scmp.ne.s32.totalorder %s76, %s77
    %p88 = scmp.eq.s32.totalorder %s16, 0
    %p89 = por %p87, %p88
    %p90 = scmp.ne.s32.totalorder %s76, %s77
    %p91 = scmp.eq.s32.totalorder %s17, 1
    %p92 = por %p90, %p91
    %p94 = scmp.ne.s32.totalorder %s77, %s93
    %p95 = scmp.eq.s32.totalorder %s17, 0
    %p96 = por %p94, %p95
    %s97 = ssub.s32 %s11, %s18
    %p98 = scmp.eq.s32.totalorder %s97, 0
    %s100 = sadd.s32 %s99, 1
    %s101 = scalar_select %p98, %s99, %s100
    %p104 = pneg %p98
    %p105 = scmp.eq.s32.totalorder %s11, 1
    %p106 = por %p104, %p105
    %p107 = scmp.ne.s32.totalorder %s99, %s102
    %p108 = scmp.eq.s32.totalorder %s11, 0
    %p109 = por %p107, %p108
    %p110 = scmp.ne.s32.totalorder %s99, %s102
    %p111 = scmp.eq.s32.totalorder %s16, 1
    %p112 = por %p110, %p111
    %p113 = scmp.ne.s32.totalorder %s102, %s103
    %p114 = scmp.eq.s32.totalorder %s16, 0
    %p115 = por %p113, %p114
    %p116 = scmp.ne.s32.totalorder %s102, %s103
    %p117 = scmp.eq.s32.totalorder %s17, 1
    %p118 = por %p116, %p117
    %p120 = scmp.ne.s32.totalorder %s103, %s119
    %p121 = scmp.eq.s32.totalorder %s17, 0
    %p122 = por %p120, %p121
    %s123 = ssub.s32 %s11, %s18
    %p124 = scmp.eq.s32.totalorder %s123, 0
    %s126 = sadd.s32 %s125, 1
    %s127 = scalar_select %p124, %s125, %s126
    %p130 = pneg %p124
    %p131 = scmp.eq.s32.totalorder %s11, 1
    %p132 = por %p130, %p131
    %p133 = scmp.ne.s32.totalorder %s125, %s128
    %p134 = scmp.eq.s32.totalorder %s11, 0
    %p135 = por %p133, %p134
    %p136 = scmp.ne.s32.totalorder %s125, %s128
    %p137 = scmp.eq.s32.totalorder %s16, 1
    %p138 = por %p136, %p137
    %p139 = scmp.ne.s32.totalorder %s128, %s129
    %p140 = scmp.eq.s32.totalorder %s16, 0
    %p141 = por %p139, %p140
    %p142 = scmp.ne.s32.totalorder %s128, %s129
    %p143 = scmp.eq.s32.totalorder %s17, 1
    %p144 = por %p142, %p143
    %p146 = scmp.ne.s32.totalorder %s129, %s145
    %p147 = scmp.eq.s32.totalorder %s17, 0
    %p148 = por %p146, %p147
    %p149 = scmp.le.s32.totalorder 1, %s11
    %p150 = scmp.lt.s32.totalorder %s11, 3
    %p151 = pnand %p149, %p150
    %p152 = pneg %p151
    // Predicated region
    $region9: #{forward.55} parent=5 // pred_check
      _
    $region10: #{forward.55} parent=5 // pred_check_branch
      %154 = sbr.rel (%p151) target = $region12
    $region11: #{forward.55} parent=5 // pred_region
      %s155 = ssub.s32 %s11, 1
    $region12: #{forward.55} parent=5 // pred_fallthru
      _
    %p156 = scmp.lt.s32.totalorder %s11, 2
    // Predicated region
    $region13: #{forward.55} parent=5 // pred_check
      %p157 = pneg %p156
    $region14: #{forward.55} parent=5 // pred_check_branch
      %159 = sbr.rel (%p157) target = $region16
    $region15: #{forward.55} parent=5 // pred_region
      // Predicated region
      $region17: #{forward.55} parent=15 // pred_check
        %p160 = pneg %p31
      $region18: #{forward.55} parent=15 // pred_check_branch
        %162 = sbr.rel (%p160) target = $region20
      $region19: #{forward.55} parent=15 // pred_region
        %p163 = scmp.lt.s32.totalorder %s11, 1
        %s164 = scalar_select %p163, %s11, 1
        %s165 = smul.addr %s164, 4
        %s166 = scalar_lea.vmem %s0, %s165
      $region20: #{forward.55} parent=15 // pred_fallthru
        _
      // Predicated region
      $region21: #{forward.55} parent=15 // pred_check
        %p167 = pneg %p57
      $region22: #{forward.55} parent=15 // pred_check_branch
        %169 = sbr.rel (%p167) target = $region24
      $region23: #{forward.55} parent=15 // pred_region
        %p170 = scmp.lt.s32.totalorder %s11, 1
        %s171 = scalar_select %p170, %s11, 1
        %s172 = smul.addr %s171, 4
        %s173 = scalar_lea.vmem %s1, %s172
      $region24: #{forward.55} parent=15 // pred_fallthru
        _
      // Predicated region
      $region25: #{forward.55} parent=15 // pred_check
        %p174 = pneg %p83
      $region26: #{forward.55} parent=15 // pred_check_branch
        %176 = sbr.rel (%p174) target = $region28
      $region27: #{forward.55} parent=15 // pred_region
        %p177 = scmp.lt.s32.totalorder %s11, 1
        %s178 = scalar_select %p177, %s11, 1
        %s179 = scalar_lea.vmem %s2, %s178
      $region28: #{forward.55} parent=15 // pred_fallthru
        _
    $region16: #{forward.55} parent=5 // pred_fallthru
      _
    %p180 = scmp.le.s32.totalorder 1, %s11
    %p181 = scmp.lt.s32.totalorder %s11, 3
    %p182 = pnand %p180, %p181
    %p183 = pneg %p182
    // Predicated region
    $region29: #{forward.55} parent=5 // pred_check
      _
    $region30: #{forward.55} parent=5 // pred_check_branch
      %185 = sbr.rel (%p182) target = $region32
    $region31: #{forward.55} parent=5 // pred_region
      %s186 = ssub.s32 %s11, 1
      %p187 = scmp.lt.s32.totalorder %s16, 1
      %s188 = scalar_select %p187, %s16, 1
      %s189 = smul.addr %s188, 4
      %s190 = scalar_lea.vmem %s0, %s189
      %p191 = pneg %p37
      %p192 = pneg %p34
      %p193 = scmp.lt.s32.totalorder %s16, 1
      %s194 = scalar_select %p193, %s16, 1
      %s195 = smul.addr %s194, 4
      %s196 = scalar_lea.vmem %s1, %s195
      %p197 = pneg %p63
      %p198 = pneg %p60
      %p199 = scmp.lt.s32.totalorder %s16, 1
      %s200 = scalar_select %p199, %s16, 1
      %s201 = scalar_lea.vmem %s2, %s200
      %p202 = pneg %p89
      %p203 = pneg %p86
      %p204 = pneg %p115
      %p205 = pneg %p112
      %p206 = scmp.lt.s32.totalorder %s16, 1
      %s207 = scalar_select %p206, %s16, 1
      %s208 = smul.addr %s207, 4
      %s209 = scalar_lea.vmem %s3, %s208
      %p210 = pneg %p141
      %p211 = pneg %p138
      %p212 = scmp.lt.s32.totalorder %s16, 1
      %s213 = scalar_select %p212, %s16, 1
      %s214 = smul.addr %s213, 8
      %s215 = scalar_lea.vmem %s4, %s214
      %p216 = scmp.lt.s32.totalorder %s16, 1
      %s217 = scalar_select %p216, %s16, 1
      %s218 = smul.addr %s217, 4
      %s219 = scalar_lea.vmem %s0, %s218
      %p220 = scmp.lt.s32.totalorder %s16, 1
      %s221 = scalar_select %p220, %s16, 1
      %s222 = smul.addr %s221, 4
      %s223 = scalar_lea.vmem %s1, %s222
      %p224 = scmp.lt.s32.totalorder %s16, 1
      %s225 = scalar_select %p224, %s16, 1
      %s226 = scalar_lea.vmem %s2, %s225
      %p227 = scmp.lt.s32.totalorder %s16, 1
      %s228 = scalar_select %p227, %s16, 1
      %s229 = smul.addr %s228, 4
      %s230 = scalar_lea.vmem %s3, %s229
      %p231 = scmp.lt.s32.totalorder %s16, 1
      %s232 = scalar_select %p231, %s16, 1
      %s233 = smul.addr %s232, 8
      %s234 = scalar_lea.vmem %s4, %s233
      %v236 = vld [vmem:[%s223] sm:$0xf]
      %v237 = vld [vmem:[%s219] sm:$0x7]
      %v238 = vld [vmem:[%s226] sm:$0x1]
      %vm239 = vcmask 64512
      %v241 = vsel %vm239, %v237, 0
      %v244 = vsel %vm239, %v236, 0
      %246 = vmatpush.bf16.xpose.msra.mxu0 0
      %247 = vmatpush.bf16.xpose.msra.mxu0 0
      %248 = vmatpush.bf16.xpose.msra.mxu0 0
      %249 = vmatpush.bf16.xpose.msra.mxu0 0
      %250 = vmatpush.bf16.xpose.msra.mxu0 0
      %251 = vmatpush.bf16.xpose.msra.mxu0 0
      %252 = vmatpush.bf16.xpose.msra.mxu0 0
      %253 = vmatpush.bf16.xpose.msra.mxu0 %v244
      %254 = vmatmul.bf16.gmra.mxu0 %v241
      %v255 = vpop.f32.mrf.mxu0
      %v256 = vadd.f32 0.0, %v255
      %v257 = vpop.f32.mrf.mxu0
      %258 = vdwg.mxu0
      %v259 = vmul.f32 %v256, 0.35355338
      %v261 = vperm.slane %v238, 0
      %v263 = vadd.f32 %v259, %v261
      %vm264 = vcmask 62464
      %v265 = vsel %vm264, %v263, -inf
      %266 = vmax.xlane.f32.xlu0 %v265
      %v267 = vpop.xlane.xlu0 %266
      %v268 = vsub.f32 %v263, %v267
      %v269 = vmul.f32 %v268, 1.442695
      %v270 = vpow.pop %v269
      %v271 = vsel %vm264, %v270, 0.0
      %272 = vadd.xlane.f32.xlu0 %v271
      %v273 = vpop.xlane.xlu0 %272
      %v274 = vrcp.pop %v273
      %v275 = vmul.f32 %v270, %v274
      %v276 = vpack.c.bf16 %v275, %v275
      %v278 = vunpack.c.l.b16 %v236
      %v279 = vpack.c.b16 %v278, %v278
      %280 = vrot.lane.b32.xlu0 %v279, 96
      %v281 = vpop.permute.xlu0 %280
      %v283 = vsel %vm239, %v276, 0
      %vm285 = vcmask 1043456
      %v287 = vsel %vm285, %v281, 0
      %289 = vmatpush.bf16.msra.mxu0 0
      %290 = vmatpush.bf16.msra.mxu0 0
      %291 = vmatpush.bf16.msra.mxu0 0
      %292 = vmatpush.bf16.msra.mxu0 0
      %293 = vmatpush.bf16.msra.mxu0 0
      %294 = vmatpush.bf16.msra.mxu0 0
      %295 = vmatpush.bf16.msra.mxu0 0
      %296 = vmatpush.bf16.msra.mxu0 %v287
      %297 = vmatmul.bf16.gmra.mxu0 %v283
      %v298 = vpop.f32.mrf.mxu0
      %v299 = vadd.f32 0.0, %v298
      %v300 = vpop.f32.mrf.mxu0
      %301 = vdwg.mxu0
      %v303 = vunpack.c.l.b16 %v237
      %v304 = vpack.c.b16 %v303, %v303
      %305 = vrot.lane.b32.xlu0 %v304, 120
      %v306 = vpop.permute.xlu0 %305
      %307 = vrot.lane.b32.xlu0 %v279, 120
      %v308 = vpop.permute.xlu0 %307
      %v310 = vsel %vm239, %v306, 0
      %v313 = vsel %vm239, %v308, 0
      %315 = vmatpush.bf16.xpose.msra.mxu0 0
      %316 = vmatpush.bf16.xpose.msra.mxu0 0
      %317 = vmatpush.bf16.xpose.msra.mxu0 0
      %318 = vmatpush.bf16.xpose.msra.mxu0 0
      %319 = vmatpush.bf16.xpose.msra.mxu0 0
      %320 = vmatpush.bf16.xpose.msra.mxu0 0
      %321 = vmatpush.bf16.xpose.msra.mxu0 0
      %322 = vmatpush.bf16.xpose.msra.mxu0 %v313
      %323 = vmatmul.bf16.gmra.mxu0 %v310
      %v324 = vpop.f32.mrf.mxu0
      %v325 = vadd.f32 0.0, %v324
      %v326 = vpop.f32.mrf.mxu0
      %327 = vdwg.mxu0
      %v328 = vmul.f32 %v325, 0.35355338
      %v329 = vadd.f32 %v328, %v261
      %v330 = vsel %vm264, %v329, -inf
      %331 = vmax.xlane.f32.xlu0 %v330
      %v332 = vpop.xlane.xlu0 %331
      %v333 = vsub.f32 %v329, %v332
      %v334 = vmul.f32 %v333, 1.442695
      %v335 = vpow.pop %v334
      %v336 = vsel %vm264, %v335, 0.0
      %337 = vadd.xlane.f32.xlu0 %v336
      %v338 = vpop.xlane.xlu0 %337
      %v339 = vrcp.pop %v338
      %v340 = vmul.f32 %v335, %v339
      %v341 = vpack.c.bf16 %v340, %v340
      %342 = vrot.lane.b32.xlu0 %v279, 88
      %v343 = vpop.permute.xlu0 %342
      %v345 = vsel %vm239, %v341, 0
      %v348 = vsel %vm285, %v343, 0
      %350 = vmatpush.bf16.msra.mxu0 0
      %351 = vmatpush.bf16.msra.mxu0 0
      %352 = vmatpush.bf16.msra.mxu0 0
      %353 = vmatpush.bf16.msra.mxu0 0
      %354 = vmatpush.bf16.msra.mxu0 0
      %355 = vmatpush.bf16.msra.mxu0 0
      %356 = vmatpush.bf16.msra.mxu0 0
      %357 = vmatpush.bf16.msra.mxu0 %v348
      %358 = vmatmul.bf16.gmra.mxu0 %v345
      %v359 = vpop.f32.mrf.mxu0
      %v360 = vadd.f32 0.0, %v359
      %v361 = vpop.f32.mrf.mxu0
      %362 = vdwg.mxu0
      %v363 = vadd.f32 %v275, %v340
      %364 = vrot.lane.b32.xlu0 %v304, 112
      %v365 = vpop.permute.xlu0 %364
      %366 = vrot.lane.b32.xlu0 %v279, 112
      %v367 = vpop.permute.xlu0 %366
      %v369 = vsel %vm239, %v365, 0
      %v372 = vsel %vm239, %v367, 0
      %374 = vmatpush.bf16.xpose.msra.mxu0 0
      %375 = vmatpush.bf16.xpose.msra.mxu0 0
      %376 = vmatpush.bf16.xpose.msra.mxu0 0
      %377 = vmatpush.bf16.xpose.msra.mxu0 0
      %378 = vmatpush.bf16.xpose.msra.mxu0 0
      %379 = vmatpush.bf16.xpose.msra.mxu0 0
      %380 = vmatpush.bf16.xpose.msra.mxu0 0
      %381 = vmatpush.bf16.xpose.msra.mxu0 %v372
      %382 = vmatmul.bf16.gmra.mxu0 %v369
      %v383 = vpop.f32.mrf.mxu0
      %v384 = vadd.f32 0.0, %v383
      %v385 = vpop.f32.mrf.mxu0
      %386 = vdwg.mxu0
      %v387 = vmul.f32 %v384, 0.35355338
      %v388 = vadd.f32 %v387, %v261
      %v389 = vsel %vm264, %v388, -inf
      %390 = vmax.xlane.f32.xlu0 %v389
      %v391 = vpop.xlane.xlu0 %390
      %v392 = vsub.f32 %v388, %v391
      %v393 = vmul.f32 %v392, 1.442695
      %v394 = vpow.pop %v393
      %v395 = vsel %vm264, %v394, 0.0
      %396 = vadd.xlane.f32.xlu0 %v395
      %v397 = vpop.xlane.xlu0 %396
      %v398 = vrcp.pop %v397
      %v399 = vmul.f32 %v394, %v398
      %v400 = vpack.c.bf16 %v399, %v399
      %401 = vrot.lane.b32.xlu0 %v279, 80
      %v402 = vpop.permute.xlu0 %401
      %v404 = vsel %vm239, %v400, 0
      %v407 = vsel %vm285, %v402, 0
      %409 = vmatpush.bf16.msra.mxu0 0
      %410 = vmatpush.bf16.msra.mxu0 0
      %411 = vmatpush.bf16.msra.mxu0 0
      %412 = vmatpush.bf16.msra.mxu0 0
      %413 = vmatpush.bf16.msra.mxu0 0
      %414 = vmatpush.bf16.msra.mxu0 0
      %415 = vmatpush.bf16.msra.mxu0 0
      %416 = vmatpush.bf16.msra.mxu0 %v407
      %417 = vmatmul.bf16.gmra.mxu0 %v404
      %v418 = vpop.f32.mrf.mxu0
      %v419 = vadd.f32 0.0, %v418
      %v420 = vpop.f32.mrf.mxu0
      %421 = vdwg.mxu0
      %v422 = vadd.f32 %v363, %v399
      %423 = vrot.lane.b32.xlu0 %v304, 104
      %v424 = vpop.permute.xlu0 %423
      %425 = vrot.lane.b32.xlu0 %v279, 104
      %v426 = vpop.permute.xlu0 %425
      %v428 = vsel %vm239, %v424, 0
      %v431 = vsel %vm239, %v426, 0
      %433 = vmatpush.bf16.xpose.msra.mxu0 0
      %434 = vmatpush.bf16.xpose.msra.mxu0 0
      %435 = vmatpush.bf16.xpose.msra.mxu0 0
      %436 = vmatpush.bf16.xpose.msra.mxu0 0
      %437 = vmatpush.bf16.xpose.msra.mxu0 0
      %438 = vmatpush.bf16.xpose.msra.mxu0 0
      %439 = vmatpush.bf16.xpose.msra.mxu0 0
      %440 = vmatpush.bf16.xpose.msra.mxu0 %v431
      %441 = vmatmul.bf16.gmra.mxu0 %v428
      %v442 = vpop.f32.mrf.mxu0
      %v443 = vadd.f32 0.0, %v442
      %v444 = vpop.f32.mrf.mxu0
      %445 = vdwg.mxu0
      %v446 = vmul.f32 %v443, 0.35355338
      %v447 = vadd.f32 %v446, %v261
      %v448 = vsel %vm264, %v447, -inf
      %449 = vmax.xlane.f32.xlu0 %v448
      %v450 = vpop.xlane.xlu0 %449
      %v451 = vsub.f32 %v447, %v450
      %v452 = vmul.f32 %v451, 1.442695
      %v453 = vpow.pop %v452
      %v454 = vsel %vm264, %v453, 0.0
      %455 = vadd.xlane.f32.xlu0 %v454
      %v456 = vpop.xlane.xlu0 %455
      %v457 = vrcp.pop %v456
      %v458 = vmul.f32 %v453, %v457
      %v459 = vpack.c.bf16 %v458, %v458
      %460 = vrot.lane.b32.xlu0 %v279, 72
      %v461 = vpop.permute.xlu0 %460
      %v463 = vsel %vm239, %v459, 0
      %v466 = vsel %vm285, %v461, 0
      %468 = vmatpush.bf16.msra.mxu0 0
      %469 = vmatpush.bf16.msra.mxu0 0
      %470 = vmatpush.bf16.msra.mxu0 0
      %471 = vmatpush.bf16.msra.mxu0 0
      %472 = vmatpush.bf16.msra.mxu0 0
      %473 = vmatpush.bf16.msra.mxu0 0
      %474 = vmatpush.bf16.msra.mxu0 0
      %475 = vmatpush.bf16.msra.mxu0 %v466
      %476 = vmatmul.bf16.gmra.mxu0 %v463
      %v477 = vpop.f32.mrf.mxu0
      %v478 = vadd.f32 0.0, %v477
      %v479 = vpop.f32.mrf.mxu0
      %480 = vdwg.mxu0
      %v481 = vadd.f32 %v422, %v458
      %483 = vrot.lane.b32.xlu0 %v360, 8
      %v484 = vpop.permute.xlu0 %483
      %487 = vrot.lane.b32.xlu0 %v419, 16
      %v488 = vpop.permute.xlu0 %487
      %491 = vrot.lane.b32.xlu0 %v478, 24
      %v492 = vpop.permute.xlu0 %491
      %v494 = vsel %vm239, %v299, %v484
      %vm495 = vcmask 130048
      %v496 = vsel %vm495, %v494, %v488
      %vm497 = vcmask 195584
      %v498 = vsel %vm497, %v496, %v492
      %v499 = vpack.c.bf16 %v498, %v498
      %vm500 = vcmask 256000
      %501 = vst.msk [vmem:[%s230] sm:$0x7] %vm500, %v499
      %v502 = vmul.f32 %v481, 0.25
      %503 = vst.msk [vmem:[%s234] sm:$0x3f] %vm264, %v502
      %p504 = scmp.lt.s32.totalorder %s16, 1
      %s505 = scalar_select %p504, %s16, 1
      %s506 = smul.addr %s505, 4
      %s507 = scalar_lea.vmem %s3, %s506
      %p508 = scmp.lt.s32.totalorder %s16, 1
      %s509 = scalar_select %p508, %s16, 1
      %s510 = smul.addr %s509, 8
      %s511 = scalar_lea.vmem %s4, %s510
      // Predicated region
      $region33: #{forward.55} parent=31 // pred_check
        %p512 = pneg %p112
      $region34: #{forward.55} parent=31 // pred_check_branch
        %514 = sbr.rel (%p512) target = $region36
      $region35: #{forward.55} parent=31 // pred_region
        _
      $region36: #{forward.55} parent=31 // pred_fallthru
        _
      // Predicated region
      $region37: #{forward.55} parent=31 // pred_check
        %p515 = pneg %p138
      $region38: #{forward.55} parent=31 // pred_check_branch
        %517 = sbr.rel (%p515) target = $region40
      $region39: #{forward.55} parent=31 // pred_region
        _
      $region40: #{forward.55} parent=31 // pred_fallthru
        _
    $region32: #{forward.55} parent=5 // pred_fallthru
      _
    %p518 = scmp.le.s32.totalorder 2, %s11
    // Predicated region
    $region41: #{forward.55} parent=5 // pred_check
      %p519 = pneg %p518
    $region42: #{forward.55} parent=5 // pred_check_branch
      %521 = sbr.rel (%p519) target = $region44
    $region43: #{forward.55} parent=5 // pred_region
      %s522 = ssub.s32 %s11, 2
      // Predicated region
      $region45: #{forward.55} parent=43 // pred_check
        %p523 = pneg %p118
      $region46: #{forward.55} parent=43 // pred_check_branch
        %525 = sbr.rel (%p523) target = $region48
      $region47: #{forward.55} parent=43 // pred_region
        %p526 = scmp.lt.s32.totalorder %s17, 1
        %s527 = scalar_select %p526, %s17, 1
        %s528 = smul.addr %s527, 4
        %s529 = scalar_lea.vmem %s3, %s528
      $region48: #{forward.55} parent=43 // pred_fallthru
        _
      // Predicated region
      $region49: #{forward.55} parent=43 // pred_check
        %p530 = pneg %p144
      $region50: #{forward.55} parent=43 // pred_check_branch
        %532 = sbr.rel (%p530) target = $region52
      $region51: #{forward.55} parent=43 // pred_region
        %p533 = scmp.lt.s32.totalorder %s17, 1
        %s534 = scalar_select %p533, %s17, 1
        %s535 = smul.addr %s534, 8
        %s536 = scalar_lea.vmem %s4, %s535
      $region52: #{forward.55} parent=43 // pred_fallthru
        _
    $region44: #{forward.55} parent=5 // pred_fallthru
      _
  $region6: #{forward.55} parent=0 // loop_footer
    %s15 = sadd.s32 1, %s11
  $region7: #{forward.55} parent=0 // loop_footer_branch
    %10 = sbr.rel target = $region3
  $region8: #{forward.55} parent=0 // loop_exit
    _

// kernel: forward.60
$region0: #{forward.60}
  #allocation0 [shape = 'u32[]', space=smem, size = 0x4, offset = 0x4, fixed_abs, tag = 'smem constant byte address 0x4 - core index']
  #allocation1 [shape = 'u32[72,128]{1,0:T(1,128)}', space=vmem, size = 0x9000, scoped, tag = 'internal scratch']
  #allocation2 [shape = 'f32[1,1]{1,0:T(1,128)S(1)}', space=vmem, size = 0x200, scoped, tag = 'scoped memory for forward.60']
  %s0 = inlined_call_operand.vmem [shape: f32[2,6,8], index: 0, kind: input, shape index: {}]
  %s1 = inlined_call_operand.vmem [shape: f32[2,8,32], index: 1, kind: input, shape index: {}]
  %s2 = inlined_call_operand.vmem [shape: f32[2,6,32], index: 2, kind: input, shape index: {}]
  %s3 = inlined_call_operand.vmem [shape: f32[2,6,32], index: 3, kind: input, shape index: {}]
  %s4 = inlined_call_operand.vmem [shape: f32[96,1], index: 4, kind: input, shape index: {}]
  %s5 = inlined_call_operand.<no memory space> [shape: f32[1,1], index: 5, kind: input, shape index: {}]
  %s6 = inlined_call_operand.vmem [shape: f32[2,6,1], index: 6, kind: output, shape index: {}]
  %s7 = sld [smem:[#allocation0]]
  $region57: #{forward.60} parent=0
    _
  %s9 = ssub.s32 1, %s7
  %s10 = scalar_select 0, %s9, %s7
  %v11 = vstv %s5
  %12 = vst [vmem:[#allocation2] sm:$0x1] %v11
  loop: start=0, step=1, limit=4
  $region2: #{forward.60} parent=0 // loop_pre_header
    _
  $region3: #{forward.60} parent=0 // loop_header
    %s14 = sphi 0, %s18
    %p15 = scmp.ge.s32.totalorder %s14, 4
    %s24 = sphi 0, %s26
    %s27 = sphi 0, %s24
    %s28 = sphi 0, %s27
    %s44 = sphi 0, %s28
    %s50 = sphi 0, %s52
    %s53 = sphi 0, %s50
    %s54 = sphi 0, %s53
    %s70 = sphi 0, %s54
    %s76 = sphi 0, %s78
    %s79 = sphi 0, %s76
    %s80 = sphi 0, %s79
    %s96 = sphi 0, %s80
    %s102 = sphi 0, %s104
    %s105 = sphi 0, %s102
    %s106 = sphi 0, %s105
    %s122 = sphi 0, %s106
    %s126 = sphi 0, %s126
    %s128 = sphi 0, %s126
    %s129 = sphi 0, %s128
    %s143 = sphi 0, %s129
    %s147 = sphi 0, %s147
    %s149 = sphi 0, %s147
    %s150 = sphi 0, %s149
    %s164 = sphi 0, %s150
    %s170 = sphi 0, %s172
    %s173 = sphi 0, %s170
    %s174 = sphi 0, %s173
    %s190 = sphi 0, %s174
  $region4: #{forward.60} parent=0 // loop_header_branch
    %17 = sbr.rel (%p15) target = $region8
  $region5: #{forward.60} parent=0 // loop_body
    %s19 = ssub.s32 %s14, 1
    %s20 = ssub.s32 %s14, 2
    %s21 = sadd.s32 %s14, 1
    %s22 = ssub.s32 %s14, %s21
    %p23 = scmp.eq.s32.totalorder %s22, 0
    %s25 = sadd.s32 %s24, 1
    %s26 = scalar_select %p23, %s24, %s25
    %p29 = pneg %p23
    %p30 = scmp.eq.s32.totalorder %s14, 1
    %p31 = por %p29, %p30
    %p32 = scmp.ne.s32.totalorder %s24, %s27
    %p33 = scmp.eq.s32.totalorder %s14, 0
    %p34 = por %p32, %p33
    %p35 = scmp.ne.s32.totalorder %s24, %s27
    %p36 = scmp.eq.s32.totalorder %s19, 1
    %p37 = por %p35, %p36
    %p38 = scmp.ne.s32.totalorder %s27, %s28
    %p39 = scmp.eq.s32.totalorder %s19, 0
    %p40 = por %p38, %p39
    %p41 = scmp.ne.s32.totalorder %s27, %s28
    %p42 = scmp.eq.s32.totalorder %s20, 1
    %p43 = por %p41, %p42
    %p45 = scmp.ne.s32.totalorder %s28, %s44
    %p46 = scmp.eq.s32.totalorder %s20, 0
    %p47 = por %p45, %p46
    %s48 = ssub.s32 %s14, %s21
    %p49 = scmp.eq.s32.totalorder %s48, 0
    %s51 = sadd.s32 %s50, 1
    %s52 = scalar_select %p49, %s50, %s51
    %p55 = pneg %p49
    %p56 = scmp.eq.s32.totalorder %s14, 1
    %p57 = por %p55, %p56
    %p58 = scmp.ne.s32.totalorder %s50, %s53
    %p59 = scmp.eq.s32.totalorder %s14, 0
    %p60 = por %p58, %p59
    %p61 = scmp.ne.s32.totalorder %s50, %s53
    %p62 = scmp.eq.s32.totalorder %s19, 1
    %p63 = por %p61, %p62
    %p64 = scmp.ne.s32.totalorder %s53, %s54
    %p65 = scmp.eq.s32.totalorder %s19, 0
    %p66 = por %p64, %p65
    %p67 = scmp.ne.s32.totalorder %s53, %s54
    %p68 = scmp.eq.s32.totalorder %s20, 1
    %p69 = por %p67, %p68
    %p71 = scmp.ne.s32.totalorder %s54, %s70
    %p72 = scmp.eq.s32.totalorder %s20, 0
    %p73 = por %p71, %p72
    %s74 = ssub.s32 %s14, %s21
    %p75 = scmp.eq.s32.totalorder %s74, 0
    %s77 = sadd.s32 %s76, 1
    %s78 = scalar_select %p75, %s76, %s77
    %p81 = pneg %p75
    %p82 = scmp.eq.s32.totalorder %s14, 1
    %p83 = por %p81, %p82
    %p84 = scmp.ne.s32.totalorder %s76, %s79
    %p85 = scmp.eq.s32.totalorder %s14, 0
    %p86 = por %p84, %p85
    %p87 = scmp.ne.s32.totalorder %s76, %s79
    %p88 = scmp.eq.s32.totalorder %s19, 1
    %p89 = por %p87, %p88
    %p90 = scmp.ne.s32.totalorder %s79, %s80
    %p91 = scmp.eq.s32.totalorder %s19, 0
    %p92 = por %p90, %p91
    %p93 = scmp.ne.s32.totalorder %s79, %s80
    %p94 = scmp.eq.s32.totalorder %s20, 1
    %p95 = por %p93, %p94
    %p97 = scmp.ne.s32.totalorder %s80, %s96
    %p98 = scmp.eq.s32.totalorder %s20, 0
    %p99 = por %p97, %p98
    %s100 = ssub.s32 %s14, %s21
    %p101 = scmp.eq.s32.totalorder %s100, 0
    %s103 = sadd.s32 %s102, 1
    %s104 = scalar_select %p101, %s102, %s103
    %p107 = pneg %p101
    %p108 = scmp.eq.s32.totalorder %s14, 1
    %p109 = por %p107, %p108
    %p110 = scmp.ne.s32.totalorder %s102, %s105
    %p111 = scmp.eq.s32.totalorder %s14, 0
    %p112 = por %p110, %p111
    %p113 = scmp.ne.s32.totalorder %s102, %s105
    %p114 = scmp.eq.s32.totalorder %s19, 1
    %p115 = por %p113, %p114
    %p116 = scmp.ne.s32.totalorder %s105, %s106
    %p117 = scmp.eq.s32.totalorder %s19, 0
    %p118 = por %p116, %p117
    %p119 = scmp.ne.s32.totalorder %s105, %s106
    %p120 = scmp.eq.s32.totalorder %s20, 1
    %p121 = por %p119, %p120
    %p123 = scmp.ne.s32.totalorder %s106, %s122
    %p124 = scmp.eq.s32.totalorder %s20, 0
    %p125 = por %p123, %p124
    %s127 = sadd.s32 %s126, 1
    %p130 = scmp.eq.s32.totalorder %s14, 1
    %p131 = scmp.ne.s32.totalorder %s126, %s128
    %p132 = scmp.eq.s32.totalorder %s14, 0
    %p133 = por %p131, %p132
    %p134 = scmp.ne.s32.totalorder %s126, %s128
    %p135 = scmp.eq.s32.totalorder %s19, 1
    %p136 = por %p134, %p135
    %p137 = scmp.ne.s32.totalorder %s128, %s129
    %p138 = scmp.eq.s32.totalorder %s19, 0
    %p139 = por %p137, %p138
    %p140 = scmp.ne.s32.totalorder %s128, %s129
    %p141 = scmp.eq.s32.totalorder %s20, 1
    %p142 = por %p140, %p141
    %p144 = scmp.ne.s32.totalorder %s129, %s143
    %p145 = scmp.eq.s32.totalorder %s20, 0
    %p146 = por %p144, %p145
    %s148 = sadd.s32 %s147, 1
    %p151 = scmp.eq.s32.totalorder %s14, 1
    %p152 = scmp.ne.s32.totalorder %s147, %s149
    %p153 = scmp.eq.s32.totalorder %s14, 0
    %p154 = por %p152, %p153
    %p155 = scmp.ne.s32.totalorder %s147, %s149
    %p156 = scmp.eq.s32.totalorder %s19, 1
    %p157 = por %p155, %p156
    %p158 = scmp.ne.s32.totalorder %s149, %s150
    %p159 = scmp.eq.s32.totalorder %s19, 0
    %p160 = por %p158, %p159
    %p161 = scmp.ne.s32.totalorder %s149, %s150
    %p162 = scmp.eq.s32.totalorder %s20, 1
    %p163 = por %p161, %p162
    %p165 = scmp.ne.s32.totalorder %s150, %s164
    %p166 = scmp.eq.s32.totalorder %s20, 0
    %p167 = por %p165, %p166
    %s168 = ssub.s32 %s14, %s21
    %p169 = scmp.eq.s32.totalorder %s168, 0
    %s171 = sadd.s32 %s170, 1
    %s172 = scalar_select %p169, %s170, %s171
    %p175 = pneg %p169
    %p176 = scmp.eq.s32.totalorder %s14, 1
    %p177 = por %p175, %p176
    %p178 = scmp.ne.s32.totalorder %s170, %s173
    %p179 = scmp.eq.s32.totalorder %s14, 0
    %p180 = por %p178, %p179
    %p181 = scmp.ne.s32.totalorder %s170, %s173
    %p182 = scmp.eq.s32.totalorder %s19, 1
    %p183 = por %p181, %p182
    %p184 = scmp.ne.s32.totalorder %s173, %s174
    %p185 = scmp.eq.s32.totalorder %s19, 0
    %p186 = por %p184, %p185
    %p187 = scmp.ne.s32.totalorder %s173, %s174
    %p188 = scmp.eq.s32.totalorder %s20, 1
    %p189 = por %p187, %p188
    %p191 = scmp.ne.s32.totalorder %s174, %s190
    %p192 = scmp.eq.s32.totalorder %s20, 0
    %p193 = por %p191, %p192
    %p194 = scmp.le.s32.totalorder 1, %s14
    %p195 = scmp.lt.s32.totalorder %s14, 3
    %p196 = pnand %p194, %p195
    %p197 = pneg %p196
    // Predicated region
    $region9: #{forward.60} parent=5 // pred_check
      _
    $region10: #{forward.60} parent=5 // pred_check_branch
      %199 = sbr.rel (%p196) target = $region12
    $region11: #{forward.60} parent=5 // pred_region
      %s200 = ssub.s32 %s14, 1
      // Predicated region
      $region13: #{forward.60} parent=11 // pred_check
        %p201 = pneg %p139
      $region14: #{forward.60} parent=11 // pred_check_branch
        %203 = sbr.rel (%p201) target = $region16
      $region15: #{forward.60} parent=11 // pred_region
        _
      $region16: #{forward.60} parent=11 // pred_fallthru
        _
      // Predicated region
      $region17: #{forward.60} parent=11 // pred_check
        %p204 = pneg %p160
      $region18: #{forward.60} parent=11 // pred_check_branch
        %206 = sbr.rel (%p204) target = $region20
      $region19: #{forward.60} parent=11 // pred_region
        _
      $region20: #{forward.60} parent=11 // pred_fallthru
        _
    $region12: #{forward.60} parent=5 // pred_fallthru
      _
    %p207 = scmp.lt.s32.totalorder %s14, 2
    // Predicated region
    $region21: #{forward.60} parent=5 // pred_check
      %p208 = pneg %p207
    $region22: #{forward.60} parent=5 // pred_check_branch
      %210 = sbr.rel (%p208) target = $region24
    $region23: #{forward.60} parent=5 // pred_region
      // Predicated region
      $region25: #{forward.60} parent=23 // pred_check
        %p211 = pneg %p34
      $region26: #{forward.60} parent=23 // pred_check_branch
        %213 = sbr.rel (%p211) target = $region28
      $region27: #{forward.60} parent=23 // pred_region
        %p214 = scmp.lt.s32.totalorder %s14, 1
        %s215 = scalar_select %p214, %s14, 1
        %s216 = smul.addr %s215, 8
        %s217 = scalar_lea.vmem %s0, %s216
      $region28: #{forward.60} parent=23 // pred_fallthru
        _
      // Predicated region
      $region29: #{forward.60} parent=23 // pred_check
        %p218 = pneg %p60
      $region30: #{forward.60} parent=23 // pred_check_branch
        %220 = sbr.rel (%p218) target = $region32
      $region31: #{forward.60} parent=23 // pred_region
        %p221 = scmp.lt.s32.totalorder %s14, 1
        %s222 = scalar_select %p221, %s14, 1
        %s223 = smul.addr %s222, 8
        %s224 = scalar_lea.vmem %s1, %s223
      $region32: #{forward.60} parent=23 // pred_fallthru
        _
      // Predicated region
      $region33: #{forward.60} parent=23 // pred_check
        %p225 = pneg %p86
      $region34: #{forward.60} parent=23 // pred_check_branch
        %227 = sbr.rel (%p225) target = $region36
      $region35: #{forward.60} parent=23 // pred_region
        %p228 = scmp.lt.s32.totalorder %s14, 1
        %s229 = scalar_select %p228, %s14, 1
        %s230 = smul.addr %s229, 8
        %s231 = scalar_lea.vmem %s2, %s230
      $region36: #{forward.60} parent=23 // pred_fallthru
        _
      // Predicated region
      $region37: #{forward.60} parent=23 // pred_check
        %p232 = pneg %p112
      $region38: #{forward.60} parent=23 // pred_check_branch
        %234 = sbr.rel (%p232) target = $region40
      $region39: #{forward.60} parent=23 // pred_region
        %p235 = scmp.lt.s32.totalorder %s14, 1
        %s236 = scalar_select %p235, %s14, 1
        %s237 = smul.addr %s236, 8
        %s238 = scalar_lea.vmem %s3, %s237
      $region40: #{forward.60} parent=23 // pred_fallthru
        _
    $region24: #{forward.60} parent=5 // pred_fallthru
      _
    %p239 = scmp.le.s32.totalorder 1, %s14
    %p240 = scmp.lt.s32.totalorder %s14, 3
    %p241 = pnand %p239, %p240
    %p242 = pneg %p241
    // Predicated region
    $region41: #{forward.60} parent=5 // pred_check
      _
    $region42: #{forward.60} parent=5 // pred_check_branch
      %244 = sbr.rel (%p241) target = $region44
    $region43: #{forward.60} parent=5 // pred_region
      %s245 = ssub.s32 %s14, 1
      %p246 = scmp.lt.s32.totalorder %s19, 1
      %s247 = scalar_select %p246, %s19, 1
      %s248 = smul.addr %s247, 8
      %s249 = scalar_lea.vmem %s0, %s248
      %p250 = pneg %p40
      %p251 = pneg %p37
      %p252 = scmp.lt.s32.totalorder %s19, 1
      %s253 = scalar_select %p252, %s19, 1
      %s254 = smul.addr %s253, 8
      %s255 = scalar_lea.vmem %s1, %s254
      %p256 = pneg %p66
      %p257 = pneg %p63
      %p258 = scmp.lt.s32.totalorder %s19, 1
      %s259 = scalar_select %p258, %s19, 1
      %s260 = smul.addr %s259, 8
      %s261 = scalar_lea.vmem %s2, %s260
      %p262 = pneg %p92
      %p263 = pneg %p89
      %p264 = scmp.lt.s32.totalorder %s19, 1
      %s265 = scalar_select %p264, %s19, 1
      %s266 = smul.addr %s265, 8
      %s267 = scalar_lea.vmem %s3, %s266
      %p268 = pneg %p118
      %p269 = pneg %p115
      %p270 = pneg %p139
      %p271 = pneg %p136
      %p272 = pneg %p160
      %p273 = pneg %p157
      %p274 = pneg %p186
      %p275 = pneg %p183
      %p276 = scmp.lt.s32.totalorder %s19, 1
      %s277 = scalar_select %p276, %s19, 1
      %s278 = smul.addr %s277, 8
      %s279 = scalar_lea.vmem %s6, %s278
      %p280 = scmp.lt.s32.totalorder %s19, 1
      %s281 = scalar_select %p280, %s19, 1
      %s282 = smul.addr %s281, 8
      %s283 = scalar_lea.vmem %s0, %s282
      %p284 = scmp.lt.s32.totalorder %s19, 1
      %s285 = scalar_select %p284, %s19, 1
      %s286 = smul.addr %s285, 8
      %s287 = scalar_lea.vmem %s1, %s286
      %p288 = scmp.lt.s32.totalorder %s19, 1
      %s289 = scalar_select %p288, %s19, 1
      %s290 = smul.addr %s289, 8
      %s291 = scalar_lea.vmem %s2, %s290
      %p292 = scmp.lt.s32.totalorder %s19, 1
      %s293 = scalar_select %p292, %s19, 1
      %s294 = smul.addr %s293, 8
      %s295 = scalar_lea.vmem %s3, %s294
      %p296 = scmp.lt.s32.totalorder %s19, 1
      %s297 = scalar_select %p296, %s19, 1
      %s298 = smul.addr %s297, 8
      %s299 = scalar_lea.vmem %s6, %s298
      %v300 = vld [vmem:[%s283] sm:$0x3f]
      %v301 = vld [vmem:[%s287] sm:$0xff]
      %vm302 = vcmask 64512
      %v304 = vsel %vm302, %v300, 0
      %306 = vmatpush.msra.mxu0 0.0
      %307 = vmatpush.msra.mxu0 0.0
      %308 = vmatpush.msra.mxu0 0.0
      %309 = vmatpush.msra.mxu0 0.0
      %310 = vmatpush.msra.mxu0 0.0
      %311 = vmatpush.msra.mxu0 0.0
      %312 = vmatpush.msra.mxu0 0.0
      %313 = vmatpush.msra.mxu0 0.0
      %314 = vmatpush.msra.mxu0 0.0
      %315 = vmatpush.msra.mxu0 0.0
      %316 = vmatpush.msra.mxu0 0.0
      %317 = vmatpush.msra.mxu0 0.0
      %318 = vmatpush.msra.mxu0 0.0
      %319 = vmatpush.msra.mxu0 0.0
      %320 = vmatpush.msra.mxu0 0.0
      %321 = vmatpush.msra.mxu0 %v301
      %322 = vmatmul.f32.gmra.mxu0 %v304
      %v323 = vpop.f32.mrf.mxu0
      %v324 = vadd.f32 0.0, %v323
      %325 = vdwg.mxu0
      %v326 = vld [vmem:[%s4] sm:$0xff]
      %v327 = vld [vmem:[%s4 + $0x8] sm:$0xff]
      %v328 = vld [vmem:[%s4 + $0x10] sm:$0xff]
      %v329 = vld [vmem:[%s4 + $0x18] sm:$0xff]
      %v330 = vld [vmem:[%s4 + $0x20] sm:$0xff]
      %v331 = vld [vmem:[%s4 + $0x28] sm:$0xff]
      %v332 = vld [vmem:[%s4 + $0x30] sm:$0xff]
      %v333 = vld [vmem:[%s4 + $0x38] sm:$0xff]
      %v334 = vld [vmem:[%s4 + $0x40] sm:$0xff]
      %v335 = vld [vmem:[%s4 + $0x48] sm:$0xff]
      %v336 = vld [vmem:[%s4 + $0x50] sm:$0xff]
      %v337 = vld [vmem:[%s4 + $0x58] sm:$0xff]
      %v338 = vld [vmem:[%s291] sm:$0x3f]
      %vm339 = vcmask 261120
      %v341 = vsel %vm339, %v324, 0
      %343 = vmatpush.msra.mxu0 0.0
      %344 = vmatpush.msra.mxu0 0.0
      %345 = vmatpush.msra.mxu0 0.0
      %346 = vmatpush.msra.mxu0 0.0
      %347 = vmatpush.msra.mxu0 0.0
      %348 = vmatpush.msra.mxu0 0.0
      %349 = vmatpush.msra.mxu0 0.0
      %350 = vmatpush.msra.mxu0 0.0
      %351 = vmatpush.msra.mxu0 0.0
      %352 = vmatpush.msra.mxu0 0.0
      %353 = vmatpush.msra.mxu0 0.0
      %354 = vmatpush.msra.mxu0 0.0
      %355 = vmatpush.msra.mxu0 %v333
      %356 = vmatpush.msra.mxu0 %v332
      %357 = vmatpush.msra.mxu0 %v331
      %358 = vmatpush.msra.mxu0 %v330
      %359 = vmatmul.f32.gmra.mxu0 %v341
      %v360 = vpop.f32.mrf.mxu0
      %v361 = vadd.f32 0.0, %v360
      %362 = vdwg.mxu0
      %v364 = vsel %vm339, %v338, 0
      %366 = vmatpush.msra.mxu0 0.0
      %367 = vmatpush.msra.mxu0 0.0
      %368 = vmatpush.msra.mxu0 0.0
      %369 = vmatpush.msra.mxu0 0.0
      %370 = vmatpush.msra.mxu0 0.0
      %371 = vmatpush.msra.mxu0 0.0
      %372 = vmatpush.msra.mxu0 0.0
      %373 = vmatpush.msra.mxu0 0.0
      %374 = vmatpush.msra.mxu0 0.0
      %375 = vmatpush.msra.mxu0 0.0
      %376 = vmatpush.msra.mxu0 0.0
      %377 = vmatpush.msra.mxu0 0.0
      %378 = vmatpush.msra.mxu0 %v329
      %379 = vmatpush.msra.mxu0 %v328
      %380 = vmatpush.msra.mxu0 %v327
      %381 = vmatpush.msra.mxu0 %v326
      %382 = vmatmul.f32.gmra.mxu0 %v364
      %v383 = vpop.f32.mrf.mxu0
      %v384 = vadd.f32 %v361, %v383
      %385 = vdwg.mxu0
      %v386 = vld [vmem:[%s295] sm:$0x3f]
      %v388 = vsel %vm339, %v386, 0
      %390 = vmatpush.msra.mxu0 0.0
      %391 = vmatpush.msra.mxu0 0.0
      %392 = vmatpush.msra.mxu0 0.0
      %393 = vmatpush.msra.mxu0 0.0
      %394 = vmatpush.msra.mxu0 0.0
      %395 = vmatpush.msra.mxu0 0.0
      %396 = vmatpush.msra.mxu0 0.0
      %397 = vmatpush.msra.mxu0 0.0
      %398 = vmatpush.msra.mxu0 0.0
      %399 = vmatpush.msra.mxu0 0.0
      %400 = vmatpush.msra.mxu0 0.0
      %401 = vmatpush.msra.mxu0 0.0
      %402 = vmatpush.msra.mxu0 %v337
      %403 = vmatpush.msra.mxu0 %v336
      %404 = vmatpush.msra.mxu0 %v335
      %405 = vmatpush.msra.mxu0 %v334
      %406 = vmatmul.f32.gmra.mxu0 %v388
      %v407 = vpop.f32.mrf.mxu0
      %v408 = vadd.f32 0.0, %v407
      %409 = vdwg.mxu0
      %v410 = vadd.f32 %v384, %v408
      %v411 = vld [vmem:[#allocation2] sm:$0x1]
      %v413 = vperm.slane %v411, 0
      %v415 = vadd.f32 %v410, %v413
      %v416 = vsub.f32 0.0, %v415
      %v417 = vmul.f32 %v416, 1.442695
      %v418 = vpow.pop %v417
      %v419 = vadd.f32 %v418, 1.0
      %v420 = vrcp.pop %v419
      %v421 = vmul.f32 %v419, %v420
      %v422 = vsub.f32 1.0, %v421
      %v423 = vmul.f32 %v420, %v422
      %v424 = vadd.f32 %v420, %v423
      %vm425 = vweird.f32 %v419
      %vm426 = vweird.f32 %v420
      %vm427 = vmor %vm425, %vm426
      %v428 = vsel %vm427, %v420, %v424
      %v429 = vand.u32 2147483647, %v419
      %vm430 = vcmp.eq.f32.partialorder %v429, 8.507059e+37
      %v431 = vand.u32 %v419, 2147483648
      %v432 = vor.u32 1.1754944e-38, %v431
      %v433 = vsel %vm430, %v432, %v428
      %v434 = vmul.f32 1.0, %v433
      %vm435 = vcmask 5120
      %436 = vst.msk [vmem:[%s299] sm:$0x3f] %vm435, %v434
      %p437 = scmp.lt.s32.totalorder %s19, 1
      %s438 = scalar_select %p437, %s19, 1
      %s439 = smul.addr %s438, 8
      %s440 = scalar_lea.vmem %s6, %s439
      // Predicated region
      $region45: #{forward.60} parent=43 // pred_check
        %p441 = pneg %p183
      $region46: #{forward.60} parent=43 // pred_check_branch
        %443 = sbr.rel (%p441) target = $region48
      $region47: #{forward.60} parent=43 // pred_region
        _
      $region48: #{forward.60} parent=43 // pred_fallthru
        _
    $region44: #{forward.60} parent=5 // pred_fallthru
      _
    %p444 = scmp.le.s32.totalorder 2, %s14
    // Predicated region
    $region49: #{forward.60} parent=5 // pred_check
      %p445 = pneg %p444
    $region50: #{forward.60} parent=5 // pred_check_branch
      %447 = sbr.rel (%p445) target = $region52
    $region51: #{forward.60} parent=5 // pred_region
      %s448 = ssub.s32 %s14, 2
      // Predicated region
      $region53: #{forward.60} parent=51 // pred_check
        %p449 = pneg %p189
      $region54: #{forward.60} parent=51 // pred_check_branch
        %451 = sbr.rel (%p449) target = $region56
      $region55: #{forward.60} parent=51 // pred_region
        %p452 = scmp.lt.s32.totalorder %s20, 1
        %s453 = scalar_select %p452, %s20, 1
        %s454 = smul.addr %s453, 8
        %s455 = scalar_lea.vmem %s6, %s454
      $region56: #{forward.60} parent=51 // pred_fallthru
        _
    $region52: #{forward.60} parent=5 // pred_fallthru
      _
  $region6: #{forward.60} parent=0 // loop_footer
    %s18 = sadd.s32 1, %s14
  $region7: #{forward.60} parent=0 // loop_footer_branch
    %13 = sbr.rel target = $region3
  $region8: #{forward.60} parent=0 // loop_exit
    _

// kernel: forward.61
$region0: #{forward.61}
  #allocation0 [shape = 'u32[]', space=smem, size = 0x4, offset = 0x4, fixed_abs, tag = 'smem constant byte address 0x4 - core index']
  #allocation1 [shape = 'u32[72,128]{1,0:T(1,128)}', space=vmem, size = 0x9000, scoped, tag = 'internal scratch']
  %s0 = inlined_call_operand.vmem [shape: f32[2,6,128], index: 0, kind: input, shape index: {}]
  %s1 = inlined_call_operand.vmem [shape: f32[2,6,1], index: 1, kind: input, shape index: {}]
  %s2 = inlined_call_operand.vmem [shape: f32[2,6,1], index: 2, kind: input, shape index: {}]
  %s3 = inlined_call_operand.vmem [shape: f32[2,6,8], index: 3, kind: input, shape index: {}]
  %s4 = inlined_call_operand.vmem [shape: s32[2,8,1], index: 4, kind: input, shape index: {}]
  %s5 = inlined_call_operand.vmem [shape: f32[2,6,128], index: 5, kind: output, shape index: {}]
  %s6 = sld [smem:[#allocation0]]
  $region53: #{forward.61} parent=0
    _
  %s8 = ssub.s32 1, %s6
  %s9 = scalar_select 0, %s8, %s6
  loop: start=0, step=1, limit=4
  $region2: #{forward.61} parent=0 // loop_pre_header
    _
  $region3: #{forward.61} parent=0 // loop_header
    %s11 = sphi 0, %s15
    %p12 = scmp.ge.s32.totalorder %s11, 4
    %s18 = sphi 0, %s30
    %s19 = sphi 0, %s26
    %s20 = sphi 0, %s18
    %s21 = sphi 0, %s19
    %s22 = sphi 0, %s20
    %s23 = sphi 0, %s21
    %s35 = sphi 0, %s37
    %s38 = sphi 0, %s35
    %s39 = sphi 0, %s38
    %s55 = sphi 0, %s39
    %s61 = sphi 0, %s63
    %s64 = sphi 0, %s61
    %s65 = sphi 0, %s64
    %s81 = sphi 0, %s65
    %s87 = sphi 0, %s89
    %s90 = sphi 0, %s87
    %s91 = sphi 0, %s90
    %s107 = sphi 0, %s91
    %s113 = sphi 0, %s115
    %s116 = sphi 0, %s113
    %s117 = sphi 0, %s116
    %s133 = sphi 0, %s117
    %s139 = sphi 0, %s141
    %s142 = sphi 0, %s139
    %s143 = sphi 0, %s142
    %s159 = sphi 0, %s143
    %s167 = sphi 0, %s169
    %s170 = sphi 0, %s167
    %s171 = sphi 0, %s170
    %s187 = sphi 0, %s171
  $region4: #{forward.61} parent=0 // loop_header_branch
    %14 = sbr.rel (%p12) target = $region8
  $region5: #{forward.61} parent=0 // loop_body
    %s16 = ssub.s32 %s11, 1
    %s17 = ssub.s32 %s11, 2
    %s24 = sadd.s32 1, %s19
    %p25 = scmp.ge.s32.totalorder %s24, 1
    %s26 = scalar_select %p25, 0, %s24
    %s27 = sadd.s32 1, %s18
    %s28 = scalar_select %p25, %s27, %s18
    %p29 = scmp.ge.s32.totalorder %s28, 2
    %s30 = scalar_select %p29, 0, %s28
    %s31 = ssub.s32 %s18, %s30
    %s32 = ssub.s32 %s19, %s26
    %s33 = sor.u32 %s31, %s32
    %p34 = scmp.eq.s32.totalorder %s33, 0
    %s36 = sadd.s32 %s35, 1
    %s37 = scalar_select %p34, %s35, %s36
    %p40 = pneg %p34
    %p41 = scmp.eq.s32.totalorder %s11, 1
    %p42 = por %p40, %p41
    %p43 = scmp.ne.s32.totalorder %s35, %s38
    %p44 = scmp.eq.s32.totalorder %s11, 0
    %p45 = por %p43, %p44
    %p46 = scmp.ne.s32.totalorder %s35, %s38
    %p47 = scmp.eq.s32.totalorder %s16, 1
    %p48 = por %p46, %p47
    %p49 = scmp.ne.s32.totalorder %s38, %s39
    %p50 = scmp.eq.s32.totalorder %s16, 0
    %p51 = por %p49, %p50
    %p52 = scmp.ne.s32.totalorder %s38, %s39
    %p53 = scmp.eq.s32.totalorder %s17, 1
    %p54 = por %p52, %p53
    %p56 = scmp.ne.s32.totalorder %s39, %s55
    %p57 = scmp.eq.s32.totalorder %s17, 0
    %p58 = por %p56, %p57
    %s59 = ssub.s32 %s18, %s30
    %p60 = scmp.eq.s32.totalorder %s59, 0
    %s62 = sadd.s32 %s61, 1
    %s63 = scalar_select %p60, %s61, %s62
    %p66 = pneg %p60
    %p67 = scmp.eq.s32.totalorder %s11, 1
    %p68 = por %p66, %p67
    %p69 = scmp.ne.s32.totalorder %s61, %s64
    %p70 = scmp.eq.s32.totalorder %s11, 0
    %p71 = por %p69, %p70
    %p72 = scmp.ne.s32.totalorder %s61, %s64
    %p73 = scmp.eq.s32.totalorder %s16, 1
    %p74 = por %p72, %p73
    %p75 = scmp.ne.s32.totalorder %s64, %s65
    %p76 = scmp.eq.s32.totalorder %s16, 0
    %p77 = por %p75, %p76
    %p78 = scmp.ne.s32.totalorder %s64, %s65
    %p79 = scmp.eq.s32.totalorder %s17, 1
    %p80 = por %p78, %p79
    %p82 = scmp.ne.s32.totalorder %s65, %s81
    %p83 = scmp.eq.s32.totalorder %s17, 0
    %p84 = por %p82, %p83
    %s85 = ssub.s32 %s18, %s30
    %p86 = scmp.eq.s32.totalorder %s85, 0
    %s88 = sadd.s32 %s87, 1
    %s89 = scalar_select %p86, %s87, %s88
    %p92 = pneg %p86
    %p93 = scmp.eq.s32.totalorder %s11, 1
    %p94 = por %p92, %p93
    %p95 = scmp.ne.s32.totalorder %s87, %s90
    %p96 = scmp.eq.s32.totalorder %s11, 0
    %p97 = por %p95, %p96
    %p98 = scmp.ne.s32.totalorder %s87, %s90
    %p99 = scmp.eq.s32.totalorder %s16, 1
    %p100 = por %p98, %p99
    %p101 = scmp.ne.s32.totalorder %s90, %s91
    %p102 = scmp.eq.s32.totalorder %s16, 0
    %p103 = por %p101, %p102
    %p104 = scmp.ne.s32.totalorder %s90, %s91
    %p105 = scmp.eq.s32.totalorder %s17, 1
    %p106 = por %p104, %p105
    %p108 = scmp.ne.s32.totalorder %s91, %s107
    %p109 = scmp.eq.s32.totalorder %s17, 0
    %p110 = por %p108, %p109
    %s111 = ssub.s32 %s18, %s30
    %p112 = scmp.eq.s32.totalorder %s111, 0
    %s114 = sadd.s32 %s113, 1
    %s115 = scalar_select %p112, %s113, %s114
    %p118 = pneg %p112
    %p119 = scmp.eq.s32.totalorder %s11, 1
    %p120 = por %p118, %p119
    %p121 = scmp.ne.s32.totalorder %s113, %s116
    %p122 = scmp.eq.s32.totalorder %s11, 0
    %p123 = por %p121, %p122
    %p124 = scmp.ne.s32.totalorder %s113, %s116
    %p125 = scmp.eq.s32.totalorder %s16, 1
    %p126 = por %p124, %p125
    %p127 = scmp.ne.s32.totalorder %s116, %s117
    %p128 = scmp.eq.s32.totalorder %s16, 0
    %p129 = por %p127, %p128
    %p130 = scmp.ne.s32.totalorder %s116, %s117
    %p131 = scmp.eq.s32.totalorder %s17, 1
    %p132 = por %p130, %p131
    %p134 = scmp.ne.s32.totalorder %s117, %s133
    %p135 = scmp.eq.s32.totalorder %s17, 0
    %p136 = por %p134, %p135
    %s137 = ssub.s32 %s18, %s30
    %p138 = scmp.eq.s32.totalorder %s137, 0
    %s140 = sadd.s32 %s139, 1
    %s141 = scalar_select %p138, %s139, %s140
    %p144 = pneg %p138
    %p145 = scmp.eq.s32.totalorder %s11, 1
    %p146 = por %p144, %p145
    %p147 = scmp.ne.s32.totalorder %s139, %s142
    %p148 = scmp.eq.s32.totalorder %s11, 0
    %p149 = por %p147, %p148
    %p150 = scmp.ne.s32.totalorder %s139, %s142
    %p151 = scmp.eq.s32.totalorder %s16, 1
    %p152 = por %p150, %p151
    %p153 = scmp.ne.s32.totalorder %s142, %s143
    %p154 = scmp.eq.s32.totalorder %s16, 0
    %p155 = por %p153, %p154
    %p156 = scmp.ne.s32.totalorder %s142, %s143
    %p157 = scmp.eq.s32.totalorder %s17, 1
    %p158 = por %p156, %p157
    %p160 = scmp.ne.s32.totalorder %s143, %s159
    %p161 = scmp.eq.s32.totalorder %s17, 0
    %p162 = por %p160, %p161
    %s163 = ssub.s32 %s18, %s30
    %s164 = ssub.s32 %s19, %s26
    %s165 = sor.u32 %s163, %s164
    %p166 = scmp.eq.s32.totalorder %s165, 0
    %s168 = sadd.s32 %s167, 1
    %s169 = scalar_select %p166, %s167, %s168
    %p172 = pneg %p166
    %p173 = scmp.eq.s32.totalorder %s11, 1
    %p174 = por %p172, %p173
    %p175 = scmp.ne.s32.totalorder %s167, %s170
    %p176 = scmp.eq.s32.totalorder %s11, 0
    %p177 = por %p175, %p176
    %p178 = scmp.ne.s32.totalorder %s167, %s170
    %p179 = scmp.eq.s32.totalorder %s16, 1
    %p180 = por %p178, %p179
    %p181 = scmp.ne.s32.totalorder %s170, %s171
    %p182 = scmp.eq.s32.totalorder %s16, 0
    %p183 = por %p181, %p182
    %p184 = scmp.ne.s32.totalorder %s170, %s171
    %p185 = scmp.eq.s32.totalorder %s17, 1
    %p186 = por %p184, %p185
    %p188 = scmp.ne.s32.totalorder %s171, %s187
    %p189 = scmp.eq.s32.totalorder %s17, 0
    %p190 = por %p188, %p189
    %p191 = scmp.le.s32.totalorder 1, %s11
    %p192 = scmp.lt.s32.totalorder %s11, 3
    %p193 = pnand %p191, %p192
    %p194 = pneg %p193
    // Predicated region
    $region9: #{forward.61} parent=5 // pred_check
      _
    $region10: #{forward.61} parent=5 // pred_check_branch
      %196 = sbr.rel (%p193) target = $region12
    $region11: #{forward.61} parent=5 // pred_region
      %s197 = ssub.s32 %s11, 1
    $region12: #{forward.61} parent=5 // pred_fallthru
      _
    %p198 = scmp.lt.s32.totalorder %s11, 2
    // Predicated region
    $region13: #{forward.61} parent=5 // pred_check
      %p199 = pneg %p198
    $region14: #{forward.61} parent=5 // pred_check_branch
      %201 = sbr.rel (%p199) target = $region16
    $region15: #{forward.61} parent=5 // pred_region
      // Predicated region
      $region17: #{forward.61} parent=15 // pred_check
        %p202 = pneg %p45
      $region18: #{forward.61} parent=15 // pred_check_branch
        %204 = sbr.rel (%p202) target = $region20
      $region19: #{forward.61} parent=15 // pred_region
        %p205 = scmp.lt.s32.totalorder %s18, 1
        %s206 = scalar_select %p205, %s18, 1
        %p207 = scmp.lt.s32.totalorder %s19, 0
        %s208 = scalar_select %p207, %s19, 0
        %s209 = sadd.s32 %s208, %s206
        %s210 = smul.addr %s209, 8
        %s211 = scalar_lea.vmem %s0, %s210
      $region20: #{forward.61} parent=15 // pred_fallthru
        _
      // Predicated region
      $region21: #{forward.61} parent=15 // pred_check
        %p212 = pneg %p71
      $region22: #{forward.61} parent=15 // pred_check_branch
        %214 = sbr.rel (%p212) target = $region24
      $region23: #{forward.61} parent=15 // pred_region
        %p215 = scmp.lt.s32.totalorder %s18, 1
        %s216 = scalar_select %p215, %s18, 1
        %s217 = smul.addr %s216, 8
        %s218 = scalar_lea.vmem %s1, %s217
      $region24: #{forward.61} parent=15 // pred_fallthru
        _
      // Predicated region
      $region25: #{forward.61} parent=15 // pred_check
        %p219 = pneg %p97
      $region26: #{forward.61} parent=15 // pred_check_branch
        %221 = sbr.rel (%p219) target = $region28
      $region27: #{forward.61} parent=15 // pred_region
        %p222 = scmp.lt.s32.totalorder %s18, 1
        %s223 = scalar_select %p222, %s18, 1
        %s224 = smul.addr %s223, 8
        %s225 = scalar_lea.vmem %s2, %s224
      $region28: #{forward.61} parent=15 // pred_fallthru
        _
      // Predicated region
      $region29: #{forward.61} parent=15 // pred_check
        %p226 = pneg %p123
      $region30: #{forward.61} parent=15 // pred_check_branch
        %228 = sbr.rel (%p226) target = $region32
      $region31: #{forward.61} parent=15 // pred_region
        %p229 = scmp.lt.s32.totalorder %s18, 1
        %s230 = scalar_select %p229, %s18, 1
        %s231 = smul.addr %s230, 8
        %s232 = scalar_lea.vmem %s3, %s231
      $region32: #{forward.61} parent=15 // pred_fallthru
        _
      // Predicated region
      $region33: #{forward.61} parent=15 // pred_check
        %p233 = pneg %p149
      $region34: #{forward.61} parent=15 // pred_check_branch
        %235 = sbr.rel (%p233) target = $region36
      $region35: #{forward.61} parent=15 // pred_region
        %p236 = scmp.lt.s32.totalorder %s18, 1
        %s237 = scalar_select %p236, %s18, 1
        %s238 = smul.addr %s237, 8
        %s239 = scalar_lea.vmem %s4, %s238
      $region36: #{forward.61} parent=15 // pred_fallthru
        _
    $region16: #{forward.61} parent=5 // pred_fallthru
      _
    %p240 = scmp.le.s32.totalorder 1, %s11
    %p241 = scmp.lt.s32.totalorder %s11, 3
    %p242 = pnand %p240, %p241
    %p243 = pneg %p242
    // Predicated region
    $region37: #{forward.61} parent=5 // pred_check
      _
    $region38: #{forward.61} parent=5 // pred_check_branch
      %245 = sbr.rel (%p242) target = $region40
    $region39: #{forward.61} parent=5 // pred_region
      %s246 = ssub.s32 %s11, 1
      %p247 = scmp.lt.s32.totalorder %s20, 1
      %s248 = scalar_select %p247, %s20, 1
      %p249 = scmp.lt.s32.totalorder %s21, 0
      %s250 = scalar_select %p249, %s21, 0
      %s251 = sadd.s32 %s250, %s248
      %s252 = smul.addr %s251, 8
      %s253 = scalar_lea.vmem %s0, %s252
      %p254 = pneg %p51
      %p255 = pneg %p48
      %p256 = scmp.lt.s32.totalorder %s20, 1
      %s257 = scalar_select %p256, %s20, 1
      %s258 = smul.addr %s257, 8
      %s259 = scalar_lea.vmem %s1, %s258
      %p260 = pneg %p77
      %p261 = pneg %p74
      %p262 = scmp.lt.s32.totalorder %s20, 1
      %s263 = scalar_select %p262, %s20, 1
      %s264 = smul.addr %s263, 8
      %s265 = scalar_lea.vmem %s2, %s264
      %p266 = pneg %p103
      %p267 = pneg %p100
      %p268 = scmp.lt.s32.totalorder %s20, 1
      %s269 = scalar_select %p268, %s20, 1
      %s270 = smul.addr %s269, 8
      %s271 = scalar_lea.vmem %s3, %s270
      %p272 = pneg %p129
      %p273 = pneg %p126
      %p274 = scmp.lt.s32.totalorder %s20, 1
      %s275 = scalar_select %p274, %s20, 1
      %s276 = smul.addr %s275, 8
      %s277 = scalar_lea.vmem %s4, %s276
      %p278 = pneg %p155
      %p279 = pneg %p152
      %p280 = pneg %p183
      %p281 = pneg %p180
      %p282 = scmp.lt.s32.totalorder %s20, 1
      %s283 = scalar_select %p282, %s20, 1
      %p284 = scmp.lt.s32.totalorder %s21, 0
      %s285 = scalar_select %p284, %s21, 0
      %s286 = sadd.s32 %s285, %s283
      %s287 = smul.addr %s286, 8
      %s288 = scalar_lea.vmem %s5, %s287
      %p289 = scmp.lt.s32.totalorder %s20, 1
      %s290 = scalar_select %p289, %s20, 1
      %p291 = scmp.lt.s32.totalorder %s21, 0
      %s292 = scalar_select %p291, %s21, 0
      %s293 = sadd.s32 %s292, %s290
      %s294 = smul.addr %s293, 8
      %s295 = scalar_lea.vmem %s0, %s294
      %p296 = scmp.lt.s32.totalorder %s20, 1
      %s297 = scalar_select %p296, %s20, 1
      %s298 = smul.addr %s297, 8
      %s299 = scalar_lea.vmem %s1, %s298
      %p300 = scmp.lt.s32.totalorder %s20, 1
      %s301 = scalar_select %p300, %s20, 1
      %s302 = smul.addr %s301, 8
      %s303 = scalar_lea.vmem %s2, %s302
      %p304 = scmp.lt.s32.totalorder %s20, 1
      %s305 = scalar_select %p304, %s20, 1
      %s306 = smul.addr %s305, 8
      %s307 = scalar_lea.vmem %s3, %s306
      %p308 = scmp.lt.s32.totalorder %s20, 1
      %s309 = scalar_select %p308, %s20, 1
      %s310 = smul.addr %s309, 8
      %s311 = scalar_lea.vmem %s4, %s310
      %p312 = scmp.lt.s32.totalorder %s20, 1
      %s313 = scalar_select %p312, %s20, 1
      %p314 = scmp.lt.s32.totalorder %s21, 0
      %s315 = scalar_select %p314, %s21, 0
      %s316 = sadd.s32 %s315, %s313
      %s317 = smul.addr %s316, 8
      %s318 = scalar_lea.vmem %s5, %s317
      %s319 = smul.u32 %s21, 128
      %v320 = vld [vmem:[%s295] sm:$0x3f]
      %v321 = vld [vmem:[%s303] sm:$0x3f]
      %v322 = vlaneseq
      %v323 = vand.u32 %v322, 127
      %v324 = vstv %s319
      %v325 = vadd.s32 %v323, %v324
      %vm326 = vcmp.lt.s32.totalorder %v325, 50
      %v327 = vld [vmem:[%s299] sm:$0x3f]
      %329 = vset.pattern.permute.xlu0 0
      %330 = vperm.xlu0 %329, %v327
      %v331 = vpop.permute.xlu0 %330
      %v333 = vsub.f32 %v320, %v331
      %v334 = vmul.f32 %v333, 1.442695
      %v335 = vpow.pop %v334
      %337 = vset.pattern.permute.xlu0 0
      %338 = vperm.xlu0 %337, %v321
      %v339 = vpop.permute.xlu0 %338
      %v341 = vmul.f32 %v335, %v339
      %v342 = vsel %vm326, %v341, 0.0
      %v343 = vld [vmem:[%s311] sm:$0xff]
      %344 = vset.pattern.permute.xlu0 0
      %345 = vperm.xlu0 %344, %v343
      %v346 = vpop.permute.xlu0 %345
      %vm347 = vcmp.eq.s32.totalorder %v346, %v325
      %v348 = vsel %vm347, 1, 0
      %v349 = vcvt.s32.f32 %v348
      %v350 = vld [vmem:[%s307] sm:$0x3f]
      %v351 = vsub.f32 1.0, %v321
      %353 = vset.pattern.permute.xlu0 0
      %354 = vperm.xlu0 %353, %v351
      %v355 = vpop.permute.xlu0 %354
      %v357 = vmul.f32 %v350, %v355
      %vm358 = vcmask 64512
      %v360 = vsel %vm358, %v357, 0
      %362 = vmatpush.msra.mxu0 0.0
      %363 = vmatpush.msra.mxu0 0.0
      %364 = vmatpush.msra.mxu0 0.0
      %365 = vmatpush.msra.mxu0 0.0
      %366 = vmatpush.msra.mxu0 0.0
      %367 = vmatpush.msra.mxu0 0.0
      %368 = vmatpush.msra.mxu0 0.0
      %369 = vmatpush.msra.mxu0 0.0
      %370 = vmatpush.msra.mxu0 0.0
      %371 = vmatpush.msra.mxu0 0.0
      %372 = vmatpush.msra.mxu0 0.0
      %373 = vmatpush.msra.mxu0 0.0
      %374 = vmatpush.msra.mxu0 0.0
      %375 = vmatpush.msra.mxu0 0.0
      %376 = vmatpush.msra.mxu0 0.0
      %377 = vmatpush.msra.mxu0 %v349
      %378 = vmatmul.f32.gmra.mxu0 %v360
      %v379 = vpop.f32.mrf.mxu0
      %v380 = vadd.f32 0.0, %v379
      %381 = vdwg.mxu0
      %v382 = vadd.f32 %v342, %v380
      %383 = vst [vmem:[%s318] sm:$0x3f] %v382
      %p384 = scmp.lt.s32.totalorder %s20, 1
      %s385 = scalar_select %p384, %s20, 1
      %p386 = scmp.lt.s32.totalorder %s21, 0
      %s387 = scalar_select %p386, %s21, 0
      %s388 = sadd.s32 %s387, %s385
      %s389 = smul.addr %s388, 8
      %s390 = scalar_lea.vmem %s5, %s389
      // Predicated region
      $region41: #{forward.61} parent=39 // pred_check
        %p391 = pneg %p180
      $region42: #{forward.61} parent=39 // pred_check_branch
        %393 = sbr.rel (%p391) target = $region44
      $region43: #{forward.61} parent=39 // pred_region
        _
      $region44: #{forward.61} parent=39 // pred_fallthru
        _
    $region40: #{forward.61} parent=5 // pred_fallthru
      _
    %p394 = scmp.le.s32.totalorder 2, %s11
    // Predicated region
    $region45: #{forward.61} parent=5 // pred_check
      %p395 = pneg %p394
    $region46: #{forward.61} parent=5 // pred_check_branch
      %397 = sbr.rel (%p395) target = $region48
    $region47: #{forward.61} parent=5 // pred_region
      %s398 = ssub.s32 %s11, 2
      // Predicated region
      $region49: #{forward.61} parent=47 // pred_check
        %p399 = pneg %p186
      $region50: #{forward.61} parent=47 // pred_check_branch
        %401 = sbr.rel (%p399) target = $region52
      $region51: #{forward.61} parent=47 // pred_region
        %p402 = scmp.lt.s32.totalorder %s22, 1
        %s403 = scalar_select %p402, %s22, 1
        %p404 = scmp.lt.s32.totalorder %s23, 0
        %s405 = scalar_select %p404, %s23, 0
        %s406 = sadd.s32 %s405, %s403
        %s407 = smul.addr %s406, 8
        %s408 = scalar_lea.vmem %s5, %s407
      $region52: #{forward.61} parent=47 // pred_fallthru
        _
    $region48: #{forward.61} parent=5 // pred_fallthru
      _
  $region6: #{forward.61} parent=0 // loop_footer
    %s15 = sadd.s32 1, %s11
  $region7: #{forward.61} parent=0 // loop_footer_branch
    %10 = sbr.rel target = $region3
  $region8: #{forward.61} parent=0 // loop_exit
    _

</llo_original>
